<compile_context>
chip_gen: v6e
topology: v6e:2x2x1
jax: 0.10.0
libtpu: 0.0.40
codegen_flags: <defaults>
</compile_context>

<pallas_src>
import functools

import jax
import jax.numpy as jnp
from jax.experimental import pallas as pl
from jax.experimental.pallas import tpu as pltpu

IN_FEATURES = 47236
OUT_FEATURES = 103

LANES = 128
SUBLANES = 8
TK = 8192        # K-reduction tile (rows of the packed (K, N) weight slab)
NUM_SPLITS = 2   # leading "parallel" grid axis; matches v7x's 2 TensorCores


def _round_up(n, m):
    return (n + m - 1) // m * m


# ---------------------------------------------------------------------------
# Kernels
# ---------------------------------------------------------------------------

def _matmul_partial_kernel(x_ref, w_ref, o_ref):
    """Accumulate one K-slice of x @ w into this core's resident partial tile."""
    k = pl.program_id(1)

    # Init the VMEM-resident partial accumulator once per core / K-range.
    @pl.when(k == 0)
    def _():
        o_ref[...] = jnp.zeros_like(o_ref)

    # bf16 x bf16 MXU matmul, f32 accumulation.
    o_ref[...] += jnp.dot(
        x_ref[...], w_ref[...], preferred_element_type=jnp.float32
    )[None, :, :]


def _epilogue_kernel(p_ref, b_ref, o_ref):
    """Combine per-core partial sums, add bias, apply sigmoid (one (8,128) tile)."""
    z = b_ref[...]                       # (1, n_pad) broadcasts over batch
    for c in range(p_ref.shape[0]):      # unrolled at trace time (NUM_SPLITS)
        z = z + p_ref[c]
    o_ref[...] = pl.reciprocal(1.0 + jnp.exp(-z), approx=True)


# ---------------------------------------------------------------------------
# Parameter packing (one-time, hoisted out of the forward path)
# ---------------------------------------------------------------------------

def prepare_params(weight, bias, *, tk=TK, num_splits=NUM_SPLITS):
    """Pack nn.Linear params once:

    weight: (out_features, in_features) -> transposed to (K, N), K zero-padded
            to a multiple of num_splits*tk, N zero-padded to 128 lanes, bf16.
    bias:   (out_features,) -> (1, n_pad) f32.
    Zero padding is exact for the dot product; padded outputs are sliced away.
    """
    n_dim, k_dim = weight.shape
    assert bias.shape == (n_dim,)
    k_pad = _round_up(k_dim, num_splits * tk)
    n_pad = _round_up(n_dim, LANES)

    wp = (jnp.zeros((k_pad, n_pad), jnp.bfloat16)
          .at[:k_dim, :n_dim].set(weight.T.astype(jnp.bfloat16)))
    bp = (jnp.zeros((1, n_pad), jnp.float32)
          .at[0, :n_dim].set(bias.astype(jnp.float32)))
    return wp, bp


# ---------------------------------------------------------------------------
# Forward
# ---------------------------------------------------------------------------

@functools.partial(jax.jit, static_argnames=("out_features", "tk", "num_splits"))
def logistic_regression_forward(x, wp, bp, *, out_features=OUT_FEATURES,
                                tk=TK, num_splits=NUM_SPLITS):
    """sigmoid(x @ W^T + b) using params packed by prepare_params."""
    batch, k_dim = x.shape
    k_pad, n_pad = wp.shape
    assert k_dim <= k_pad and k_pad % (num_splits * tk) == 0

    b_pad = _round_up(max(batch, SUBLANES), SUBLANES)
    k_steps = k_pad // (num_splits * tk)   # K-steps per core

    # Only the (tiny) activation is padded/cast per call.
    xp = (jnp.zeros((b_pad, k_pad), jnp.bfloat16)
          .at[:batch, :k_dim].set(x.astype(jnp.bfloat16)))

    flops = 2 * b_pad * k_pad * n_pad
    bytes_accessed = (b_pad * k_pad * 2          # x (bf16)
                      + k_pad * n_pad * 2        # weights (bf16)
                      + num_splits * b_pad * n_pad * 4)  # partial outputs

    # Stage 1: per-core partial matmul over a split K range.
    partial = pl.pallas_call(
        _matmul_partial_kernel,
        out_shape=jax.ShapeDtypeStruct((num_splits, b_pad, n_pad), jnp.float32),
        grid_spec=pltpu.PrefetchScalarGridSpec(
            num_scalar_prefetch=0,
            grid=(num_splits, k_steps),
            in_specs=[
                pl.BlockSpec((b_pad, tk),
                             lambda c, k: (0, c * k_steps + k)),   # x K-slice
                pl.BlockSpec((tk, n_pad),
                             lambda c, k: (c * k_steps + k, 0)),   # w K-slice
            ],
            out_specs=pl.BlockSpec((1, b_pad, n_pad),
                                   lambda c, k: (c, 0, 0)),        # resident partial
        ),
        compiler_params=pltpu.CompilerParams(
            dimension_semantics=("parallel", "arbitrary"),
        ),
        cost_estimate=pl.CostEstimate(
            flops=flops, transcendentals=0, bytes_accessed=bytes_accessed),
    )(xp, wp)

    # Stage 2: combine partials + bias + sigmoid (single tiny tile).
    out = pl.pallas_call(
        _epilogue_kernel,
        out_shape=jax.ShapeDtypeStruct((b_pad, n_pad), jnp.float32),
        grid_spec=pltpu.PrefetchScalarGridSpec(
            num_scalar_prefetch=0,
            grid=(1,),
            in_specs=[
                pl.BlockSpec((num_splits, b_pad, n_pad), lambda i: (0, 0, 0)),
                pl.BlockSpec((1, n_pad), lambda i: (0, 0)),
            ],
            out_specs=pl.BlockSpec((b_pad, n_pad), lambda i: (0, 0)),
        ),
    )(partial, bp)

    return out[:batch, :out_features]


if __name__ == "__main__":
    key = jax.random.PRNGKey(0)
    kx, kw, kb = jax.random.split(key, 3)

    batch = 2  # small batch; feature dims fixed by the module (47236 -> 103)
    bound = 1.0 / (IN_FEATURES ** 0.5)  # nn.Linear default init range

    x = jax.random.normal(kx, (batch, IN_FEATURES), dtype=jnp.float32)
    # nn.Linear layout: weight (out_features, in_features), bias (out_features,)
    w = jax.random.uniform(kw, (OUT_FEATURES, IN_FEATURES),
                           dtype=jnp.float32, minval=-bound, maxval=bound)
    b = jax.random.uniform(kb, (OUT_FEATURES,),
                           dtype=jnp.float32, minval=-bound, maxval=bound)

    # One-time packing (NOT in the per-call forward path).
    wp, bp = prepare_params(w, b)

    out = logistic_regression_forward(x, wp, bp)
    out = jax.block_until_ready(out)

    # plain-JAX f32 reference (tolerance covers bf16 streaming + MXU bf16 passes)
    ref = 1.0 / (1.0 + jnp.exp(
        -(jnp.dot(x, w.T, preferred_element_type=jnp.float32) + b)))
    assert out.shape == (batch, OUT_FEATURES), out.shape
    max_err = float(jnp.max(jnp.abs(out - ref)))
    assert jnp.allclose(out, ref, rtol=5e-3, atol=5e-3), max_err

    print("KERNEL_OK")
</pallas_src>

<mosaic_0001>
module attributes {stable_mosaic.version = 11 : i64} {
  func.func @_epilogue_kernel(%arg0: i32, %arg1: memref<2x8x128xf32, #tpu.memory_space<vmem>>, %arg2: memref<1x128xf32, #tpu.memory_space<vmem>>, %arg3: memref<8x128xf32, #tpu.memory_space<vmem>>) attributes {dimension_semantics = [#tpu.dimension_semantics<arbitrary>], iteration_bounds = array<i64: 1>, scalar_prefetch = 0 : i64, scratch_operands = 0 : i64, tpu.core_type = #tpu.core_type<tc>, window_params = [{pipeline_mode = #tpu.pipeline_mode<synchronous>, transform_indices = @transform_0, window_bounds = array<i64: 2, 8, 128>}, {pipeline_mode = #tpu.pipeline_mode<synchronous>, transform_indices = @transform_1, window_bounds = array<i64: 1, 128>}, {pipeline_mode = #tpu.pipeline_mode<synchronous>, transform_indices = @transform_2, window_bounds = array<i64: 8, 128>}]} {
    %c0 = arith.constant 0 : index
    %c0_0 = arith.constant 0 : index
    %0 = vector.load %arg2[%c0, %c0_0] : memref<1x128xf32, #tpu.memory_space<vmem>>, vector<1x128xf32>
    %c0_1 = arith.constant 0 : index
    %c0_2 = arith.constant 0 : index
    %c0_3 = arith.constant 0 : index
    %1 = vector.load %arg1[%c0_1, %c0_2, %c0_3] : memref<2x8x128xf32, #tpu.memory_space<vmem>>, vector<1x8x128xf32>
    %2 = vector.shape_cast %1 : vector<1x8x128xf32> to vector<8x128xf32>
    %3 = vector.broadcast %0 : vector<1x128xf32> to vector<8x128xf32>
    %4 = arith.addf %3, %2 : vector<8x128xf32>
    %c1 = arith.constant 1 : index
    %c0_4 = arith.constant 0 : index
    %c0_5 = arith.constant 0 : index
    %5 = vector.load %arg1[%c1, %c0_4, %c0_5] : memref<2x8x128xf32, #tpu.memory_space<vmem>>, vector<1x8x128xf32>
    %6 = vector.shape_cast %5 : vector<1x8x128xf32> to vector<8x128xf32>
    %7 = arith.addf %4, %6 : vector<8x128xf32>
    %cst = arith.constant 0.000000e+00 : f32
    %8 = vector.broadcast %cst : f32 to vector<8x128xf32>
    %9 = arith.subf %8, %7 : vector<8x128xf32>
    %10 = math.exp %9 : vector<8x128xf32>
    %cst_6 = arith.constant 1.000000e+00 : f32
    %11 = vector.broadcast %cst_6 : f32 to vector<8x128xf32>
    %12 = arith.addf %11, %10 : vector<8x128xf32>
    %13 = tpu.reciprocal %12 {approx = true} : vector<8x128xf32> -> vector<8x128xf32>
    %c0_7 = arith.constant 0 : index
    %c0_8 = arith.constant 0 : index
    %14 = vector.load %arg3[%c0_7, %c0_8] : memref<8x128xf32, #tpu.memory_space<vmem>>, vector<8x128xf32>
    tpu.vector_store %arg3[%c0_7, %c0_8], %13 {strides = array<i32>} : memref<8x128xf32, #tpu.memory_space<vmem>>, vector<8x128xf32>,
    return
  }
  func.func @transform_0(%arg0: i32) -> (i32, i32, i32) {
    %c0_i32 = arith.constant 0 : i32
    %c0_i32_0 = arith.constant 0 : i32
    %c0_i32_1 = arith.constant 0 : i32
    %c0_i32_2 = arith.constant 0 : i32
    return %c0_i32, %c0_i32_0, %c0_i32_1 : i32, i32, i32
  }
  func.func @transform_1(%arg0: i32) -> (i32, i32) {
    %c0_i32 = arith.constant 0 : i32
    %c0_i32_0 = arith.constant 0 : i32
    %c0_i32_1 = arith.constant 0 : i32
    return %c0_i32, %c0_i32_0 : i32, i32
  }
  func.func @transform_2(%arg0: i32) -> (i32, i32) {
    %c0_i32 = arith.constant 0 : i32
    %c0_i32_0 = arith.constant 0 : i32
    %c0_i32_1 = arith.constant 0 : i32
    return %c0_i32, %c0_i32_0 : i32, i32
  }
}

module attributes {stable_mosaic.version = 11 : i64} {
  func.func @_matmul_partial_kernel(%arg0: i32, %arg1: i32, %arg2: memref<8x8192xbf16, #tpu.memory_space<vmem>>, %arg3: memref<8192x128xbf16, #tpu.memory_space<vmem>>, %arg4: memref<1x8x128xf32, #tpu.memory_space<vmem>>) attributes {dimension_semantics = [#tpu.dimension_semantics<parallel>, #tpu.dimension_semantics<arbitrary>], iteration_bounds = array<i64: 2, 3>, scalar_prefetch = 0 : i64, scratch_operands = 0 : i64, tpu.core_type = #tpu.core_type<tc>, window_params = [{transform_indices = @transform_0, window_bounds = array<i64: 8, 8192>}, {transform_indices = @transform_1, window_bounds = array<i64: 8192, 128>}, {transform_indices = @transform_2, window_bounds = array<i64: 1, 8, 128>}]} {
    %c0_i32 = arith.constant 0 : i32
    %0 = arith.cmpi eq, %arg1, %c0_i32 : i32
    %1 = arith.extui %0 : i1 to i32
    %c0_i32_0 = arith.constant 0 : i32
    %2 = arith.cmpi ne, %1, %c0_i32_0 : i32
    scf.if %2 {
      %cst_10 = arith.constant 0.000000e+00 : f32
      %10 = vector.broadcast %cst_10 : f32 to vector<1x8x128xf32>
      %c0_11 = arith.constant 0 : index
      %c0_12 = arith.constant 0 : index
      %c0_13 = arith.constant 0 : index
      %11 = vector.load %arg4[%c0_11, %c0_12, %c0_13] : memref<1x8x128xf32, #tpu.memory_space<vmem>>, vector<1x8x128xf32>
      tpu.vector_store %arg4[%c0_11, %c0_12, %c0_13], %10 {strides = array<i32>} : memref<1x8x128xf32, #tpu.memory_space<vmem>>, vector<1x8x128xf32>,
    } else {
    }
    %c0 = arith.constant 0 : index
    %c0_1 = arith.constant 0 : index
    %c0_2 = arith.constant 0 : index
    %3 = vector.load %arg4[%c0, %c0_1, %c0_2] : memref<1x8x128xf32, #tpu.memory_space<vmem>>, vector<1x8x128xf32>
    %c0_3 = arith.constant 0 : index
    %c0_4 = arith.constant 0 : index
    %4 = vector.load %arg2[%c0_3, %c0_4] : memref<8x8192xbf16, #tpu.memory_space<vmem>>, vector<8x8192xbf16>
    %c0_5 = arith.constant 0 : index
    %c0_6 = arith.constant 0 : index
    %5 = vector.load %arg3[%c0_5, %c0_6] : memref<8192x128xbf16, #tpu.memory_space<vmem>>, vector<8192x128xbf16>
    %cst = arith.constant dense<0.000000e+00> : vector<8x128xf32>
    %6 = tpu.matmul %4, %5, %cst {dimension_numbers = #tpu.dot_dimension_numbers<[1], [0], [0], [1], [0, 0, 1, 1], [], []>} : vector<8x8192xbf16>, vector<8192x128xbf16>, vector<8x128xf32> -> vector<8x128xf32>
    %7 = vector.shape_cast %6 : vector<8x128xf32> to vector<1x8x128xf32>
    %8 = arith.addf %3, %7 : vector<1x8x128xf32>
    %c0_7 = arith.constant 0 : index
    %c0_8 = arith.constant 0 : index
    %c0_9 = arith.constant 0 : index
    %9 = vector.load %arg4[%c0_7, %c0_8, %c0_9] : memref<1x8x128xf32, #tpu.memory_space<vmem>>, vector<1x8x128xf32>
    tpu.vector_store %arg4[%c0_7, %c0_8, %c0_9], %8 {strides = array<i32>} : memref<1x8x128xf32, #tpu.memory_space<vmem>>, vector<1x8x128xf32>,
    return
  }
  func.func @transform_0(%arg0: i32, %arg1: i32) -> (i32, i32) {
    %c3_i32 = arith.constant 3 : i32
    %0 = arith.muli %arg0, %c3_i32 : i32
    %1 = arith.addi %0, %arg1 : i32
    %c0_i32 = arith.constant 0 : i32
    %c0_i32_0 = arith.constant 0 : i32
    return %c0_i32, %1 : i32, i32
  }
  func.func @transform_1(%arg0: i32, %arg1: i32) -> (i32, i32) {
    %c3_i32 = arith.constant 3 : i32
    %0 = arith.muli %arg0, %c3_i32 : i32
    %1 = arith.addi %0, %arg1 : i32
    %c0_i32 = arith.constant 0 : i32
    %c0_i32_0 = arith.constant 0 : i32
    return %1, %c0_i32 : i32, i32
  }
  func.func @transform_2(%arg0: i32, %arg1: i32) -> (i32, i32, i32) {
    %c0_i32 = arith.constant 0 : i32
    %c0_i32_0 = arith.constant 0 : i32
    %c0_i32_1 = arith.constant 0 : i32
    return %arg0, %c0_i32, %c0_i32_0 : i32, i32, i32
  }
}

</mosaic_0001>

<llo_original>
// kernel: logistic_regression_forward.3
$region0: #{logistic_regression_forward.3}
  #allocation0 [shape = 'u32[]', space=smem, size = 0x4, offset = 0x4, fixed_abs, tag = 'smem constant byte address 0x4 - core index']
  #allocation1 [shape = 'u32[144,128]{1,0:T(1,128)}', space=vmem, size = 0x12000, scoped, tag = 'internal scratch']
  %s0 = inlined_call_operand.vmem [shape: f32[2,8,128], index: 0, kind: input, shape index: {}]
  %s1 = inlined_call_operand.vmem [shape: f32[1,128], index: 1, kind: input, shape index: {}]
  %s2 = inlined_call_operand.vmem [shape: f32[8,128], index: 2, kind: output, shape index: {}]
  %s3 = sld [smem:[#allocation0]]
  $region18: #{logistic_regression_forward.3} parent=0
    _
  %s5 = ssub.s32 1, %s3
  %s6 = scalar_select 0, %s5, %s3
  // Predicated region
  $region2: #{logistic_regression_forward.3} parent=0 // pred_check
    _
  $region3: #{logistic_regression_forward.3} parent=0 // pred_check_branch
    %8 = sbr.rel (0) target = $region5
  $region4: #{logistic_regression_forward.3} parent=0 // pred_region
    _
  $region5: #{logistic_regression_forward.3} parent=0 // pred_fallthru
    _
  // Predicated region
  $region6: #{logistic_regression_forward.3} parent=0 // pred_check
    _
  $region7: #{logistic_regression_forward.3} parent=0 // pred_check_branch
    %10 = sbr.rel (0) target = $region9
  $region8: #{logistic_regression_forward.3} parent=0 // pred_region
    _
  $region9: #{logistic_regression_forward.3} parent=0 // pred_fallthru
    _
  %v11 = vld [vmem:[%s1] sm:$0x1]
  %v12 = vld [vmem:[%s0] sm:$0xff]
  %v14 = vlaneseq
  %v15 = vshrl.u32 %v14, 7
  %v16 = vsub.s32 0, %v15
  %v17 = vrot.slane %v11, %v16
  %v19 = vadd.f32 %v17, %v12
  %s20 = scalar_lea.vmem %s0, 8
  %v21 = vld [vmem:[%s20] sm:$0xff]
  %v22 = vadd.f32 %v19, %v21
  %v23 = vsub.f32 0.0, %v22
  %v24 = vmul.f32 %v23, 1.442695
  %v25 = vpow.pop %v24
  %v26 = vadd.f32 %v25, 1.0
  %v27 = vrcp.pop %v26
  %28 = vst [vmem:[%s2] sm:$0xff] %v27
  // Predicated region
  $region10: #{logistic_regression_forward.3} parent=0 // pred_check
    _
  $region11: #{logistic_regression_forward.3} parent=0 // pred_check_branch
    %30 = sbr.rel (0) target = $region13
  $region12: #{logistic_regression_forward.3} parent=0 // pred_region
    _
  $region13: #{logistic_regression_forward.3} parent=0 // pred_fallthru
    _
  // Predicated region
  $region14: #{logistic_regression_forward.3} parent=0 // pred_check
    _
  $region15: #{logistic_regression_forward.3} parent=0 // pred_check_branch
    %32 = sbr.rel (0) target = $region17
  $region16: #{logistic_regression_forward.3} parent=0 // pred_region
    _
  $region17: #{logistic_regression_forward.3} parent=0 // pred_fallthru
    _

// kernel: logistic_regression_forward.2
$region0: #{logistic_regression_forward.2}
  #allocation0 [shape = 'u32[]', space=smem, size = 0x4, offset = 0x4, fixed_abs, tag = 'smem constant byte address 0x4 - core index']
  #allocation1 [shape = 'u32[144,128]{1,0:T(1,128)}', space=vmem, size = 0x12000, scoped, tag = 'internal scratch']
  %s0 = inlined_call_operand.vmem [shape: bf16[8,49152], index: 0, kind: input, shape index: {}]
  %s1 = inlined_call_operand.hbm [shape: bf16[49152,128], index: 1, kind: input, shape index: {}]
  %s2 = inlined_call_operand.vmem [shape: f32[2,8,128], index: 2, kind: output, shape index: {}]
  %s3 = sld [smem:[#allocation0]]
  $region49: #{logistic_regression_forward.2} parent=0
    _
  %s5 = ssub.s32 1, %s3
  %s6 = scalar_select 0, %s5, %s3
  $region1: #{logistic_regression_forward.2} parent=0
    #allocation2 [shape = 'u8[4194304]{0}', space=vmem, size = 0x400000, scoped, tag = 'input window, operand 1']
    #allocation3 [shape = 's32[2]{0}', space=sflag, size = 0x8, scoped, tag = 'scoped memory for logistic_regression_forward.2']
    %7 = vsyncpa [#allocation3], 0
    %s8 = scalar_lea.sflag [#allocation3], 1
    %9 = vsyncpa %s8, 0
    loop: start=0, step=1, limit=8
    $region2: #{logistic_regression_forward.2} parent=1 // loop_pre_header
      _
    $region3: #{logistic_regression_forward.2} parent=1 // loop_header
      %s11 = sphi 0, %s15
      %p12 = scmp.ge.s32.totalorder %s11, 8
      %s18 = sphi 0, %s30
      %s19 = sphi 0, %s26
      %s20 = sphi 0, %s18
      %s21 = sphi 0, %s19
      %s22 = sphi 0, %s20
      %s23 = sphi 0, %s21
      %s37 = sphi 0, %s39
      %s40 = sphi 0, %s37
      %s41 = sphi 0, %s40
      %s57 = sphi 0, %s41
      %s67 = sphi 0, %s69
      %s70 = sphi 0, %s67
      %s71 = sphi 0, %s70
      %s87 = sphi 0, %s71
      %s93 = sphi 0, %s95
      %s96 = sphi 0, %s93
      %s97 = sphi 0, %s96
      %s113 = sphi 0, %s97
    $region4: #{logistic_regression_forward.2} parent=1 // loop_header_branch
      %14 = sbr.rel (%p12) target = $region8
    $region5: #{logistic_regression_forward.2} parent=1 // loop_body
      %s16 = ssub.s32 %s11, 1
      %s17 = ssub.s32 %s11, 2
      %s24 = sadd.s32 1, %s19
      %p25 = scmp.ge.s32.totalorder %s24, 3
      %s26 = scalar_select %p25, 0, %s24
      %s27 = sadd.s32 1, %s18
      %s28 = scalar_select %p25, %s27, %s18
      %p29 = scmp.ge.s32.totalorder %s28, 2
      %s30 = scalar_select %p29, 0, %s28
      %s31 = smul.u32 %s18, 3
      %s32 = sadd.s32 %s31, %s19
      %s33 = smul.u32 %s30, 3
      %s34 = sadd.s32 %s33, %s26
      %s35 = ssub.s32 %s32, %s34
      %p36 = scmp.eq.s32.totalorder %s35, 0
      %s38 = sadd.s32 %s37, 1
      %s39 = scalar_select %p36, %s37, %s38
      %p42 = pneg %p36
      %p43 = scmp.eq.s32.totalorder %s11, 5
      %p44 = por %p42, %p43
      %p45 = scmp.ne.s32.totalorder %s37, %s40
      %p46 = scmp.eq.s32.totalorder %s11, 0
      %p47 = por %p45, %p46
      %p48 = scmp.ne.s32.totalorder %s37, %s40
      %p49 = scmp.eq.s32.totalorder %s16, 5
      %p50 = por %p48, %p49
      %p51 = scmp.ne.s32.totalorder %s40, %s41
      %p52 = scmp.eq.s32.totalorder %s16, 0
      %p53 = por %p51, %p52
      %p54 = scmp.ne.s32.totalorder %s40, %s41
      %p55 = scmp.eq.s32.totalorder %s17, 5
      %p56 = por %p54, %p55
      %p58 = scmp.ne.s32.totalorder %s41, %s57
      %p59 = scmp.eq.s32.totalorder %s17, 0
      %p60 = por %p58, %p59
      %s61 = smul.u32 %s18, 3
      %s62 = sadd.s32 %s61, %s19
      %s63 = smul.u32 %s30, 3
      %s64 = sadd.s32 %s63, %s26
      %s65 = ssub.s32 %s62, %s64
      %p66 = scmp.eq.s32.totalorder %s65, 0
      %s68 = sadd.s32 %s67, 1
      %s69 = scalar_select %p66, %s67, %s68
      %p72 = pneg %p66
      %p73 = scmp.eq.s32.totalorder %s11, 5
      %p74 = por %p72, %p73
      %p75 = scmp.ne.s32.totalorder %s67, %s70
      %p76 = scmp.eq.s32.totalorder %s11, 0
      %p77 = por %p75, %p76
      %p78 = scmp.ne.s32.totalorder %s67, %s70
      %p79 = scmp.eq.s32.totalorder %s16, 5
      %p80 = por %p78, %p79
      %p81 = scmp.ne.s32.totalorder %s70, %s71
      %p82 = scmp.eq.s32.totalorder %s16, 0
      %p83 = por %p81, %p82
      %p84 = scmp.ne.s32.totalorder %s70, %s71
      %p85 = scmp.eq.s32.totalorder %s17, 5
      %p86 = por %p84, %p85
      %p88 = scmp.ne.s32.totalorder %s71, %s87
      %p89 = scmp.eq.s32.totalorder %s17, 0
      %p90 = por %p88, %p89
      %s91 = ssub.s32 %s18, %s30
      %p92 = scmp.eq.s32.totalorder %s91, 0
      %s94 = sadd.s32 %s93, 1
      %s95 = scalar_select %p92, %s93, %s94
      %p98 = pneg %p92
      %p99 = scmp.eq.s32.totalorder %s11, 5
      %p100 = por %p98, %p99
      %p101 = scmp.ne.s32.totalorder %s93, %s96
      %p102 = scmp.eq.s32.totalorder %s11, 0
      %p103 = por %p101, %p102
      %p104 = scmp.ne.s32.totalorder %s93, %s96
      %p105 = scmp.eq.s32.totalorder %s16, 5
      %p106 = por %p104, %p105
      %p107 = scmp.ne.s32.totalorder %s96, %s97
      %p108 = scmp.eq.s32.totalorder %s16, 0
      %p109 = por %p107, %p108
      %p110 = scmp.ne.s32.totalorder %s96, %s97
      %p111 = scmp.eq.s32.totalorder %s17, 5
      %p112 = por %p110, %p111
      %p114 = scmp.ne.s32.totalorder %s97, %s113
      %p115 = scmp.eq.s32.totalorder %s17, 0
      %p116 = por %p114, %p115
      %p117 = scmp.le.s32.totalorder 1, %s11
      %p118 = scmp.lt.s32.totalorder %s11, 7
      %p119 = pnand %p117, %p118
      %p120 = pneg %p119
      // Predicated region
      $region9: #{logistic_regression_forward.2} parent=5 // pred_check
        _
      $region10: #{logistic_regression_forward.2} parent=5 // pred_check_branch
        %122 = sbr.rel (%p119) target = $region12
      $region11: #{logistic_regression_forward.2} parent=5 // pred_region
        %s123 = ssub.s32 %s11, 1
      $region12: #{logistic_regression_forward.2} parent=5 // pred_fallthru
        _
      %p124 = scmp.lt.s32.totalorder %s11, 6
      // Predicated region
      $region13: #{logistic_regression_forward.2} parent=5 // pred_check
        %p125 = pneg %p124
      $region14: #{logistic_regression_forward.2} parent=5 // pred_check_branch
        %127 = sbr.rel (%p125) target = $region16
      $region15: #{logistic_regression_forward.2} parent=5 // pred_region
        // Predicated region
        $region17: #{logistic_regression_forward.2} parent=15 // pred_check
          %p128 = pneg %p47
        $region18: #{logistic_regression_forward.2} parent=15 // pred_check_branch
          %130 = sbr.rel (%p128) target = $region20
        $region19: #{logistic_regression_forward.2} parent=15 // pred_region
          %s131 = smul.u32 %s18, 3
          %s132 = sadd.s32 %s131, %s19
          %s133 = smul.u32 64, %s132
          %p134 = scmp.lt.s32.totalorder %s133, 383
          %s135 = scalar_select %p134, %s133, 383
          %s136 = smul.addr %s135, 4
          %s137 = scalar_lea.vmem %s0, %s136
          %s138 = smul.u32 %s18, 3
          %s139 = sadd.s32 %s138, %s19
          %s140 = smul.u32 64, %s139
        $region20: #{logistic_regression_forward.2} parent=15 // pred_fallthru
          _
        // Predicated region
        $region21: #{logistic_regression_forward.2} parent=15 // pred_check
          %p141 = pneg %p77
        $region22: #{logistic_regression_forward.2} parent=15 // pred_check_branch
          %143 = sbr.rel (%p141) target = $region24
        $region23: #{logistic_regression_forward.2} parent=15 // pred_region
          %s144 = sand.u32 %s67, 1
          %s145 = scalar_lea.sflag [#allocation3], %s144
          %s146 = sand.u32 %s67, 1
          %s147 = smul.addr %s146, 4096
          %s148 = scalar_lea.vmem [#allocation2], %s147
          %s149 = smul.u32 %s18, 3
          %s150 = sadd.s32 %s149, %s19
          %s151 = smul.u32 1024, %s150
          %s153 = ssub.s32 65536, 65536
          %154 = vsyncadd %s145, %s153
          %s155 = smul.addr %s151, 64
          %s156 = scalar_lea.hbm %s1, %s155
          %s157 = sshll.u32 %s148, 4
          %s158 = int_to_ptr.vmem [resolvable:$true] %s157
          %163 = dma.hbm_to_vmem [thread:$0]  %s156, 65536, %s158, %s145, 64, 64, 4
        $region24: #{logistic_regression_forward.2} parent=15 // pred_fallthru
          _
      $region16: #{logistic_regression_forward.2} parent=5 // pred_fallthru
        _
      %p164 = scmp.le.s32.totalorder 1, %s11
      %p165 = scmp.lt.s32.totalorder %s11, 7
      %p166 = pnand %p164, %p165
      %p167 = pneg %p166
      // Predicated region
      $region25: #{logistic_regression_forward.2} parent=5 // pred_check
        _
      $region26: #{logistic_regression_forward.2} parent=5 // pred_check_branch
        %169 = sbr.rel (%p166) target = $region28
      $region27: #{logistic_regression_forward.2} parent=5 // pred_region
        %s170 = ssub.s32 %s11, 1
        %s171 = sand.u32 %s70, 1
        %s172 = scalar_lea.sflag [#allocation3], %s171
        %s173 = sand.u32 %s70, 1
        %s174 = smul.addr %s173, 4096
        %s175 = scalar_lea.vmem [#allocation2], %s174
        // Predicated region
        $region29: #{logistic_regression_forward.2} parent=27 // pred_check
          %p176 = pneg %p83
        $region30: #{logistic_regression_forward.2} parent=27 // pred_check_branch
          %178 = sbr.rel (%p176) target = $region32
        $region31: #{logistic_regression_forward.2} parent=27 // pred_region
          %179 = dma.done %s172, 65536
        $region32: #{logistic_regression_forward.2} parent=27 // pred_fallthru
          _
        %s180 = smul.u32 %s20, 3
        %s181 = sadd.s32 %s180, %s21
        %s182 = smul.u32 64, %s181
        %p183 = scmp.lt.s32.totalorder %s182, 383
        %s184 = scalar_select %p183, %s182, 383
        %s185 = smul.addr %s184, 4
        %s186 = scalar_lea.vmem %s0, %s185
        %p187 = pneg %p53
        %p188 = pneg %p50
        %s189 = sand.u32 %s70, 1
        %s190 = scalar_lea.sflag [#allocation3], %s189
        %s191 = sand.u32 %s70, 1
        %s192 = smul.addr %s191, 4096
        %s193 = scalar_lea.vmem [#allocation2], %s192
        %p194 = pneg %p83
        %p195 = pneg %p80
        %p196 = pneg %p109
        %p197 = pneg %p106
        %p198 = scmp.lt.s32.totalorder %s20, 1
        %s199 = scalar_select %p198, %s20, 1
        %s200 = smul.addr %s199, 8
        %s201 = scalar_lea.vmem %s2, %s200
        %s202 = smul.u32 %s20, 3
        %s203 = sadd.s32 %s202, %s21
        %s204 = smul.u32 64, %s203
        %p205 = scmp.lt.s32.totalorder %s204, 383
        %s206 = scalar_select %p205, %s204, 383
        %s207 = smul.addr %s206, 4
        %s208 = scalar_lea.vmem %s0, %s207
        %s209 = smul.u32 %s20, 3
        %s210 = sadd.s32 %s209, %s21
        %s211 = smul.u32 64, %s210
        %s212 = smul.u32 %s20, 3
        %s213 = sadd.s32 %s212, %s21
        %s214 = smul.u32 1024, %s213
        %p215 = scmp.lt.s32.totalorder %s20, 1
        %s216 = scalar_select %p215, %s20, 1
        %s217 = smul.addr %s216, 8
        %s218 = scalar_lea.vmem %s2, %s217
        %p220 = scmp.eq.s32.totalorder %s21, 0
        // Predicated region
        $region33: #{logistic_regression_forward.2} parent=27 // pred_check
          %p221 = pneg %p220
        $region34: #{logistic_regression_forward.2} parent=27 // pred_check_branch
          %223 = sbr.rel (%p221) target = $region36
        $region35: #{logistic_regression_forward.2} parent=27 // pred_region
          %224 = vst [vmem:[%s218] sm:$0xff] 0.0
        $region36: #{logistic_regression_forward.2} parent=27 // pred_fallthru
          _
        %v225 = vld [vmem:[%s218] sm:$0xff]
        %v226 = vld [vmem:[%s208] sm:$0xff]
        %v227 = vld [vmem:[%s208 + $0x8] sm:$0xff]
        %v228 = vld [vmem:[%s208 + $0x10] sm:$0xff]
        %v229 = vld [vmem:[%s208 + $0x18] sm:$0xff]
        %v230 = vld [vmem:[%s208 + $0x20] sm:$0xff]
        %v231 = vld [vmem:[%s208 + $0x28] sm:$0xff]
        %v232 = vld [vmem:[%s208 + $0x30] sm:$0xff]
        %v233 = vld [vmem:[%s208 + $0x38] sm:$0xff]
        %v234 = vld [vmem:[%s208 + $0x40] sm:$0xff]
        %v235 = vld [vmem:[%s208 + $0x48] sm:$0xff]
        %v236 = vld [vmem:[%s208 + $0x50] sm:$0xff]
        %v237 = vld [vmem:[%s208 + $0x58] sm:$0xff]
        %v238 = vld [vmem:[%s208 + $0x60] sm:$0xff]
        %v239 = vld [vmem:[%s208 + $0x68] sm:$0xff]
        %v240 = vld [vmem:[%s208 + $0x70] sm:$0xff]
        %v241 = vld [vmem:[%s208 + $0x78] sm:$0xff]
        %v242 = vld [vmem:[%s208 + $0x80] sm:$0xff]
        %v243 = vld [vmem:[%s208 + $0x88] sm:$0xff]
        %v244 = vld [vmem:[%s208 + $0x90] sm:$0xff]
        %v245 = vld [vmem:[%s208 + $0x98] sm:$0xff]
        %v246 = vld [vmem:[%s208 + $0xa0] sm:$0xff]
        %v247 = vld [vmem:[%s208 + $0xa8] sm:$0xff]
        %v248 = vld [vmem:[%s208 + $0xb0] sm:$0xff]
        %v249 = vld [vmem:[%s208 + $0xb8] sm:$0xff]
        %v250 = vld [vmem:[%s208 + $0xc0] sm:$0xff]
        %v251 = vld [vmem:[%s208 + $0xc8] sm:$0xff]
        %v252 = vld [vmem:[%s208 + $0xd0] sm:$0xff]
        %v253 = vld [vmem:[%s208 + $0xd8] sm:$0xff]
        %v254 = vld [vmem:[%s208 + $0xe0] sm:$0xff]
        %v255 = vld [vmem:[%s208 + $0xe8] sm:$0xff]
        %v256 = vld [vmem:[%s208 + $0xf0] sm:$0xff]
        %v257 = vld [vmem:[%s208 + $0xf8] sm:$0xff]
        %v258 = vld [vmem:[%s175] sm:$0xf]
        %v259 = vld [vmem:[%s175 + $0x4] sm:$0xf]
        %v260 = vld [vmem:[%s175 + $0x8] sm:$0xf]
        %v261 = vld [vmem:[%s175 + $0xc] sm:$0xf]
        %v262 = vld [vmem:[%s175 + $0x10] sm:$0xf]
        %v263 = vld [vmem:[%s175 + $0x14] sm:$0xf]
        %v264 = vld [vmem:[%s175 + $0x18] sm:$0xf]
        %v265 = vld [vmem:[%s175 + $0x1c] sm:$0xf]
        %v266 = vld [vmem:[%s175 + $0x20] sm:$0xf]
        %v267 = vld [vmem:[%s175 + $0x24] sm:$0xf]
        %v268 = vld [vmem:[%s175 + $0x28] sm:$0xf]
        %v269 = vld [vmem:[%s175 + $0x2c] sm:$0xf]
        %v270 = vld [vmem:[%s175 + $0x30] sm:$0xf]
        %v271 = vld [vmem:[%s175 + $0x34] sm:$0xf]
        %v272 = vld [vmem:[%s175 + $0x38] sm:$0xf]
        %v273 = vld [vmem:[%s175 + $0x3c] sm:$0xf]
        %v274 = vld [vmem:[%s175 + $0x40] sm:$0xf]
        %v275 = vld [vmem:[%s175 + $0x44] sm:$0xf]
        %v276 = vld [vmem:[%s175 + $0x48] sm:$0xf]
        %v277 = vld [vmem:[%s175 + $0x4c] sm:$0xf]
        %v278 = vld [vmem:[%s175 + $0x50] sm:$0xf]
        %v279 = vld [vmem:[%s175 + $0x54] sm:$0xf]
        %v280 = vld [vmem:[%s175 + $0x58] sm:$0xf]
        %v281 = vld [vmem:[%s175 + $0x5c] sm:$0xf]
        %v282 = vld [vmem:[%s175 + $0x60] sm:$0xf]
        %v283 = vld [vmem:[%s175 + $0x64] sm:$0xf]
        %v284 = vld [vmem:[%s175 + $0x68] sm:$0xf]
        %v285 = vld [vmem:[%s175 + $0x6c] sm:$0xf]
        %v286 = vld [vmem:[%s175 + $0x70] sm:$0xf]
        %v287 = vld [vmem:[%s175 + $0x74] sm:$0xf]
        %v288 = vld [vmem:[%s175 + $0x78] sm:$0xf]
        %v289 = vld [vmem:[%s175 + $0x7c] sm:$0xf]
        %v290 = vld [vmem:[%s175 + $0x80] sm:$0xf]
        %v291 = vld [vmem:[%s175 + $0x84] sm:$0xf]
        %v292 = vld [vmem:[%s175 + $0x88] sm:$0xf]
        %v293 = vld [vmem:[%s175 + $0x8c] sm:$0xf]
        %v294 = vld [vmem:[%s175 + $0x90] sm:$0xf]
        %v295 = vld [vmem:[%s175 + $0x94] sm:$0xf]
        %v296 = vld [vmem:[%s175 + $0x98] sm:$0xf]
        %v297 = vld [vmem:[%s175 + $0x9c] sm:$0xf]
        %v298 = vld [vmem:[%s175 + $0xa0] sm:$0xf]
        %v299 = vld [vmem:[%s175 + $0xa4] sm:$0xf]
        %v300 = vld [vmem:[%s175 + $0xa8] sm:$0xf]
        %v301 = vld [vmem:[%s175 + $0xac] sm:$0xf]
        %v302 = vld [vmem:[%s175 + $0xb0] sm:$0xf]
        %v303 = vld [vmem:[%s175 + $0xb4] sm:$0xf]
        %v304 = vld [vmem:[%s175 + $0xb8] sm:$0xf]
        %v305 = vld [vmem:[%s175 + $0xbc] sm:$0xf]
        %v306 = vld [vmem:[%s175 + $0xc0] sm:$0xf]
        %v307 = vld [vmem:[%s175 + $0xc4] sm:$0xf]
        %v308 = vld [vmem:[%s175 + $0xc8] sm:$0xf]
        %v309 = vld [vmem:[%s175 + $0xcc] sm:$0xf]
        %v310 = vld [vmem:[%s175 + $0xd0] sm:$0xf]
        %v311 = vld [vmem:[%s175 + $0xd4] sm:$0xf]
        %v312 = vld [vmem:[%s175 + $0xd8] sm:$0xf]
        %v313 = vld [vmem:[%s175 + $0xdc] sm:$0xf]
        %v314 = vld [vmem:[%s175 + $0xe0] sm:$0xf]
        %v315 = vld [vmem:[%s175 + $0xe4] sm:$0xf]
        %v316 = vld [vmem:[%s175 + $0xe8] sm:$0xf]
        %v317 = vld [vmem:[%s175 + $0xec] sm:$0xf]
        %v318 = vld [vmem:[%s175 + $0xf0] sm:$0xf]
        %v319 = vld [vmem:[%s175 + $0xf4] sm:$0xf]
        %v320 = vld [vmem:[%s175 + $0xf8] sm:$0xf]
        %v321 = vld [vmem:[%s175 + $0xfc] sm:$0xf]
        %v322 = vld [vmem:[%s175 + $0x100] sm:$0xf]
        %v323 = vld [vmem:[%s175 + $0x104] sm:$0xf]
        %v324 = vld [vmem:[%s175 + $0x108] sm:$0xf]
        %v325 = vld [vmem:[%s175 + $0x10c] sm:$0xf]
        %v326 = vld [vmem:[%s175 + $0x110] sm:$0xf]
        %v327 = vld [vmem:[%s175 + $0x114] sm:$0xf]
        %v328 = vld [vmem:[%s175 + $0x118] sm:$0xf]
        %v329 = vld [vmem:[%s175 + $0x11c] sm:$0xf]
        %v330 = vld [vmem:[%s175 + $0x120] sm:$0xf]
        %v331 = vld [vmem:[%s175 + $0x124] sm:$0xf]
        %v332 = vld [vmem:[%s175 + $0x128] sm:$0xf]
        %v333 = vld [vmem:[%s175 + $0x12c] sm:$0xf]
        %v334 = vld [vmem:[%s175 + $0x130] sm:$0xf]
        %v335 = vld [vmem:[%s175 + $0x134] sm:$0xf]
        %v336 = vld [vmem:[%s175 + $0x138] sm:$0xf]
        %v337 = vld [vmem:[%s175 + $0x13c] sm:$0xf]
        %v338 = vld [vmem:[%s175 + $0x140] sm:$0xf]
        %v339 = vld [vmem:[%s175 + $0x144] sm:$0xf]
        %v340 = vld [vmem:[%s175 + $0x148] sm:$0xf]
        %v341 = vld [vmem:[%s175 + $0x14c] sm:$0xf]
        %v342 = vld [vmem:[%s175 + $0x150] sm:$0xf]
        %v343 = vld [vmem:[%s175 + $0x154] sm:$0xf]
        %v344 = vld [vmem:[%s175 + $0x158] sm:$0xf]
        %v345 = vld [vmem:[%s175 + $0x15c] sm:$0xf]
        %v346 = vld [vmem:[%s175 + $0x160] sm:$0xf]
        %v347 = vld [vmem:[%s175 + $0x164] sm:$0xf]
        %v348 = vld [vmem:[%s175 + $0x168] sm:$0xf]
        %v349 = vld [vmem:[%s175 + $0x16c] sm:$0xf]
        %v350 = vld [vmem:[%s175 + $0x170] sm:$0xf]
        %v351 = vld [vmem:[%s175 + $0x174] sm:$0xf]
        %v352 = vld [vmem:[%s175 + $0x178] sm:$0xf]
        %v353 = vld [vmem:[%s175 + $0x17c] sm:$0xf]
        %v354 = vld [vmem:[%s175 + $0x180] sm:$0xf]
        %v355 = vld [vmem:[%s175 + $0x184] sm:$0xf]
        %v356 = vld [vmem:[%s175 + $0x188] sm:$0xf]
        %v357 = vld [vmem:[%s175 + $0x18c] sm:$0xf]
        %v358 = vld [vmem:[%s175 + $0x190] sm:$0xf]
        %v359 = vld [vmem:[%s175 + $0x194] sm:$0xf]
        %v360 = vld [vmem:[%s175 + $0x198] sm:$0xf]
        %v361 = vld [vmem:[%s175 + $0x19c] sm:$0xf]
        %v362 = vld [vmem:[%s175 + $0x1a0] sm:$0xf]
        %v363 = vld [vmem:[%s175 + $0x1a4] sm:$0xf]
        %v364 = vld [vmem:[%s175 + $0x1a8] sm:$0xf]
        %v365 = vld [vmem:[%s175 + $0x1ac] sm:$0xf]
        %v366 = vld [vmem:[%s175 + $0x1b0] sm:$0xf]
        %v367 = vld [vmem:[%s175 + $0x1b4] sm:$0xf]
        %v368 = vld [vmem:[%s175 + $0x1b8] sm:$0xf]
        %v369 = vld [vmem:[%s175 + $0x1bc] sm:$0xf]
        %v370 = vld [vmem:[%s175 + $0x1c0] sm:$0xf]
        %v371 = vld [vmem:[%s175 + $0x1c4] sm:$0xf]
        %v372 = vld [vmem:[%s175 + $0x1c8] sm:$0xf]
        %v373 = vld [vmem:[%s175 + $0x1cc] sm:$0xf]
        %v374 = vld [vmem:[%s175 + $0x1d0] sm:$0xf]
        %v375 = vld [vmem:[%s175 + $0x1d4] sm:$0xf]
        %v376 = vld [vmem:[%s175 + $0x1d8] sm:$0xf]
        %v377 = vld [vmem:[%s175 + $0x1dc] sm:$0xf]
        %v378 = vld [vmem:[%s175 + $0x1e0] sm:$0xf]
        %v379 = vld [vmem:[%s175 + $0x1e4] sm:$0xf]
        %v380 = vld [vmem:[%s175 + $0x1e8] sm:$0xf]
        %v381 = vld [vmem:[%s175 + $0x1ec] sm:$0xf]
        %v382 = vld [vmem:[%s175 + $0x1f0] sm:$0xf]
        %v383 = vld [vmem:[%s175 + $0x1f4] sm:$0xf]
        %v384 = vld [vmem:[%s175 + $0x1f8] sm:$0xf]
        %v385 = vld [vmem:[%s175 + $0x1fc] sm:$0xf]
        %v386 = vld [vmem:[%s175 + $0x200] sm:$0xf]
        %v387 = vld [vmem:[%s175 + $0x204] sm:$0xf]
        %v388 = vld [vmem:[%s175 + $0x208] sm:$0xf]
        %v389 = vld [vmem:[%s175 + $0x20c] sm:$0xf]
        %v390 = vld [vmem:[%s175 + $0x210] sm:$0xf]
        %v391 = vld [vmem:[%s175 + $0x214] sm:$0xf]
        %v392 = vld [vmem:[%s175 + $0x218] sm:$0xf]
        %v393 = vld [vmem:[%s175 + $0x21c] sm:$0xf]
        %v394 = vld [vmem:[%s175 + $0x220] sm:$0xf]
        %v395 = vld [vmem:[%s175 + $0x224] sm:$0xf]
        %v396 = vld [vmem:[%s175 + $0x228] sm:$0xf]
        %v397 = vld [vmem:[%s175 + $0x22c] sm:$0xf]
        %v398 = vld [vmem:[%s175 + $0x230] sm:$0xf]
        %v399 = vld [vmem:[%s175 + $0x234] sm:$0xf]
        %v400 = vld [vmem:[%s175 + $0x238] sm:$0xf]
        %v401 = vld [vmem:[%s175 + $0x23c] sm:$0xf]
        %v402 = vld [vmem:[%s175 + $0x240] sm:$0xf]
        %v403 = vld [vmem:[%s175 + $0x244] sm:$0xf]
        %v404 = vld [vmem:[%s175 + $0x248] sm:$0xf]
        %v405 = vld [vmem:[%s175 + $0x24c] sm:$0xf]
        %v406 = vld [vmem:[%s175 + $0x250] sm:$0xf]
        %v407 = vld [vmem:[%s175 + $0x254] sm:$0xf]
        %v408 = vld [vmem:[%s175 + $0x258] sm:$0xf]
        %v409 = vld [vmem:[%s175 + $0x25c] sm:$0xf]
        %v410 = vld [vmem:[%s175 + $0x260] sm:$0xf]
        %v411 = vld [vmem:[%s175 + $0x264] sm:$0xf]
        %v412 = vld [vmem:[%s175 + $0x268] sm:$0xf]
        %v413 = vld [vmem:[%s175 + $0x26c] sm:$0xf]
        %v414 = vld [vmem:[%s175 + $0x270] sm:$0xf]
        %v415 = vld [vmem:[%s175 + $0x274] sm:$0xf]
        %v416 = vld [vmem:[%s175 + $0x278] sm:$0xf]
        %v417 = vld [vmem:[%s175 + $0x27c] sm:$0xf]
        %v418 = vld [vmem:[%s175 + $0x280] sm:$0xf]
        %v419 = vld [vmem:[%s175 + $0x284] sm:$0xf]
        %v420 = vld [vmem:[%s175 + $0x288] sm:$0xf]
        %v421 = vld [vmem:[%s175 + $0x28c] sm:$0xf]
        %v422 = vld [vmem:[%s175 + $0x290] sm:$0xf]
        %v423 = vld [vmem:[%s175 + $0x294] sm:$0xf]
        %v424 = vld [vmem:[%s175 + $0x298] sm:$0xf]
        %v425 = vld [vmem:[%s175 + $0x29c] sm:$0xf]
        %v426 = vld [vmem:[%s175 + $0x2a0] sm:$0xf]
        %v427 = vld [vmem:[%s175 + $0x2a4] sm:$0xf]
        %v428 = vld [vmem:[%s175 + $0x2a8] sm:$0xf]
        %v429 = vld [vmem:[%s175 + $0x2ac] sm:$0xf]
        %v430 = vld [vmem:[%s175 + $0x2b0] sm:$0xf]
        %v431 = vld [vmem:[%s175 + $0x2b4] sm:$0xf]
        %v432 = vld [vmem:[%s175 + $0x2b8] sm:$0xf]
        %v433 = vld [vmem:[%s175 + $0x2bc] sm:$0xf]
        %v434 = vld [vmem:[%s175 + $0x2c0] sm:$0xf]
        %v435 = vld [vmem:[%s175 + $0x2c4] sm:$0xf]
        %v436 = vld [vmem:[%s175 + $0x2c8] sm:$0xf]
        %v437 = vld [vmem:[%s175 + $0x2cc] sm:$0xf]
        %v438 = vld [vmem:[%s175 + $0x2d0] sm:$0xf]
        %v439 = vld [vmem:[%s175 + $0x2d4] sm:$0xf]
        %v440 = vld [vmem:[%s175 + $0x2d8] sm:$0xf]
        %v441 = vld [vmem:[%s175 + $0x2dc] sm:$0xf]
        %v442 = vld [vmem:[%s175 + $0x2e0] sm:$0xf]
        %v443 = vld [vmem:[%s175 + $0x2e4] sm:$0xf]
        %v444 = vld [vmem:[%s175 + $0x2e8] sm:$0xf]
        %v445 = vld [vmem:[%s175 + $0x2ec] sm:$0xf]
        %v446 = vld [vmem:[%s175 + $0x2f0] sm:$0xf]
        %v447 = vld [vmem:[%s175 + $0x2f4] sm:$0xf]
        %v448 = vld [vmem:[%s175 + $0x2f8] sm:$0xf]
        %v449 = vld [vmem:[%s175 + $0x2fc] sm:$0xf]
        %v450 = vld [vmem:[%s175 + $0x300] sm:$0xf]
        %v451 = vld [vmem:[%s175 + $0x304] sm:$0xf]
        %v452 = vld [vmem:[%s175 + $0x308] sm:$0xf]
        %v453 = vld [vmem:[%s175 + $0x30c] sm:$0xf]
        %v454 = vld [vmem:[%s175 + $0x310] sm:$0xf]
        %v455 = vld [vmem:[%s175 + $0x314] sm:$0xf]
        %v456 = vld [vmem:[%s175 + $0x318] sm:$0xf]
        %v457 = vld [vmem:[%s175 + $0x31c] sm:$0xf]
        %v458 = vld [vmem:[%s175 + $0x320] sm:$0xf]
        %v459 = vld [vmem:[%s175 + $0x324] sm:$0xf]
        %v460 = vld [vmem:[%s175 + $0x328] sm:$0xf]
        %v461 = vld [vmem:[%s175 + $0x32c] sm:$0xf]
        %v462 = vld [vmem:[%s175 + $0x330] sm:$0xf]
        %v463 = vld [vmem:[%s175 + $0x334] sm:$0xf]
        %v464 = vld [vmem:[%s175 + $0x338] sm:$0xf]
        %v465 = vld [vmem:[%s175 + $0x33c] sm:$0xf]
        %v466 = vld [vmem:[%s175 + $0x340] sm:$0xf]
        %v467 = vld [vmem:[%s175 + $0x344] sm:$0xf]
        %v468 = vld [vmem:[%s175 + $0x348] sm:$0xf]
        %v469 = vld [vmem:[%s175 + $0x34c] sm:$0xf]
        %v470 = vld [vmem:[%s175 + $0x350] sm:$0xf]
        %v471 = vld [vmem:[%s175 + $0x354] sm:$0xf]
        %v472 = vld [vmem:[%s175 + $0x358] sm:$0xf]
        %v473 = vld [vmem:[%s175 + $0x35c] sm:$0xf]
        %v474 = vld [vmem:[%s175 + $0x360] sm:$0xf]
        %v475 = vld [vmem:[%s175 + $0x364] sm:$0xf]
        %v476 = vld [vmem:[%s175 + $0x368] sm:$0xf]
        %v477 = vld [vmem:[%s175 + $0x36c] sm:$0xf]
        %v478 = vld [vmem:[%s175 + $0x370] sm:$0xf]
        %v479 = vld [vmem:[%s175 + $0x374] sm:$0xf]
        %v480 = vld [vmem:[%s175 + $0x378] sm:$0xf]
        %v481 = vld [vmem:[%s175 + $0x37c] sm:$0xf]
        %v482 = vld [vmem:[%s175 + $0x380] sm:$0xf]
        %v483 = vld [vmem:[%s175 + $0x384] sm:$0xf]
        %v484 = vld [vmem:[%s175 + $0x388] sm:$0xf]
        %v485 = vld [vmem:[%s175 + $0x38c] sm:$0xf]
        %v486 = vld [vmem:[%s175 + $0x390] sm:$0xf]
        %v487 = vld [vmem:[%s175 + $0x394] sm:$0xf]
        %v488 = vld [vmem:[%s175 + $0x398] sm:$0xf]
        %v489 = vld [vmem:[%s175 + $0x39c] sm:$0xf]
        %v490 = vld [vmem:[%s175 + $0x3a0] sm:$0xf]
        %v491 = vld [vmem:[%s175 + $0x3a4] sm:$0xf]
        %v492 = vld [vmem:[%s175 + $0x3a8] sm:$0xf]
        %v493 = vld [vmem:[%s175 + $0x3ac] sm:$0xf]
        %v494 = vld [vmem:[%s175 + $0x3b0] sm:$0xf]
        %v495 = vld [vmem:[%s175 + $0x3b4] sm:$0xf]
        %v496 = vld [vmem:[%s175 + $0x3b8] sm:$0xf]
        %v497 = vld [vmem:[%s175 + $0x3bc] sm:$0xf]
        %v498 = vld [vmem:[%s175 + $0x3c0] sm:$0xf]
        %v499 = vld [vmem:[%s175 + $0x3c4] sm:$0xf]
        %v500 = vld [vmem:[%s175 + $0x3c8] sm:$0xf]
        %v501 = vld [vmem:[%s175 + $0x3cc] sm:$0xf]
        %v502 = vld [vmem:[%s175 + $0x3d0] sm:$0xf]
        %v503 = vld [vmem:[%s175 + $0x3d4] sm:$0xf]
        %v504 = vld [vmem:[%s175 + $0x3d8] sm:$0xf]
        %v505 = vld [vmem:[%s175 + $0x3dc] sm:$0xf]
        %v506 = vld [vmem:[%s175 + $0x3e0] sm:$0xf]
        %v507 = vld [vmem:[%s175 + $0x3e4] sm:$0xf]
        %v508 = vld [vmem:[%s175 + $0x3e8] sm:$0xf]
        %v509 = vld [vmem:[%s175 + $0x3ec] sm:$0xf]
        %v510 = vld [vmem:[%s175 + $0x3f0] sm:$0xf]
        %v511 = vld [vmem:[%s175 + $0x3f4] sm:$0xf]
        %v512 = vld [vmem:[%s175 + $0x3f8] sm:$0xf]
        %v513 = vld [vmem:[%s175 + $0x3fc] sm:$0xf]
        %v514 = vld [vmem:[%s175 + $0x400] sm:$0xf]
        %v515 = vld [vmem:[%s175 + $0x404] sm:$0xf]
        %v516 = vld [vmem:[%s175 + $0x408] sm:$0xf]
        %v517 = vld [vmem:[%s175 + $0x40c] sm:$0xf]
        %v518 = vld [vmem:[%s175 + $0x410] sm:$0xf]
        %v519 = vld [vmem:[%s175 + $0x414] sm:$0xf]
        %v520 = vld [vmem:[%s175 + $0x418] sm:$0xf]
        %v521 = vld [vmem:[%s175 + $0x41c] sm:$0xf]
        %v522 = vld [vmem:[%s175 + $0x420] sm:$0xf]
        %v523 = vld [vmem:[%s175 + $0x424] sm:$0xf]
        %v524 = vld [vmem:[%s175 + $0x428] sm:$0xf]
        %v525 = vld [vmem:[%s175 + $0x42c] sm:$0xf]
        %v526 = vld [vmem:[%s175 + $0x430] sm:$0xf]
        %v527 = vld [vmem:[%s175 + $0x434] sm:$0xf]
        %v528 = vld [vmem:[%s175 + $0x438] sm:$0xf]
        %v529 = vld [vmem:[%s175 + $0x43c] sm:$0xf]
        %v530 = vld [vmem:[%s175 + $0x440] sm:$0xf]
        %v531 = vld [vmem:[%s175 + $0x444] sm:$0xf]
        %v532 = vld [vmem:[%s175 + $0x448] sm:$0xf]
        %v533 = vld [vmem:[%s175 + $0x44c] sm:$0xf]
        %v534 = vld [vmem:[%s175 + $0x450] sm:$0xf]
        %v535 = vld [vmem:[%s175 + $0x454] sm:$0xf]
        %v536 = vld [vmem:[%s175 + $0x458] sm:$0xf]
        %v537 = vld [vmem:[%s175 + $0x45c] sm:$0xf]
        %v538 = vld [vmem:[%s175 + $0x460] sm:$0xf]
        %v539 = vld [vmem:[%s175 + $0x464] sm:$0xf]
        %v540 = vld [vmem:[%s175 + $0x468] sm:$0xf]
        %v541 = vld [vmem:[%s175 + $0x46c] sm:$0xf]
        %v542 = vld [vmem:[%s175 + $0x470] sm:$0xf]
        %v543 = vld [vmem:[%s175 + $0x474] sm:$0xf]
        %v544 = vld [vmem:[%s175 + $0x478] sm:$0xf]
        %v545 = vld [vmem:[%s175 + $0x47c] sm:$0xf]
        %v546 = vld [vmem:[%s175 + $0x480] sm:$0xf]
        %v547 = vld [vmem:[%s175 + $0x484] sm:$0xf]
        %v548 = vld [vmem:[%s175 + $0x488] sm:$0xf]
        %v549 = vld [vmem:[%s175 + $0x48c] sm:$0xf]
        %v550 = vld [vmem:[%s175 + $0x490] sm:$0xf]
        %v551 = vld [vmem:[%s175 + $0x494] sm:$0xf]
        %v552 = vld [vmem:[%s175 + $0x498] sm:$0xf]
        %v553 = vld [vmem:[%s175 + $0x49c] sm:$0xf]
        %v554 = vld [vmem:[%s175 + $0x4a0] sm:$0xf]
        %v555 = vld [vmem:[%s175 + $0x4a4] sm:$0xf]
        %v556 = vld [vmem:[%s175 + $0x4a8] sm:$0xf]
        %v557 = vld [vmem:[%s175 + $0x4ac] sm:$0xf]
        %v558 = vld [vmem:[%s175 + $0x4b0] sm:$0xf]
        %v559 = vld [vmem:[%s175 + $0x4b4] sm:$0xf]
        %v560 = vld [vmem:[%s175 + $0x4b8] sm:$0xf]
        %v561 = vld [vmem:[%s175 + $0x4bc] sm:$0xf]
        %v562 = vld [vmem:[%s175 + $0x4c0] sm:$0xf]
        %v563 = vld [vmem:[%s175 + $0x4c4] sm:$0xf]
        %v564 = vld [vmem:[%s175 + $0x4c8] sm:$0xf]
        %v565 = vld [vmem:[%s175 + $0x4cc] sm:$0xf]
        %v566 = vld [vmem:[%s175 + $0x4d0] sm:$0xf]
        %v567 = vld [vmem:[%s175 + $0x4d4] sm:$0xf]
        %v568 = vld [vmem:[%s175 + $0x4d8] sm:$0xf]
        %v569 = vld [vmem:[%s175 + $0x4dc] sm:$0xf]
        %v570 = vld [vmem:[%s175 + $0x4e0] sm:$0xf]
        %v571 = vld [vmem:[%s175 + $0x4e4] sm:$0xf]
        %v572 = vld [vmem:[%s175 + $0x4e8] sm:$0xf]
        %v573 = vld [vmem:[%s175 + $0x4ec] sm:$0xf]
        %v574 = vld [vmem:[%s175 + $0x4f0] sm:$0xf]
        %v575 = vld [vmem:[%s175 + $0x4f4] sm:$0xf]
        %v576 = vld [vmem:[%s175 + $0x4f8] sm:$0xf]
        %v577 = vld [vmem:[%s175 + $0x4fc] sm:$0xf]
        %v578 = vld [vmem:[%s175 + $0x500] sm:$0xf]
        %v579 = vld [vmem:[%s175 + $0x504] sm:$0xf]
        %v580 = vld [vmem:[%s175 + $0x508] sm:$0xf]
        %v581 = vld [vmem:[%s175 + $0x50c] sm:$0xf]
        %v582 = vld [vmem:[%s175 + $0x510] sm:$0xf]
        %v583 = vld [vmem:[%s175 + $0x514] sm:$0xf]
        %v584 = vld [vmem:[%s175 + $0x518] sm:$0xf]
        %v585 = vld [vmem:[%s175 + $0x51c] sm:$0xf]
        %v586 = vld [vmem:[%s175 + $0x520] sm:$0xf]
        %v587 = vld [vmem:[%s175 + $0x524] sm:$0xf]
        %v588 = vld [vmem:[%s175 + $0x528] sm:$0xf]
        %v589 = vld [vmem:[%s175 + $0x52c] sm:$0xf]
        %v590 = vld [vmem:[%s175 + $0x530] sm:$0xf]
        %v591 = vld [vmem:[%s175 + $0x534] sm:$0xf]
        %v592 = vld [vmem:[%s175 + $0x538] sm:$0xf]
        %v593 = vld [vmem:[%s175 + $0x53c] sm:$0xf]
        %v594 = vld [vmem:[%s175 + $0x540] sm:$0xf]
        %v595 = vld [vmem:[%s175 + $0x544] sm:$0xf]
        %v596 = vld [vmem:[%s175 + $0x548] sm:$0xf]
        %v597 = vld [vmem:[%s175 + $0x54c] sm:$0xf]
        %v598 = vld [vmem:[%s175 + $0x550] sm:$0xf]
        %v599 = vld [vmem:[%s175 + $0x554] sm:$0xf]
        %v600 = vld [vmem:[%s175 + $0x558] sm:$0xf]
        %v601 = vld [vmem:[%s175 + $0x55c] sm:$0xf]
        %v602 = vld [vmem:[%s175 + $0x560] sm:$0xf]
        %v603 = vld [vmem:[%s175 + $0x564] sm:$0xf]
        %v604 = vld [vmem:[%s175 + $0x568] sm:$0xf]
        %v605 = vld [vmem:[%s175 + $0x56c] sm:$0xf]
        %v606 = vld [vmem:[%s175 + $0x570] sm:$0xf]
        %v607 = vld [vmem:[%s175 + $0x574] sm:$0xf]
        %v608 = vld [vmem:[%s175 + $0x578] sm:$0xf]
        %v609 = vld [vmem:[%s175 + $0x57c] sm:$0xf]
        %v610 = vld [vmem:[%s175 + $0x580] sm:$0xf]
        %v611 = vld [vmem:[%s175 + $0x584] sm:$0xf]
        %v612 = vld [vmem:[%s175 + $0x588] sm:$0xf]
        %v613 = vld [vmem:[%s175 + $0x58c] sm:$0xf]
        %v614 = vld [vmem:[%s175 + $0x590] sm:$0xf]
        %v615 = vld [vmem:[%s175 + $0x594] sm:$0xf]
        %v616 = vld [vmem:[%s175 + $0x598] sm:$0xf]
        %v617 = vld [vmem:[%s175 + $0x59c] sm:$0xf]
        %v618 = vld [vmem:[%s175 + $0x5a0] sm:$0xf]
        %v619 = vld [vmem:[%s175 + $0x5a4] sm:$0xf]
        %v620 = vld [vmem:[%s175 + $0x5a8] sm:$0xf]
        %v621 = vld [vmem:[%s175 + $0x5ac] sm:$0xf]
        %v622 = vld [vmem:[%s175 + $0x5b0] sm:$0xf]
        %v623 = vld [vmem:[%s175 + $0x5b4] sm:$0xf]
        %v624 = vld [vmem:[%s175 + $0x5b8] sm:$0xf]
        %v625 = vld [vmem:[%s175 + $0x5bc] sm:$0xf]
        %v626 = vld [vmem:[%s175 + $0x5c0] sm:$0xf]
        %v627 = vld [vmem:[%s175 + $0x5c4] sm:$0xf]
        %v628 = vld [vmem:[%s175 + $0x5c8] sm:$0xf]
        %v629 = vld [vmem:[%s175 + $0x5cc] sm:$0xf]
        %v630 = vld [vmem:[%s175 + $0x5d0] sm:$0xf]
        %v631 = vld [vmem:[%s175 + $0x5d4] sm:$0xf]
        %v632 = vld [vmem:[%s175 + $0x5d8] sm:$0xf]
        %v633 = vld [vmem:[%s175 + $0x5dc] sm:$0xf]
        %v634 = vld [vmem:[%s175 + $0x5e0] sm:$0xf]
        %v635 = vld [vmem:[%s175 + $0x5e4] sm:$0xf]
        %v636 = vld [vmem:[%s175 + $0x5e8] sm:$0xf]
        %v637 = vld [vmem:[%s175 + $0x5ec] sm:$0xf]
        %v638 = vld [vmem:[%s175 + $0x5f0] sm:$0xf]
        %v639 = vld [vmem:[%s175 + $0x5f4] sm:$0xf]
        %v640 = vld [vmem:[%s175 + $0x5f8] sm:$0xf]
        %v641 = vld [vmem:[%s175 + $0x5fc] sm:$0xf]
        %v642 = vld [vmem:[%s175 + $0x600] sm:$0xf]
        %v643 = vld [vmem:[%s175 + $0x604] sm:$0xf]
        %v644 = vld [vmem:[%s175 + $0x608] sm:$0xf]
        %v645 = vld [vmem:[%s175 + $0x60c] sm:$0xf]
        %v646 = vld [vmem:[%s175 + $0x610] sm:$0xf]
        %v647 = vld [vmem:[%s175 + $0x614] sm:$0xf]
        %v648 = vld [vmem:[%s175 + $0x618] sm:$0xf]
        %v649 = vld [vmem:[%s175 + $0x61c] sm:$0xf]
        %v650 = vld [vmem:[%s175 + $0x620] sm:$0xf]
        %v651 = vld [vmem:[%s175 + $0x624] sm:$0xf]
        %v652 = vld [vmem:[%s175 + $0x628] sm:$0xf]
        %v653 = vld [vmem:[%s175 + $0x62c] sm:$0xf]
        %v654 = vld [vmem:[%s175 + $0x630] sm:$0xf]
        %v655 = vld [vmem:[%s175 + $0x634] sm:$0xf]
        %v656 = vld [vmem:[%s175 + $0x638] sm:$0xf]
        %v657 = vld [vmem:[%s175 + $0x63c] sm:$0xf]
        %v658 = vld [vmem:[%s175 + $0x640] sm:$0xf]
        %v659 = vld [vmem:[%s175 + $0x644] sm:$0xf]
        %v660 = vld [vmem:[%s175 + $0x648] sm:$0xf]
        %v661 = vld [vmem:[%s175 + $0x64c] sm:$0xf]
        %v662 = vld [vmem:[%s175 + $0x650] sm:$0xf]
        %v663 = vld [vmem:[%s175 + $0x654] sm:$0xf]
        %v664 = vld [vmem:[%s175 + $0x658] sm:$0xf]
        %v665 = vld [vmem:[%s175 + $0x65c] sm:$0xf]
        %v666 = vld [vmem:[%s175 + $0x660] sm:$0xf]
        %v667 = vld [vmem:[%s175 + $0x664] sm:$0xf]
        %v668 = vld [vmem:[%s175 + $0x668] sm:$0xf]
        %v669 = vld [vmem:[%s175 + $0x66c] sm:$0xf]
        %v670 = vld [vmem:[%s175 + $0x670] sm:$0xf]
        %v671 = vld [vmem:[%s175 + $0x674] sm:$0xf]
        %v672 = vld [vmem:[%s175 + $0x678] sm:$0xf]
        %v673 = vld [vmem:[%s175 + $0x67c] sm:$0xf]
        %v674 = vld [vmem:[%s175 + $0x680] sm:$0xf]
        %v675 = vld [vmem:[%s175 + $0x684] sm:$0xf]
        %v676 = vld [vmem:[%s175 + $0x688] sm:$0xf]
        %v677 = vld [vmem:[%s175 + $0x68c] sm:$0xf]
        %v678 = vld [vmem:[%s175 + $0x690] sm:$0xf]
        %v679 = vld [vmem:[%s175 + $0x694] sm:$0xf]
        %v680 = vld [vmem:[%s175 + $0x698] sm:$0xf]
        %v681 = vld [vmem:[%s175 + $0x69c] sm:$0xf]
        %v682 = vld [vmem:[%s175 + $0x6a0] sm:$0xf]
        %v683 = vld [vmem:[%s175 + $0x6a4] sm:$0xf]
        %v684 = vld [vmem:[%s175 + $0x6a8] sm:$0xf]
        %v685 = vld [vmem:[%s175 + $0x6ac] sm:$0xf]
        %v686 = vld [vmem:[%s175 + $0x6b0] sm:$0xf]
        %v687 = vld [vmem:[%s175 + $0x6b4] sm:$0xf]
        %v688 = vld [vmem:[%s175 + $0x6b8] sm:$0xf]
        %v689 = vld [vmem:[%s175 + $0x6bc] sm:$0xf]
        %v690 = vld [vmem:[%s175 + $0x6c0] sm:$0xf]
        %v691 = vld [vmem:[%s175 + $0x6c4] sm:$0xf]
        %v692 = vld [vmem:[%s175 + $0x6c8] sm:$0xf]
        %v693 = vld [vmem:[%s175 + $0x6cc] sm:$0xf]
        %v694 = vld [vmem:[%s175 + $0x6d0] sm:$0xf]
        %v695 = vld [vmem:[%s175 + $0x6d4] sm:$0xf]
        %v696 = vld [vmem:[%s175 + $0x6d8] sm:$0xf]
        %v697 = vld [vmem:[%s175 + $0x6dc] sm:$0xf]
        %v698 = vld [vmem:[%s175 + $0x6e0] sm:$0xf]
        %v699 = vld [vmem:[%s175 + $0x6e4] sm:$0xf]
        %v700 = vld [vmem:[%s175 + $0x6e8] sm:$0xf]
        %v701 = vld [vmem:[%s175 + $0x6ec] sm:$0xf]
        %v702 = vld [vmem:[%s175 + $0x6f0] sm:$0xf]
        %v703 = vld [vmem:[%s175 + $0x6f4] sm:$0xf]
        %v704 = vld [vmem:[%s175 + $0x6f8] sm:$0xf]
        %v705 = vld [vmem:[%s175 + $0x6fc] sm:$0xf]
        %v706 = vld [vmem:[%s175 + $0x700] sm:$0xf]
        %v707 = vld [vmem:[%s175 + $0x704] sm:$0xf]
        %v708 = vld [vmem:[%s175 + $0x708] sm:$0xf]
        %v709 = vld [vmem:[%s175 + $0x70c] sm:$0xf]
        %v710 = vld [vmem:[%s175 + $0x710] sm:$0xf]
        %v711 = vld [vmem:[%s175 + $0x714] sm:$0xf]
        %v712 = vld [vmem:[%s175 + $0x718] sm:$0xf]
        %v713 = vld [vmem:[%s175 + $0x71c] sm:$0xf]
        %v714 = vld [vmem:[%s175 + $0x720] sm:$0xf]
        %v715 = vld [vmem:[%s175 + $0x724] sm:$0xf]
        %v716 = vld [vmem:[%s175 + $0x728] sm:$0xf]
        %v717 = vld [vmem:[%s175 + $0x72c] sm:$0xf]
        %v718 = vld [vmem:[%s175 + $0x730] sm:$0xf]
        %v719 = vld [vmem:[%s175 + $0x734] sm:$0xf]
        %v720 = vld [vmem:[%s175 + $0x738] sm:$0xf]
        %v721 = vld [vmem:[%s175 + $0x73c] sm:$0xf]
        %v722 = vld [vmem:[%s175 + $0x740] sm:$0xf]
        %v723 = vld [vmem:[%s175 + $0x744] sm:$0xf]
        %v724 = vld [vmem:[%s175 + $0x748] sm:$0xf]
        %v725 = vld [vmem:[%s175 + $0x74c] sm:$0xf]
        %v726 = vld [vmem:[%s175 + $0x750] sm:$0xf]
        %v727 = vld [vmem:[%s175 + $0x754] sm:$0xf]
        %v728 = vld [vmem:[%s175 + $0x758] sm:$0xf]
        %v729 = vld [vmem:[%s175 + $0x75c] sm:$0xf]
        %v730 = vld [vmem:[%s175 + $0x760] sm:$0xf]
        %v731 = vld [vmem:[%s175 + $0x764] sm:$0xf]
        %v732 = vld [vmem:[%s175 + $0x768] sm:$0xf]
        %v733 = vld [vmem:[%s175 + $0x76c] sm:$0xf]
        %v734 = vld [vmem:[%s175 + $0x770] sm:$0xf]
        %v735 = vld [vmem:[%s175 + $0x774] sm:$0xf]
        %v736 = vld [vmem:[%s175 + $0x778] sm:$0xf]
        %v737 = vld [vmem:[%s175 + $0x77c] sm:$0xf]
        %v738 = vld [vmem:[%s175 + $0x780] sm:$0xf]
        %v739 = vld [vmem:[%s175 + $0x784] sm:$0xf]
        %v740 = vld [vmem:[%s175 + $0x788] sm:$0xf]
        %v741 = vld [vmem:[%s175 + $0x78c] sm:$0xf]
        %v742 = vld [vmem:[%s175 + $0x790] sm:$0xf]
        %v743 = vld [vmem:[%s175 + $0x794] sm:$0xf]
        %v744 = vld [vmem:[%s175 + $0x798] sm:$0xf]
        %v745 = vld [vmem:[%s175 + $0x79c] sm:$0xf]
        %v746 = vld [vmem:[%s175 + $0x7a0] sm:$0xf]
        %v747 = vld [vmem:[%s175 + $0x7a4] sm:$0xf]
        %v748 = vld [vmem:[%s175 + $0x7a8] sm:$0xf]
        %v749 = vld [vmem:[%s175 + $0x7ac] sm:$0xf]
        %v750 = vld [vmem:[%s175 + $0x7b0] sm:$0xf]
        %v751 = vld [vmem:[%s175 + $0x7b4] sm:$0xf]
        %v752 = vld [vmem:[%s175 + $0x7b8] sm:$0xf]
        %v753 = vld [vmem:[%s175 + $0x7bc] sm:$0xf]
        %v754 = vld [vmem:[%s175 + $0x7c0] sm:$0xf]
        %v755 = vld [vmem:[%s175 + $0x7c4] sm:$0xf]
        %v756 = vld [vmem:[%s175 + $0x7c8] sm:$0xf]
        %v757 = vld [vmem:[%s175 + $0x7cc] sm:$0xf]
        %v758 = vld [vmem:[%s175 + $0x7d0] sm:$0xf]
        %v759 = vld [vmem:[%s175 + $0x7d4] sm:$0xf]
        %v760 = vld [vmem:[%s175 + $0x7d8] sm:$0xf]
        %v761 = vld [vmem:[%s175 + $0x7dc] sm:$0xf]
        %v762 = vld [vmem:[%s175 + $0x7e0] sm:$0xf]
        %v763 = vld [vmem:[%s175 + $0x7e4] sm:$0xf]
        %v764 = vld [vmem:[%s175 + $0x7e8] sm:$0xf]
        %v765 = vld [vmem:[%s175 + $0x7ec] sm:$0xf]
        %v766 = vld [vmem:[%s175 + $0x7f0] sm:$0xf]
        %v767 = vld [vmem:[%s175 + $0x7f4] sm:$0xf]
        %v768 = vld [vmem:[%s175 + $0x7f8] sm:$0xf]
        %v769 = vld [vmem:[%s175 + $0x7fc] sm:$0xf]
        %v770 = vld [vmem:[%s175 + $0x800] sm:$0xf]
        %v771 = vld [vmem:[%s175 + $0x804] sm:$0xf]
        %v772 = vld [vmem:[%s175 + $0x808] sm:$0xf]
        %v773 = vld [vmem:[%s175 + $0x80c] sm:$0xf]
        %v774 = vld [vmem:[%s175 + $0x810] sm:$0xf]
        %v775 = vld [vmem:[%s175 + $0x814] sm:$0xf]
        %v776 = vld [vmem:[%s175 + $0x818] sm:$0xf]
        %v777 = vld [vmem:[%s175 + $0x81c] sm:$0xf]
        %v778 = vld [vmem:[%s175 + $0x820] sm:$0xf]
        %v779 = vld [vmem:[%s175 + $0x824] sm:$0xf]
        %v780 = vld [vmem:[%s175 + $0x828] sm:$0xf]
        %v781 = vld [vmem:[%s175 + $0x82c] sm:$0xf]
        %v782 = vld [vmem:[%s175 + $0x830] sm:$0xf]
        %v783 = vld [vmem:[%s175 + $0x834] sm:$0xf]
        %v784 = vld [vmem:[%s175 + $0x838] sm:$0xf]
        %v785 = vld [vmem:[%s175 + $0x83c] sm:$0xf]
        %v786 = vld [vmem:[%s175 + $0x840] sm:$0xf]
        %v787 = vld [vmem:[%s175 + $0x844] sm:$0xf]
        %v788 = vld [vmem:[%s175 + $0x848] sm:$0xf]
        %v789 = vld [vmem:[%s175 + $0x84c] sm:$0xf]
        %v790 = vld [vmem:[%s175 + $0x850] sm:$0xf]
        %v791 = vld [vmem:[%s175 + $0x854] sm:$0xf]
        %v792 = vld [vmem:[%s175 + $0x858] sm:$0xf]
        %v793 = vld [vmem:[%s175 + $0x85c] sm:$0xf]
        %v794 = vld [vmem:[%s175 + $0x860] sm:$0xf]
        %v795 = vld [vmem:[%s175 + $0x864] sm:$0xf]
        %v796 = vld [vmem:[%s175 + $0x868] sm:$0xf]
        %v797 = vld [vmem:[%s175 + $0x86c] sm:$0xf]
        %v798 = vld [vmem:[%s175 + $0x870] sm:$0xf]
        %v799 = vld [vmem:[%s175 + $0x874] sm:$0xf]
        %v800 = vld [vmem:[%s175 + $0x878] sm:$0xf]
        %v801 = vld [vmem:[%s175 + $0x87c] sm:$0xf]
        %v802 = vld [vmem:[%s175 + $0x880] sm:$0xf]
        %v803 = vld [vmem:[%s175 + $0x884] sm:$0xf]
        %v804 = vld [vmem:[%s175 + $0x888] sm:$0xf]
        %v805 = vld [vmem:[%s175 + $0x88c] sm:$0xf]
        %v806 = vld [vmem:[%s175 + $0x890] sm:$0xf]
        %v807 = vld [vmem:[%s175 + $0x894] sm:$0xf]
        %v808 = vld [vmem:[%s175 + $0x898] sm:$0xf]
        %v809 = vld [vmem:[%s175 + $0x89c] sm:$0xf]
        %v810 = vld [vmem:[%s175 + $0x8a0] sm:$0xf]
        %v811 = vld [vmem:[%s175 + $0x8a4] sm:$0xf]
        %v812 = vld [vmem:[%s175 + $0x8a8] sm:$0xf]
        %v813 = vld [vmem:[%s175 + $0x8ac] sm:$0xf]
        %v814 = vld [vmem:[%s175 + $0x8b0] sm:$0xf]
        %v815 = vld [vmem:[%s175 + $0x8b4] sm:$0xf]
        %v816 = vld [vmem:[%s175 + $0x8b8] sm:$0xf]
        %v817 = vld [vmem:[%s175 + $0x8bc] sm:$0xf]
        %v818 = vld [vmem:[%s175 + $0x8c0] sm:$0xf]
        %v819 = vld [vmem:[%s175 + $0x8c4] sm:$0xf]
        %v820 = vld [vmem:[%s175 + $0x8c8] sm:$0xf]
        %v821 = vld [vmem:[%s175 + $0x8cc] sm:$0xf]
        %v822 = vld [vmem:[%s175 + $0x8d0] sm:$0xf]
        %v823 = vld [vmem:[%s175 + $0x8d4] sm:$0xf]
        %v824 = vld [vmem:[%s175 + $0x8d8] sm:$0xf]
        %v825 = vld [vmem:[%s175 + $0x8dc] sm:$0xf]
        %v826 = vld [vmem:[%s175 + $0x8e0] sm:$0xf]
        %v827 = vld [vmem:[%s175 + $0x8e4] sm:$0xf]
        %v828 = vld [vmem:[%s175 + $0x8e8] sm:$0xf]
        %v829 = vld [vmem:[%s175 + $0x8ec] sm:$0xf]
        %v830 = vld [vmem:[%s175 + $0x8f0] sm:$0xf]
        %v831 = vld [vmem:[%s175 + $0x8f4] sm:$0xf]
        %v832 = vld [vmem:[%s175 + $0x8f8] sm:$0xf]
        %v833 = vld [vmem:[%s175 + $0x8fc] sm:$0xf]
        %v834 = vld [vmem:[%s175 + $0x900] sm:$0xf]
        %v835 = vld [vmem:[%s175 + $0x904] sm:$0xf]
        %v836 = vld [vmem:[%s175 + $0x908] sm:$0xf]
        %v837 = vld [vmem:[%s175 + $0x90c] sm:$0xf]
        %v838 = vld [vmem:[%s175 + $0x910] sm:$0xf]
        %v839 = vld [vmem:[%s175 + $0x914] sm:$0xf]
        %v840 = vld [vmem:[%s175 + $0x918] sm:$0xf]
        %v841 = vld [vmem:[%s175 + $0x91c] sm:$0xf]
        %v842 = vld [vmem:[%s175 + $0x920] sm:$0xf]
        %v843 = vld [vmem:[%s175 + $0x924] sm:$0xf]
        %v844 = vld [vmem:[%s175 + $0x928] sm:$0xf]
        %v845 = vld [vmem:[%s175 + $0x92c] sm:$0xf]
        %v846 = vld [vmem:[%s175 + $0x930] sm:$0xf]
        %v847 = vld [vmem:[%s175 + $0x934] sm:$0xf]
        %v848 = vld [vmem:[%s175 + $0x938] sm:$0xf]
        %v849 = vld [vmem:[%s175 + $0x93c] sm:$0xf]
        %v850 = vld [vmem:[%s175 + $0x940] sm:$0xf]
        %v851 = vld [vmem:[%s175 + $0x944] sm:$0xf]
        %v852 = vld [vmem:[%s175 + $0x948] sm:$0xf]
        %v853 = vld [vmem:[%s175 + $0x94c] sm:$0xf]
        %v854 = vld [vmem:[%s175 + $0x950] sm:$0xf]
        %v855 = vld [vmem:[%s175 + $0x954] sm:$0xf]
        %v856 = vld [vmem:[%s175 + $0x958] sm:$0xf]
        %v857 = vld [vmem:[%s175 + $0x95c] sm:$0xf]
        %v858 = vld [vmem:[%s175 + $0x960] sm:$0xf]
        %v859 = vld [vmem:[%s175 + $0x964] sm:$0xf]
        %v860 = vld [vmem:[%s175 + $0x968] sm:$0xf]
        %v861 = vld [vmem:[%s175 + $0x96c] sm:$0xf]
        %v862 = vld [vmem:[%s175 + $0x970] sm:$0xf]
        %v863 = vld [vmem:[%s175 + $0x974] sm:$0xf]
        %v864 = vld [vmem:[%s175 + $0x978] sm:$0xf]
        %v865 = vld [vmem:[%s175 + $0x97c] sm:$0xf]
        %v866 = vld [vmem:[%s175 + $0x980] sm:$0xf]
        %v867 = vld [vmem:[%s175 + $0x984] sm:$0xf]
        %v868 = vld [vmem:[%s175 + $0x988] sm:$0xf]
        %v869 = vld [vmem:[%s175 + $0x98c] sm:$0xf]
        %v870 = vld [vmem:[%s175 + $0x990] sm:$0xf]
        %v871 = vld [vmem:[%s175 + $0x994] sm:$0xf]
        %v872 = vld [vmem:[%s175 + $0x998] sm:$0xf]
        %v873 = vld [vmem:[%s175 + $0x99c] sm:$0xf]
        %v874 = vld [vmem:[%s175 + $0x9a0] sm:$0xf]
        %v875 = vld [vmem:[%s175 + $0x9a4] sm:$0xf]
        %v876 = vld [vmem:[%s175 + $0x9a8] sm:$0xf]
        %v877 = vld [vmem:[%s175 + $0x9ac] sm:$0xf]
        %v878 = vld [vmem:[%s175 + $0x9b0] sm:$0xf]
        %v879 = vld [vmem:[%s175 + $0x9b4] sm:$0xf]
        %v880 = vld [vmem:[%s175 + $0x9b8] sm:$0xf]
        %v881 = vld [vmem:[%s175 + $0x9bc] sm:$0xf]
        %v882 = vld [vmem:[%s175 + $0x9c0] sm:$0xf]
        %v883 = vld [vmem:[%s175 + $0x9c4] sm:$0xf]
        %v884 = vld [vmem:[%s175 + $0x9c8] sm:$0xf]
        %v885 = vld [vmem:[%s175 + $0x9cc] sm:$0xf]
        %v886 = vld [vmem:[%s175 + $0x9d0] sm:$0xf]
        %v887 = vld [vmem:[%s175 + $0x9d4] sm:$0xf]
        %v888 = vld [vmem:[%s175 + $0x9d8] sm:$0xf]
        %v889 = vld [vmem:[%s175 + $0x9dc] sm:$0xf]
        %v890 = vld [vmem:[%s175 + $0x9e0] sm:$0xf]
        %v891 = vld [vmem:[%s175 + $0x9e4] sm:$0xf]
        %v892 = vld [vmem:[%s175 + $0x9e8] sm:$0xf]
        %v893 = vld [vmem:[%s175 + $0x9ec] sm:$0xf]
        %v894 = vld [vmem:[%s175 + $0x9f0] sm:$0xf]
        %v895 = vld [vmem:[%s175 + $0x9f4] sm:$0xf]
        %v896 = vld [vmem:[%s175 + $0x9f8] sm:$0xf]
        %v897 = vld [vmem:[%s175 + $0x9fc] sm:$0xf]
        %v898 = vld [vmem:[%s175 + $0xa00] sm:$0xf]
        %v899 = vld [vmem:[%s175 + $0xa04] sm:$0xf]
        %v900 = vld [vmem:[%s175 + $0xa08] sm:$0xf]
        %v901 = vld [vmem:[%s175 + $0xa0c] sm:$0xf]
        %v902 = vld [vmem:[%s175 + $0xa10] sm:$0xf]
        %v903 = vld [vmem:[%s175 + $0xa14] sm:$0xf]
        %v904 = vld [vmem:[%s175 + $0xa18] sm:$0xf]
        %v905 = vld [vmem:[%s175 + $0xa1c] sm:$0xf]
        %v906 = vld [vmem:[%s175 + $0xa20] sm:$0xf]
        %v907 = vld [vmem:[%s175 + $0xa24] sm:$0xf]
        %v908 = vld [vmem:[%s175 + $0xa28] sm:$0xf]
        %v909 = vld [vmem:[%s175 + $0xa2c] sm:$0xf]
        %v910 = vld [vmem:[%s175 + $0xa30] sm:$0xf]
        %v911 = vld [vmem:[%s175 + $0xa34] sm:$0xf]
        %v912 = vld [vmem:[%s175 + $0xa38] sm:$0xf]
        %v913 = vld [vmem:[%s175 + $0xa3c] sm:$0xf]
        %v914 = vld [vmem:[%s175 + $0xa40] sm:$0xf]
        %v915 = vld [vmem:[%s175 + $0xa44] sm:$0xf]
        %v916 = vld [vmem:[%s175 + $0xa48] sm:$0xf]
        %v917 = vld [vmem:[%s175 + $0xa4c] sm:$0xf]
        %v918 = vld [vmem:[%s175 + $0xa50] sm:$0xf]
        %v919 = vld [vmem:[%s175 + $0xa54] sm:$0xf]
        %v920 = vld [vmem:[%s175 + $0xa58] sm:$0xf]
        %v921 = vld [vmem:[%s175 + $0xa5c] sm:$0xf]
        %v922 = vld [vmem:[%s175 + $0xa60] sm:$0xf]
        %v923 = vld [vmem:[%s175 + $0xa64] sm:$0xf]
        %v924 = vld [vmem:[%s175 + $0xa68] sm:$0xf]
        %v925 = vld [vmem:[%s175 + $0xa6c] sm:$0xf]
        %v926 = vld [vmem:[%s175 + $0xa70] sm:$0xf]
        %v927 = vld [vmem:[%s175 + $0xa74] sm:$0xf]
        %v928 = vld [vmem:[%s175 + $0xa78] sm:$0xf]
        %v929 = vld [vmem:[%s175 + $0xa7c] sm:$0xf]
        %v930 = vld [vmem:[%s175 + $0xa80] sm:$0xf]
        %v931 = vld [vmem:[%s175 + $0xa84] sm:$0xf]
        %v932 = vld [vmem:[%s175 + $0xa88] sm:$0xf]
        %v933 = vld [vmem:[%s175 + $0xa8c] sm:$0xf]
        %v934 = vld [vmem:[%s175 + $0xa90] sm:$0xf]
        %v935 = vld [vmem:[%s175 + $0xa94] sm:$0xf]
        %v936 = vld [vmem:[%s175 + $0xa98] sm:$0xf]
        %v937 = vld [vmem:[%s175 + $0xa9c] sm:$0xf]
        %v938 = vld [vmem:[%s175 + $0xaa0] sm:$0xf]
        %v939 = vld [vmem:[%s175 + $0xaa4] sm:$0xf]
        %v940 = vld [vmem:[%s175 + $0xaa8] sm:$0xf]
        %v941 = vld [vmem:[%s175 + $0xaac] sm:$0xf]
        %v942 = vld [vmem:[%s175 + $0xab0] sm:$0xf]
        %v943 = vld [vmem:[%s175 + $0xab4] sm:$0xf]
        %v944 = vld [vmem:[%s175 + $0xab8] sm:$0xf]
        %v945 = vld [vmem:[%s175 + $0xabc] sm:$0xf]
        %v946 = vld [vmem:[%s175 + $0xac0] sm:$0xf]
        %v947 = vld [vmem:[%s175 + $0xac4] sm:$0xf]
        %v948 = vld [vmem:[%s175 + $0xac8] sm:$0xf]
        %v949 = vld [vmem:[%s175 + $0xacc] sm:$0xf]
        %v950 = vld [vmem:[%s175 + $0xad0] sm:$0xf]
        %v951 = vld [vmem:[%s175 + $0xad4] sm:$0xf]
        %v952 = vld [vmem:[%s175 + $0xad8] sm:$0xf]
        %v953 = vld [vmem:[%s175 + $0xadc] sm:$0xf]
        %v954 = vld [vmem:[%s175 + $0xae0] sm:$0xf]
        %v955 = vld [vmem:[%s175 + $0xae4] sm:$0xf]
        %v956 = vld [vmem:[%s175 + $0xae8] sm:$0xf]
        %v957 = vld [vmem:[%s175 + $0xaec] sm:$0xf]
        %v958 = vld [vmem:[%s175 + $0xaf0] sm:$0xf]
        %v959 = vld [vmem:[%s175 + $0xaf4] sm:$0xf]
        %v960 = vld [vmem:[%s175 + $0xaf8] sm:$0xf]
        %v961 = vld [vmem:[%s175 + $0xafc] sm:$0xf]
        %v962 = vld [vmem:[%s175 + $0xb00] sm:$0xf]
        %v963 = vld [vmem:[%s175 + $0xb04] sm:$0xf]
        %v964 = vld [vmem:[%s175 + $0xb08] sm:$0xf]
        %v965 = vld [vmem:[%s175 + $0xb0c] sm:$0xf]
        %v966 = vld [vmem:[%s175 + $0xb10] sm:$0xf]
        %v967 = vld [vmem:[%s175 + $0xb14] sm:$0xf]
        %v968 = vld [vmem:[%s175 + $0xb18] sm:$0xf]
        %v969 = vld [vmem:[%s175 + $0xb1c] sm:$0xf]
        %v970 = vld [vmem:[%s175 + $0xb20] sm:$0xf]
        %v971 = vld [vmem:[%s175 + $0xb24] sm:$0xf]
        %v972 = vld [vmem:[%s175 + $0xb28] sm:$0xf]
        %v973 = vld [vmem:[%s175 + $0xb2c] sm:$0xf]
        %v974 = vld [vmem:[%s175 + $0xb30] sm:$0xf]
        %v975 = vld [vmem:[%s175 + $0xb34] sm:$0xf]
        %v976 = vld [vmem:[%s175 + $0xb38] sm:$0xf]
        %v977 = vld [vmem:[%s175 + $0xb3c] sm:$0xf]
        %v978 = vld [vmem:[%s175 + $0xb40] sm:$0xf]
        %v979 = vld [vmem:[%s175 + $0xb44] sm:$0xf]
        %v980 = vld [vmem:[%s175 + $0xb48] sm:$0xf]
        %v981 = vld [vmem:[%s175 + $0xb4c] sm:$0xf]
        %v982 = vld [vmem:[%s175 + $0xb50] sm:$0xf]
        %v983 = vld [vmem:[%s175 + $0xb54] sm:$0xf]
        %v984 = vld [vmem:[%s175 + $0xb58] sm:$0xf]
        %v985 = vld [vmem:[%s175 + $0xb5c] sm:$0xf]
        %v986 = vld [vmem:[%s175 + $0xb60] sm:$0xf]
        %v987 = vld [vmem:[%s175 + $0xb64] sm:$0xf]
        %v988 = vld [vmem:[%s175 + $0xb68] sm:$0xf]
        %v989 = vld [vmem:[%s175 + $0xb6c] sm:$0xf]
        %v990 = vld [vmem:[%s175 + $0xb70] sm:$0xf]
        %v991 = vld [vmem:[%s175 + $0xb74] sm:$0xf]
        %v992 = vld [vmem:[%s175 + $0xb78] sm:$0xf]
        %v993 = vld [vmem:[%s175 + $0xb7c] sm:$0xf]
        %v994 = vld [vmem:[%s175 + $0xb80] sm:$0xf]
        %v995 = vld [vmem:[%s175 + $0xb84] sm:$0xf]
        %v996 = vld [vmem:[%s175 + $0xb88] sm:$0xf]
        %v997 = vld [vmem:[%s175 + $0xb8c] sm:$0xf]
        %v998 = vld [vmem:[%s175 + $0xb90] sm:$0xf]
        %v999 = vld [vmem:[%s175 + $0xb94] sm:$0xf]
        %v1000 = vld [vmem:[%s175 + $0xb98] sm:$0xf]
        %v1001 = vld [vmem:[%s175 + $0xb9c] sm:$0xf]
        %v1002 = vld [vmem:[%s175 + $0xba0] sm:$0xf]
        %v1003 = vld [vmem:[%s175 + $0xba4] sm:$0xf]
        %v1004 = vld [vmem:[%s175 + $0xba8] sm:$0xf]
        %v1005 = vld [vmem:[%s175 + $0xbac] sm:$0xf]
        %v1006 = vld [vmem:[%s175 + $0xbb0] sm:$0xf]
        %v1007 = vld [vmem:[%s175 + $0xbb4] sm:$0xf]
        %v1008 = vld [vmem:[%s175 + $0xbb8] sm:$0xf]
        %v1009 = vld [vmem:[%s175 + $0xbbc] sm:$0xf]
        %v1010 = vld [vmem:[%s175 + $0xbc0] sm:$0xf]
        %v1011 = vld [vmem:[%s175 + $0xbc4] sm:$0xf]
        %v1012 = vld [vmem:[%s175 + $0xbc8] sm:$0xf]
        %v1013 = vld [vmem:[%s175 + $0xbcc] sm:$0xf]
        %v1014 = vld [vmem:[%s175 + $0xbd0] sm:$0xf]
        %v1015 = vld [vmem:[%s175 + $0xbd4] sm:$0xf]
        %v1016 = vld [vmem:[%s175 + $0xbd8] sm:$0xf]
        %v1017 = vld [vmem:[%s175 + $0xbdc] sm:$0xf]
        %v1018 = vld [vmem:[%s175 + $0xbe0] sm:$0xf]
        %v1019 = vld [vmem:[%s175 + $0xbe4] sm:$0xf]
        %v1020 = vld [vmem:[%s175 + $0xbe8] sm:$0xf]
        %v1021 = vld [vmem:[%s175 + $0xbec] sm:$0xf]
        %v1022 = vld [vmem:[%s175 + $0xbf0] sm:$0xf]
        %v1023 = vld [vmem:[%s175 + $0xbf4] sm:$0xf]
        %v1024 = vld [vmem:[%s175 + $0xbf8] sm:$0xf]
        %v1025 = vld [vmem:[%s175 + $0xbfc] sm:$0xf]
        %v1026 = vld [vmem:[%s175 + $0xc00] sm:$0xf]
        %v1027 = vld [vmem:[%s175 + $0xc04] sm:$0xf]
        %v1028 = vld [vmem:[%s175 + $0xc08] sm:$0xf]
        %v1029 = vld [vmem:[%s175 + $0xc0c] sm:$0xf]
        %v1030 = vld [vmem:[%s175 + $0xc10] sm:$0xf]
        %v1031 = vld [vmem:[%s175 + $0xc14] sm:$0xf]
        %v1032 = vld [vmem:[%s175 + $0xc18] sm:$0xf]
        %v1033 = vld [vmem:[%s175 + $0xc1c] sm:$0xf]
        %v1034 = vld [vmem:[%s175 + $0xc20] sm:$0xf]
        %v1035 = vld [vmem:[%s175 + $0xc24] sm:$0xf]
        %v1036 = vld [vmem:[%s175 + $0xc28] sm:$0xf]
        %v1037 = vld [vmem:[%s175 + $0xc2c] sm:$0xf]
        %v1038 = vld [vmem:[%s175 + $0xc30] sm:$0xf]
        %v1039 = vld [vmem:[%s175 + $0xc34] sm:$0xf]
        %v1040 = vld [vmem:[%s175 + $0xc38] sm:$0xf]
        %v1041 = vld [vmem:[%s175 + $0xc3c] sm:$0xf]
        %v1042 = vld [vmem:[%s175 + $0xc40] sm:$0xf]
        %v1043 = vld [vmem:[%s175 + $0xc44] sm:$0xf]
        %v1044 = vld [vmem:[%s175 + $0xc48] sm:$0xf]
        %v1045 = vld [vmem:[%s175 + $0xc4c] sm:$0xf]
        %v1046 = vld [vmem:[%s175 + $0xc50] sm:$0xf]
        %v1047 = vld [vmem:[%s175 + $0xc54] sm:$0xf]
        %v1048 = vld [vmem:[%s175 + $0xc58] sm:$0xf]
        %v1049 = vld [vmem:[%s175 + $0xc5c] sm:$0xf]
        %v1050 = vld [vmem:[%s175 + $0xc60] sm:$0xf]
        %v1051 = vld [vmem:[%s175 + $0xc64] sm:$0xf]
        %v1052 = vld [vmem:[%s175 + $0xc68] sm:$0xf]
        %v1053 = vld [vmem:[%s175 + $0xc6c] sm:$0xf]
        %v1054 = vld [vmem:[%s175 + $0xc70] sm:$0xf]
        %v1055 = vld [vmem:[%s175 + $0xc74] sm:$0xf]
        %v1056 = vld [vmem:[%s175 + $0xc78] sm:$0xf]
        %v1057 = vld [vmem:[%s175 + $0xc7c] sm:$0xf]
        %v1058 = vld [vmem:[%s175 + $0xc80] sm:$0xf]
        %v1059 = vld [vmem:[%s175 + $0xc84] sm:$0xf]
        %v1060 = vld [vmem:[%s175 + $0xc88] sm:$0xf]
        %v1061 = vld [vmem:[%s175 + $0xc8c] sm:$0xf]
        %v1062 = vld [vmem:[%s175 + $0xc90] sm:$0xf]
        %v1063 = vld [vmem:[%s175 + $0xc94] sm:$0xf]
        %v1064 = vld [vmem:[%s175 + $0xc98] sm:$0xf]
        %v1065 = vld [vmem:[%s175 + $0xc9c] sm:$0xf]
        %v1066 = vld [vmem:[%s175 + $0xca0] sm:$0xf]
        %v1067 = vld [vmem:[%s175 + $0xca4] sm:$0xf]
        %v1068 = vld [vmem:[%s175 + $0xca8] sm:$0xf]
        %v1069 = vld [vmem:[%s175 + $0xcac] sm:$0xf]
        %v1070 = vld [vmem:[%s175 + $0xcb0] sm:$0xf]
        %v1071 = vld [vmem:[%s175 + $0xcb4] sm:$0xf]
        %v1072 = vld [vmem:[%s175 + $0xcb8] sm:$0xf]
        %v1073 = vld [vmem:[%s175 + $0xcbc] sm:$0xf]
        %v1074 = vld [vmem:[%s175 + $0xcc0] sm:$0xf]
        %v1075 = vld [vmem:[%s175 + $0xcc4] sm:$0xf]
        %v1076 = vld [vmem:[%s175 + $0xcc8] sm:$0xf]
        %v1077 = vld [vmem:[%s175 + $0xccc] sm:$0xf]
        %v1078 = vld [vmem:[%s175 + $0xcd0] sm:$0xf]
        %v1079 = vld [vmem:[%s175 + $0xcd4] sm:$0xf]
        %v1080 = vld [vmem:[%s175 + $0xcd8] sm:$0xf]
        %v1081 = vld [vmem:[%s175 + $0xcdc] sm:$0xf]
        %v1082 = vld [vmem:[%s175 + $0xce0] sm:$0xf]
        %v1083 = vld [vmem:[%s175 + $0xce4] sm:$0xf]
        %v1084 = vld [vmem:[%s175 + $0xce8] sm:$0xf]
        %v1085 = vld [vmem:[%s175 + $0xcec] sm:$0xf]
        %v1086 = vld [vmem:[%s175 + $0xcf0] sm:$0xf]
        %v1087 = vld [vmem:[%s175 + $0xcf4] sm:$0xf]
        %v1088 = vld [vmem:[%s175 + $0xcf8] sm:$0xf]
        %v1089 = vld [vmem:[%s175 + $0xcfc] sm:$0xf]
        %v1090 = vld [vmem:[%s175 + $0xd00] sm:$0xf]
        %v1091 = vld [vmem:[%s175 + $0xd04] sm:$0xf]
        %v1092 = vld [vmem:[%s175 + $0xd08] sm:$0xf]
        %v1093 = vld [vmem:[%s175 + $0xd0c] sm:$0xf]
        %v1094 = vld [vmem:[%s175 + $0xd10] sm:$0xf]
        %v1095 = vld [vmem:[%s175 + $0xd14] sm:$0xf]
        %v1096 = vld [vmem:[%s175 + $0xd18] sm:$0xf]
        %v1097 = vld [vmem:[%s175 + $0xd1c] sm:$0xf]
        %v1098 = vld [vmem:[%s175 + $0xd20] sm:$0xf]
        %v1099 = vld [vmem:[%s175 + $0xd24] sm:$0xf]
        %v1100 = vld [vmem:[%s175 + $0xd28] sm:$0xf]
        %v1101 = vld [vmem:[%s175 + $0xd2c] sm:$0xf]
        %v1102 = vld [vmem:[%s175 + $0xd30] sm:$0xf]
        %v1103 = vld [vmem:[%s175 + $0xd34] sm:$0xf]
        %v1104 = vld [vmem:[%s175 + $0xd38] sm:$0xf]
        %v1105 = vld [vmem:[%s175 + $0xd3c] sm:$0xf]
        %v1106 = vld [vmem:[%s175 + $0xd40] sm:$0xf]
        %v1107 = vld [vmem:[%s175 + $0xd44] sm:$0xf]
        %v1108 = vld [vmem:[%s175 + $0xd48] sm:$0xf]
        %v1109 = vld [vmem:[%s175 + $0xd4c] sm:$0xf]
        %v1110 = vld [vmem:[%s175 + $0xd50] sm:$0xf]
        %v1111 = vld [vmem:[%s175 + $0xd54] sm:$0xf]
        %v1112 = vld [vmem:[%s175 + $0xd58] sm:$0xf]
        %v1113 = vld [vmem:[%s175 + $0xd5c] sm:$0xf]
        %v1114 = vld [vmem:[%s175 + $0xd60] sm:$0xf]
        %v1115 = vld [vmem:[%s175 + $0xd64] sm:$0xf]
        %v1116 = vld [vmem:[%s175 + $0xd68] sm:$0xf]
        %v1117 = vld [vmem:[%s175 + $0xd6c] sm:$0xf]
        %v1118 = vld [vmem:[%s175 + $0xd70] sm:$0xf]
        %v1119 = vld [vmem:[%s175 + $0xd74] sm:$0xf]
        %v1120 = vld [vmem:[%s175 + $0xd78] sm:$0xf]
        %v1121 = vld [vmem:[%s175 + $0xd7c] sm:$0xf]
        %v1122 = vld [vmem:[%s175 + $0xd80] sm:$0xf]
        %v1123 = vld [vmem:[%s175 + $0xd84] sm:$0xf]
        %v1124 = vld [vmem:[%s175 + $0xd88] sm:$0xf]
        %v1125 = vld [vmem:[%s175 + $0xd8c] sm:$0xf]
        %v1126 = vld [vmem:[%s175 + $0xd90] sm:$0xf]
        %v1127 = vld [vmem:[%s175 + $0xd94] sm:$0xf]
        %v1128 = vld [vmem:[%s175 + $0xd98] sm:$0xf]
        %v1129 = vld [vmem:[%s175 + $0xd9c] sm:$0xf]
        %v1130 = vld [vmem:[%s175 + $0xda0] sm:$0xf]
        %v1131 = vld [vmem:[%s175 + $0xda4] sm:$0xf]
        %v1132 = vld [vmem:[%s175 + $0xda8] sm:$0xf]
        %v1133 = vld [vmem:[%s175 + $0xdac] sm:$0xf]
        %v1134 = vld [vmem:[%s175 + $0xdb0] sm:$0xf]
        %v1135 = vld [vmem:[%s175 + $0xdb4] sm:$0xf]
        %v1136 = vld [vmem:[%s175 + $0xdb8] sm:$0xf]
        %v1137 = vld [vmem:[%s175 + $0xdbc] sm:$0xf]
        %v1138 = vld [vmem:[%s175 + $0xdc0] sm:$0xf]
        %v1139 = vld [vmem:[%s175 + $0xdc4] sm:$0xf]
        %v1140 = vld [vmem:[%s175 + $0xdc8] sm:$0xf]
        %v1141 = vld [vmem:[%s175 + $0xdcc] sm:$0xf]
        %v1142 = vld [vmem:[%s175 + $0xdd0] sm:$0xf]
        %v1143 = vld [vmem:[%s175 + $0xdd4] sm:$0xf]
        %v1144 = vld [vmem:[%s175 + $0xdd8] sm:$0xf]
        %v1145 = vld [vmem:[%s175 + $0xddc] sm:$0xf]
        %v1146 = vld [vmem:[%s175 + $0xde0] sm:$0xf]
        %v1147 = vld [vmem:[%s175 + $0xde4] sm:$0xf]
        %v1148 = vld [vmem:[%s175 + $0xde8] sm:$0xf]
        %v1149 = vld [vmem:[%s175 + $0xdec] sm:$0xf]
        %v1150 = vld [vmem:[%s175 + $0xdf0] sm:$0xf]
        %v1151 = vld [vmem:[%s175 + $0xdf4] sm:$0xf]
        %v1152 = vld [vmem:[%s175 + $0xdf8] sm:$0xf]
        %v1153 = vld [vmem:[%s175 + $0xdfc] sm:$0xf]
        %v1154 = vld [vmem:[%s175 + $0xe00] sm:$0xf]
        %v1155 = vld [vmem:[%s175 + $0xe04] sm:$0xf]
        %v1156 = vld [vmem:[%s175 + $0xe08] sm:$0xf]
        %v1157 = vld [vmem:[%s175 + $0xe0c] sm:$0xf]
        %v1158 = vld [vmem:[%s175 + $0xe10] sm:$0xf]
        %v1159 = vld [vmem:[%s175 + $0xe14] sm:$0xf]
        %v1160 = vld [vmem:[%s175 + $0xe18] sm:$0xf]
        %v1161 = vld [vmem:[%s175 + $0xe1c] sm:$0xf]
        %v1162 = vld [vmem:[%s175 + $0xe20] sm:$0xf]
        %v1163 = vld [vmem:[%s175 + $0xe24] sm:$0xf]
        %v1164 = vld [vmem:[%s175 + $0xe28] sm:$0xf]
        %v1165 = vld [vmem:[%s175 + $0xe2c] sm:$0xf]
        %v1166 = vld [vmem:[%s175 + $0xe30] sm:$0xf]
        %v1167 = vld [vmem:[%s175 + $0xe34] sm:$0xf]
        %v1168 = vld [vmem:[%s175 + $0xe38] sm:$0xf]
        %v1169 = vld [vmem:[%s175 + $0xe3c] sm:$0xf]
        %v1170 = vld [vmem:[%s175 + $0xe40] sm:$0xf]
        %v1171 = vld [vmem:[%s175 + $0xe44] sm:$0xf]
        %v1172 = vld [vmem:[%s175 + $0xe48] sm:$0xf]
        %v1173 = vld [vmem:[%s175 + $0xe4c] sm:$0xf]
        %v1174 = vld [vmem:[%s175 + $0xe50] sm:$0xf]
        %v1175 = vld [vmem:[%s175 + $0xe54] sm:$0xf]
        %v1176 = vld [vmem:[%s175 + $0xe58] sm:$0xf]
        %v1177 = vld [vmem:[%s175 + $0xe5c] sm:$0xf]
        %v1178 = vld [vmem:[%s175 + $0xe60] sm:$0xf]
        %v1179 = vld [vmem:[%s175 + $0xe64] sm:$0xf]
        %v1180 = vld [vmem:[%s175 + $0xe68] sm:$0xf]
        %v1181 = vld [vmem:[%s175 + $0xe6c] sm:$0xf]
        %v1182 = vld [vmem:[%s175 + $0xe70] sm:$0xf]
        %v1183 = vld [vmem:[%s175 + $0xe74] sm:$0xf]
        %v1184 = vld [vmem:[%s175 + $0xe78] sm:$0xf]
        %v1185 = vld [vmem:[%s175 + $0xe7c] sm:$0xf]
        %v1186 = vld [vmem:[%s175 + $0xe80] sm:$0xf]
        %v1187 = vld [vmem:[%s175 + $0xe84] sm:$0xf]
        %v1188 = vld [vmem:[%s175 + $0xe88] sm:$0xf]
        %v1189 = vld [vmem:[%s175 + $0xe8c] sm:$0xf]
        %v1190 = vld [vmem:[%s175 + $0xe90] sm:$0xf]
        %v1191 = vld [vmem:[%s175 + $0xe94] sm:$0xf]
        %v1192 = vld [vmem:[%s175 + $0xe98] sm:$0xf]
        %v1193 = vld [vmem:[%s175 + $0xe9c] sm:$0xf]
        %v1194 = vld [vmem:[%s175 + $0xea0] sm:$0xf]
        %v1195 = vld [vmem:[%s175 + $0xea4] sm:$0xf]
        %v1196 = vld [vmem:[%s175 + $0xea8] sm:$0xf]
        %v1197 = vld [vmem:[%s175 + $0xeac] sm:$0xf]
        %v1198 = vld [vmem:[%s175 + $0xeb0] sm:$0xf]
        %v1199 = vld [vmem:[%s175 + $0xeb4] sm:$0xf]
        %v1200 = vld [vmem:[%s175 + $0xeb8] sm:$0xf]
        %v1201 = vld [vmem:[%s175 + $0xebc] sm:$0xf]
        %v1202 = vld [vmem:[%s175 + $0xec0] sm:$0xf]
        %v1203 = vld [vmem:[%s175 + $0xec4] sm:$0xf]
        %v1204 = vld [vmem:[%s175 + $0xec8] sm:$0xf]
        %v1205 = vld [vmem:[%s175 + $0xecc] sm:$0xf]
        %v1206 = vld [vmem:[%s175 + $0xed0] sm:$0xf]
        %v1207 = vld [vmem:[%s175 + $0xed4] sm:$0xf]
        %v1208 = vld [vmem:[%s175 + $0xed8] sm:$0xf]
        %v1209 = vld [vmem:[%s175 + $0xedc] sm:$0xf]
        %v1210 = vld [vmem:[%s175 + $0xee0] sm:$0xf]
        %v1211 = vld [vmem:[%s175 + $0xee4] sm:$0xf]
        %v1212 = vld [vmem:[%s175 + $0xee8] sm:$0xf]
        %v1213 = vld [vmem:[%s175 + $0xeec] sm:$0xf]
        %v1214 = vld [vmem:[%s175 + $0xef0] sm:$0xf]
        %v1215 = vld [vmem:[%s175 + $0xef4] sm:$0xf]
        %v1216 = vld [vmem:[%s175 + $0xef8] sm:$0xf]
        %v1217 = vld [vmem:[%s175 + $0xefc] sm:$0xf]
        %v1218 = vld [vmem:[%s175 + $0xf00] sm:$0xf]
        %v1219 = vld [vmem:[%s175 + $0xf04] sm:$0xf]
        %v1220 = vld [vmem:[%s175 + $0xf08] sm:$0xf]
        %v1221 = vld [vmem:[%s175 + $0xf0c] sm:$0xf]
        %v1222 = vld [vmem:[%s175 + $0xf10] sm:$0xf]
        %v1223 = vld [vmem:[%s175 + $0xf14] sm:$0xf]
        %v1224 = vld [vmem:[%s175 + $0xf18] sm:$0xf]
        %v1225 = vld [vmem:[%s175 + $0xf1c] sm:$0xf]
        %v1226 = vld [vmem:[%s175 + $0xf20] sm:$0xf]
        %v1227 = vld [vmem:[%s175 + $0xf24] sm:$0xf]
        %v1228 = vld [vmem:[%s175 + $0xf28] sm:$0xf]
        %v1229 = vld [vmem:[%s175 + $0xf2c] sm:$0xf]
        %v1230 = vld [vmem:[%s175 + $0xf30] sm:$0xf]
        %v1231 = vld [vmem:[%s175 + $0xf34] sm:$0xf]
        %v1232 = vld [vmem:[%s175 + $0xf38] sm:$0xf]
        %v1233 = vld [vmem:[%s175 + $0xf3c] sm:$0xf]
        %v1234 = vld [vmem:[%s175 + $0xf40] sm:$0xf]
        %v1235 = vld [vmem:[%s175 + $0xf44] sm:$0xf]
        %v1236 = vld [vmem:[%s175 + $0xf48] sm:$0xf]
        %v1237 = vld [vmem:[%s175 + $0xf4c] sm:$0xf]
        %v1238 = vld [vmem:[%s175 + $0xf50] sm:$0xf]
        %v1239 = vld [vmem:[%s175 + $0xf54] sm:$0xf]
        %v1240 = vld [vmem:[%s175 + $0xf58] sm:$0xf]
        %v1241 = vld [vmem:[%s175 + $0xf5c] sm:$0xf]
        %v1242 = vld [vmem:[%s175 + $0xf60] sm:$0xf]
        %v1243 = vld [vmem:[%s175 + $0xf64] sm:$0xf]
        %v1244 = vld [vmem:[%s175 + $0xf68] sm:$0xf]
        %v1245 = vld [vmem:[%s175 + $0xf6c] sm:$0xf]
        %v1246 = vld [vmem:[%s175 + $0xf70] sm:$0xf]
        %v1247 = vld [vmem:[%s175 + $0xf74] sm:$0xf]
        %v1248 = vld [vmem:[%s175 + $0xf78] sm:$0xf]
        %v1249 = vld [vmem:[%s175 + $0xf7c] sm:$0xf]
        %v1250 = vld [vmem:[%s175 + $0xf80] sm:$0xf]
        %v1251 = vld [vmem:[%s175 + $0xf84] sm:$0xf]
        %v1252 = vld [vmem:[%s175 + $0xf88] sm:$0xf]
        %v1253 = vld [vmem:[%s175 + $0xf8c] sm:$0xf]
        %v1254 = vld [vmem:[%s175 + $0xf90] sm:$0xf]
        %v1255 = vld [vmem:[%s175 + $0xf94] sm:$0xf]
        %v1256 = vld [vmem:[%s175 + $0xf98] sm:$0xf]
        %v1257 = vld [vmem:[%s175 + $0xf9c] sm:$0xf]
        %v1258 = vld [vmem:[%s175 + $0xfa0] sm:$0xf]
        %v1259 = vld [vmem:[%s175 + $0xfa4] sm:$0xf]
        %v1260 = vld [vmem:[%s175 + $0xfa8] sm:$0xf]
        %v1261 = vld [vmem:[%s175 + $0xfac] sm:$0xf]
        %v1262 = vld [vmem:[%s175 + $0xfb0] sm:$0xf]
        %v1263 = vld [vmem:[%s175 + $0xfb4] sm:$0xf]
        %v1264 = vld [vmem:[%s175 + $0xfb8] sm:$0xf]
        %v1265 = vld [vmem:[%s175 + $0xfbc] sm:$0xf]
        %v1266 = vld [vmem:[%s175 + $0xfc0] sm:$0xf]
        %v1267 = vld [vmem:[%s175 + $0xfc4] sm:$0xf]
        %v1268 = vld [vmem:[%s175 + $0xfc8] sm:$0xf]
        %v1269 = vld [vmem:[%s175 + $0xfcc] sm:$0xf]
        %v1270 = vld [vmem:[%s175 + $0xfd0] sm:$0xf]
        %v1271 = vld [vmem:[%s175 + $0xfd4] sm:$0xf]
        %v1272 = vld [vmem:[%s175 + $0xfd8] sm:$0xf]
        %v1273 = vld [vmem:[%s175 + $0xfdc] sm:$0xf]
        %v1274 = vld [vmem:[%s175 + $0xfe0] sm:$0xf]
        %v1275 = vld [vmem:[%s175 + $0xfe4] sm:$0xf]
        %v1276 = vld [vmem:[%s175 + $0xfe8] sm:$0xf]
        %v1277 = vld [vmem:[%s175 + $0xfec] sm:$0xf]
        %v1278 = vld [vmem:[%s175 + $0xff0] sm:$0xf]
        %v1279 = vld [vmem:[%s175 + $0xff4] sm:$0xf]
        %v1280 = vld [vmem:[%s175 + $0xff8] sm:$0xf]
        %v1281 = vld [vmem:[%s175 + $0xffc] sm:$0xf]
        %v1314 = vunpack.c.l.b16 %v226
        %v1315 = vunpack.c.h.b16 %v226
        %v1316 = vunpack.c.l.b16 %v227
        %v1317 = vunpack.c.h.b16 %v227
        %v1318 = vunpack.c.l.b16 %v228
        %v1319 = vunpack.c.h.b16 %v228
        %v1320 = vunpack.c.l.b16 %v229
        %v1321 = vunpack.c.h.b16 %v229
        %v1322 = vunpack.c.l.b16 %v230
        %v1323 = vunpack.c.h.b16 %v230
        %v1324 = vunpack.c.l.b16 %v231
        %v1325 = vunpack.c.h.b16 %v231
        %v1326 = vunpack.c.l.b16 %v232
        %v1327 = vunpack.c.h.b16 %v232
        %v1328 = vunpack.c.l.b16 %v233
        %v1329 = vunpack.c.h.b16 %v233
        %v1330 = vunpack.c.l.b16 %v234
        %v1331 = vunpack.c.h.b16 %v234
        %v1332 = vunpack.c.l.b16 %v235
        %v1333 = vunpack.c.h.b16 %v235
        %v1334 = vunpack.c.l.b16 %v236
        %v1335 = vunpack.c.h.b16 %v236
        %v1336 = vunpack.c.l.b16 %v237
        %v1337 = vunpack.c.h.b16 %v237
        %v1338 = vunpack.c.l.b16 %v238
        %v1339 = vunpack.c.h.b16 %v238
        %v1340 = vunpack.c.l.b16 %v239
        %v1341 = vunpack.c.h.b16 %v239
        %v1342 = vunpack.c.l.b16 %v240
        %v1343 = vunpack.c.h.b16 %v240
        %v1344 = vunpack.c.l.b16 %v241
        %v1345 = vunpack.c.h.b16 %v241
        %v1346 = vunpack.c.l.b16 %v242
        %v1347 = vunpack.c.h.b16 %v242
        %v1348 = vunpack.c.l.b16 %v243
        %v1349 = vunpack.c.h.b16 %v243
        %v1350 = vunpack.c.l.b16 %v244
        %v1351 = vunpack.c.h.b16 %v244
        %v1352 = vunpack.c.l.b16 %v245
        %v1353 = vunpack.c.h.b16 %v245
        %v1354 = vunpack.c.l.b16 %v246
        %v1355 = vunpack.c.h.b16 %v246
        %v1356 = vunpack.c.l.b16 %v247
        %v1357 = vunpack.c.h.b16 %v247
        %v1358 = vunpack.c.l.b16 %v248
        %v1359 = vunpack.c.h.b16 %v248
        %v1360 = vunpack.c.l.b16 %v249
        %v1361 = vunpack.c.h.b16 %v249
        %v1362 = vunpack.c.l.b16 %v250
        %v1363 = vunpack.c.h.b16 %v250
        %v1364 = vunpack.c.l.b16 %v251
        %v1365 = vunpack.c.h.b16 %v251
        %v1366 = vunpack.c.l.b16 %v252
        %v1367 = vunpack.c.h.b16 %v252
        %v1368 = vunpack.c.l.b16 %v253
        %v1369 = vunpack.c.h.b16 %v253
        %v1370 = vunpack.c.l.b16 %v254
        %v1371 = vunpack.c.h.b16 %v254
        %v1372 = vunpack.c.l.b16 %v255
        %v1373 = vunpack.c.h.b16 %v255
        %v1374 = vunpack.c.l.b16 %v256
        %v1375 = vunpack.c.h.b16 %v256
        %v1376 = vunpack.c.l.b16 %v257
        %v1377 = vunpack.c.h.b16 %v257
        %v1378 = vpack.c.b16 %v1314, %v1314
        %v1379 = vpack.c.b16 %v1315, %v1315
        %v1380 = vpack.c.b16 %v1316, %v1316
        %v1381 = vpack.c.b16 %v1317, %v1317
        %v1382 = vpack.c.b16 %v1318, %v1318
        %v1383 = vpack.c.b16 %v1319, %v1319
        %v1384 = vpack.c.b16 %v1320, %v1320
        %v1385 = vpack.c.b16 %v1321, %v1321
        %v1386 = vpack.c.b16 %v1322, %v1322
        %v1387 = vpack.c.b16 %v1323, %v1323
        %v1388 = vpack.c.b16 %v1324, %v1324
        %v1389 = vpack.c.b16 %v1325, %v1325
        %v1390 = vpack.c.b16 %v1326, %v1326
        %v1391 = vpack.c.b16 %v1327, %v1327
        %v1392 = vpack.c.b16 %v1328, %v1328
        %v1393 = vpack.c.b16 %v1329, %v1329
        %v1394 = vpack.c.b16 %v1330, %v1330
        %v1395 = vpack.c.b16 %v1331, %v1331
        %v1396 = vpack.c.b16 %v1332, %v1332
        %v1397 = vpack.c.b16 %v1333, %v1333
        %v1398 = vpack.c.b16 %v1334, %v1334
        %v1399 = vpack.c.b16 %v1335, %v1335
        %v1400 = vpack.c.b16 %v1336, %v1336
        %v1401 = vpack.c.b16 %v1337, %v1337
        %v1402 = vpack.c.b16 %v1338, %v1338
        %v1403 = vpack.c.b16 %v1339, %v1339
        %v1404 = vpack.c.b16 %v1340, %v1340
        %v1405 = vpack.c.b16 %v1341, %v1341
        %v1406 = vpack.c.b16 %v1342, %v1342
        %v1407 = vpack.c.b16 %v1343, %v1343
        %v1408 = vpack.c.b16 %v1344, %v1344
        %v1409 = vpack.c.b16 %v1345, %v1345
        %v1410 = vpack.c.b16 %v1346, %v1346
        %v1411 = vpack.c.b16 %v1347, %v1347
        %v1412 = vpack.c.b16 %v1348, %v1348
        %v1413 = vpack.c.b16 %v1349, %v1349
        %v1414 = vpack.c.b16 %v1350, %v1350
        %v1415 = vpack.c.b16 %v1351, %v1351
        %v1416 = vpack.c.b16 %v1352, %v1352
        %v1417 = vpack.c.b16 %v1353, %v1353
        %v1418 = vpack.c.b16 %v1354, %v1354
        %v1419 = vpack.c.b16 %v1355, %v1355
        %v1420 = vpack.c.b16 %v1356, %v1356
        %v1421 = vpack.c.b16 %v1357, %v1357
        %v1422 = vpack.c.b16 %v1358, %v1358
        %v1423 = vpack.c.b16 %v1359, %v1359
        %v1424 = vpack.c.b16 %v1360, %v1360
        %v1425 = vpack.c.b16 %v1361, %v1361
        %v1426 = vpack.c.b16 %v1362, %v1362
        %v1427 = vpack.c.b16 %v1363, %v1363
        %v1428 = vpack.c.b16 %v1364, %v1364
        %v1429 = vpack.c.b16 %v1365, %v1365
        %v1430 = vpack.c.b16 %v1366, %v1366
        %v1431 = vpack.c.b16 %v1367, %v1367
        %v1432 = vpack.c.b16 %v1368, %v1368
        %v1433 = vpack.c.b16 %v1369, %v1369
        %v1434 = vpack.c.b16 %v1370, %v1370
        %v1435 = vpack.c.b16 %v1371, %v1371
        %v1436 = vpack.c.b16 %v1372, %v1372
        %v1437 = vpack.c.b16 %v1373, %v1373
        %v1438 = vpack.c.b16 %v1374, %v1374
        %v1439 = vpack.c.b16 %v1375, %v1375
        %v1440 = vpack.c.b16 %v1376, %v1376
        %v1441 = vpack.c.b16 %v1377, %v1377
        %v2530 = vunpack.c.l.b16 %v258
        %v2531 = vunpack.c.l.b16 %v259
        %v2532 = vunpack.c.l.b16 %v260
        %v2533 = vunpack.c.l.b16 %v261
        %v2534 = vunpack.c.l.b16 %v262
        %v2535 = vunpack.c.l.b16 %v263
        %v2536 = vunpack.c.l.b16 %v264
        %v2537 = vunpack.c.l.b16 %v265
        %v2538 = vunpack.c.l.b16 %v266
        %v2539 = vunpack.c.l.b16 %v267
        %v2540 = vunpack.c.l.b16 %v268
        %v2541 = vunpack.c.l.b16 %v269
        %v2542 = vunpack.c.l.b16 %v270
        %v2543 = vunpack.c.l.b16 %v271
        %v2544 = vunpack.c.l.b16 %v272
        %v2545 = vunpack.c.l.b16 %v273
        %v2546 = vunpack.c.l.b16 %v274
        %v2547 = vunpack.c.l.b16 %v275
        %v2548 = vunpack.c.l.b16 %v276
        %v2549 = vunpack.c.l.b16 %v277
        %v2550 = vunpack.c.l.b16 %v278
        %v2551 = vunpack.c.l.b16 %v279
        %v2552 = vunpack.c.l.b16 %v280
        %v2553 = vunpack.c.l.b16 %v281
        %v2554 = vunpack.c.l.b16 %v282
        %v2555 = vunpack.c.l.b16 %v283
        %v2556 = vunpack.c.l.b16 %v284
        %v2557 = vunpack.c.l.b16 %v285
        %v2558 = vunpack.c.l.b16 %v286
        %v2559 = vunpack.c.l.b16 %v287
        %v2560 = vunpack.c.l.b16 %v288
        %v2561 = vunpack.c.l.b16 %v289
        %v2562 = vunpack.c.l.b16 %v290
        %v2563 = vunpack.c.l.b16 %v291
        %v2564 = vunpack.c.l.b16 %v292
        %v2565 = vunpack.c.l.b16 %v293
        %v2566 = vunpack.c.l.b16 %v294
        %v2567 = vunpack.c.l.b16 %v295
        %v2568 = vunpack.c.l.b16 %v296
        %v2569 = vunpack.c.l.b16 %v297
        %v2570 = vunpack.c.l.b16 %v298
        %v2571 = vunpack.c.l.b16 %v299
        %v2572 = vunpack.c.l.b16 %v300
        %v2573 = vunpack.c.l.b16 %v301
        %v2574 = vunpack.c.l.b16 %v302
        %v2575 = vunpack.c.l.b16 %v303
        %v2576 = vunpack.c.l.b16 %v304
        %v2577 = vunpack.c.l.b16 %v305
        %v2578 = vunpack.c.l.b16 %v306
        %v2579 = vunpack.c.l.b16 %v307
        %v2580 = vunpack.c.l.b16 %v308
        %v2581 = vunpack.c.l.b16 %v309
        %v2582 = vunpack.c.l.b16 %v310
        %v2583 = vunpack.c.l.b16 %v311
        %v2584 = vunpack.c.l.b16 %v312
        %v2585 = vunpack.c.l.b16 %v313
        %v2586 = vunpack.c.l.b16 %v314
        %v2587 = vunpack.c.l.b16 %v315
        %v2588 = vunpack.c.l.b16 %v316
        %v2589 = vunpack.c.l.b16 %v317
        %v2590 = vunpack.c.l.b16 %v318
        %v2591 = vunpack.c.l.b16 %v319
        %v2592 = vunpack.c.l.b16 %v320
        %v2593 = vunpack.c.l.b16 %v321
        %v2594 = vunpack.c.l.b16 %v322
        %v2595 = vunpack.c.l.b16 %v323
        %v2596 = vunpack.c.l.b16 %v324
        %v2597 = vunpack.c.l.b16 %v325
        %v2598 = vunpack.c.l.b16 %v326
        %v2599 = vunpack.c.l.b16 %v327
        %v2600 = vunpack.c.l.b16 %v328
        %v2601 = vunpack.c.l.b16 %v329
        %v2602 = vunpack.c.l.b16 %v330
        %v2603 = vunpack.c.l.b16 %v331
        %v2604 = vunpack.c.l.b16 %v332
        %v2605 = vunpack.c.l.b16 %v333
        %v2606 = vunpack.c.l.b16 %v334
        %v2607 = vunpack.c.l.b16 %v335
        %v2608 = vunpack.c.l.b16 %v336
        %v2609 = vunpack.c.l.b16 %v337
        %v2610 = vunpack.c.l.b16 %v338
        %v2611 = vunpack.c.l.b16 %v339
        %v2612 = vunpack.c.l.b16 %v340
        %v2613 = vunpack.c.l.b16 %v341
        %v2614 = vunpack.c.l.b16 %v342
        %v2615 = vunpack.c.l.b16 %v343
        %v2616 = vunpack.c.l.b16 %v344
        %v2617 = vunpack.c.l.b16 %v345
        %v2618 = vunpack.c.l.b16 %v346
        %v2619 = vunpack.c.l.b16 %v347
        %v2620 = vunpack.c.l.b16 %v348
        %v2621 = vunpack.c.l.b16 %v349
        %v2622 = vunpack.c.l.b16 %v350
        %v2623 = vunpack.c.l.b16 %v351
        %v2624 = vunpack.c.l.b16 %v352
        %v2625 = vunpack.c.l.b16 %v353
        %v2626 = vunpack.c.l.b16 %v354
        %v2627 = vunpack.c.l.b16 %v355
        %v2628 = vunpack.c.l.b16 %v356
        %v2629 = vunpack.c.l.b16 %v357
        %v2630 = vunpack.c.l.b16 %v358
        %v2631 = vunpack.c.l.b16 %v359
        %v2632 = vunpack.c.l.b16 %v360
        %v2633 = vunpack.c.l.b16 %v361
        %v2634 = vunpack.c.l.b16 %v362
        %v2635 = vunpack.c.l.b16 %v363
        %v2636 = vunpack.c.l.b16 %v364
        %v2637 = vunpack.c.l.b16 %v365
        %v2638 = vunpack.c.l.b16 %v366
        %v2639 = vunpack.c.l.b16 %v367
        %v2640 = vunpack.c.l.b16 %v368
        %v2641 = vunpack.c.l.b16 %v369
        %v2642 = vunpack.c.l.b16 %v370
        %v2643 = vunpack.c.l.b16 %v371
        %v2644 = vunpack.c.l.b16 %v372
        %v2645 = vunpack.c.l.b16 %v373
        %v2646 = vunpack.c.l.b16 %v374
        %v2647 = vunpack.c.l.b16 %v375
        %v2648 = vunpack.c.l.b16 %v376
        %v2649 = vunpack.c.l.b16 %v377
        %v2650 = vunpack.c.l.b16 %v378
        %v2651 = vunpack.c.l.b16 %v379
        %v2652 = vunpack.c.l.b16 %v380
        %v2653 = vunpack.c.l.b16 %v381
        %v2654 = vunpack.c.l.b16 %v382
        %v2655 = vunpack.c.l.b16 %v383
        %v2656 = vunpack.c.l.b16 %v384
        %v2657 = vunpack.c.l.b16 %v385
        %v2658 = vunpack.c.l.b16 %v386
        %v2659 = vunpack.c.l.b16 %v387
        %v2660 = vunpack.c.l.b16 %v388
        %v2661 = vunpack.c.l.b16 %v389
        %v2662 = vunpack.c.l.b16 %v390
        %v2663 = vunpack.c.l.b16 %v391
        %v2664 = vunpack.c.l.b16 %v392
        %v2665 = vunpack.c.l.b16 %v393
        %v2666 = vunpack.c.l.b16 %v394
        %v2667 = vunpack.c.l.b16 %v395
        %v2668 = vunpack.c.l.b16 %v396
        %v2669 = vunpack.c.l.b16 %v397
        %v2670 = vunpack.c.l.b16 %v398
        %v2671 = vunpack.c.l.b16 %v399
        %v2672 = vunpack.c.l.b16 %v400
        %v2673 = vunpack.c.l.b16 %v401
        %v2674 = vunpack.c.l.b16 %v402
        %v2675 = vunpack.c.l.b16 %v403
        %v2676 = vunpack.c.l.b16 %v404
        %v2677 = vunpack.c.l.b16 %v405
        %v2678 = vunpack.c.l.b16 %v406
        %v2679 = vunpack.c.l.b16 %v407
        %v2680 = vunpack.c.l.b16 %v408
        %v2681 = vunpack.c.l.b16 %v409
        %v2682 = vunpack.c.l.b16 %v410
        %v2683 = vunpack.c.l.b16 %v411
        %v2684 = vunpack.c.l.b16 %v412
        %v2685 = vunpack.c.l.b16 %v413
        %v2686 = vunpack.c.l.b16 %v414
        %v2687 = vunpack.c.l.b16 %v415
        %v2688 = vunpack.c.l.b16 %v416
        %v2689 = vunpack.c.l.b16 %v417
        %v2690 = vunpack.c.l.b16 %v418
        %v2691 = vunpack.c.l.b16 %v419
        %v2692 = vunpack.c.l.b16 %v420
        %v2693 = vunpack.c.l.b16 %v421
        %v2694 = vunpack.c.l.b16 %v422
        %v2695 = vunpack.c.l.b16 %v423
        %v2696 = vunpack.c.l.b16 %v424
        %v2697 = vunpack.c.l.b16 %v425
        %v2698 = vunpack.c.l.b16 %v426
        %v2699 = vunpack.c.l.b16 %v427
        %v2700 = vunpack.c.l.b16 %v428
        %v2701 = vunpack.c.l.b16 %v429
        %v2702 = vunpack.c.l.b16 %v430
        %v2703 = vunpack.c.l.b16 %v431
        %v2704 = vunpack.c.l.b16 %v432
        %v2705 = vunpack.c.l.b16 %v433
        %v2706 = vunpack.c.l.b16 %v434
        %v2707 = vunpack.c.l.b16 %v435
        %v2708 = vunpack.c.l.b16 %v436
        %v2709 = vunpack.c.l.b16 %v437
        %v2710 = vunpack.c.l.b16 %v438
        %v2711 = vunpack.c.l.b16 %v439
        %v2712 = vunpack.c.l.b16 %v440
        %v2713 = vunpack.c.l.b16 %v441
        %v2714 = vunpack.c.l.b16 %v442
        %v2715 = vunpack.c.l.b16 %v443
        %v2716 = vunpack.c.l.b16 %v444
        %v2717 = vunpack.c.l.b16 %v445
        %v2718 = vunpack.c.l.b16 %v446
        %v2719 = vunpack.c.l.b16 %v447
        %v2720 = vunpack.c.l.b16 %v448
        %v2721 = vunpack.c.l.b16 %v449
        %v2722 = vunpack.c.l.b16 %v450
        %v2723 = vunpack.c.l.b16 %v451
        %v2724 = vunpack.c.l.b16 %v452
        %v2725 = vunpack.c.l.b16 %v453
        %v2726 = vunpack.c.l.b16 %v454
        %v2727 = vunpack.c.l.b16 %v455
        %v2728 = vunpack.c.l.b16 %v456
        %v2729 = vunpack.c.l.b16 %v457
        %v2730 = vunpack.c.l.b16 %v458
        %v2731 = vunpack.c.l.b16 %v459
        %v2732 = vunpack.c.l.b16 %v460
        %v2733 = vunpack.c.l.b16 %v461
        %v2734 = vunpack.c.l.b16 %v462
        %v2735 = vunpack.c.l.b16 %v463
        %v2736 = vunpack.c.l.b16 %v464
        %v2737 = vunpack.c.l.b16 %v465
        %v2738 = vunpack.c.l.b16 %v466
        %v2739 = vunpack.c.l.b16 %v467
        %v2740 = vunpack.c.l.b16 %v468
        %v2741 = vunpack.c.l.b16 %v469
        %v2742 = vunpack.c.l.b16 %v470
        %v2743 = vunpack.c.l.b16 %v471
        %v2744 = vunpack.c.l.b16 %v472
        %v2745 = vunpack.c.l.b16 %v473
        %v2746 = vunpack.c.l.b16 %v474
        %v2747 = vunpack.c.l.b16 %v475
        %v2748 = vunpack.c.l.b16 %v476
        %v2749 = vunpack.c.l.b16 %v477
        %v2750 = vunpack.c.l.b16 %v478
        %v2751 = vunpack.c.l.b16 %v479
        %v2752 = vunpack.c.l.b16 %v480
        %v2753 = vunpack.c.l.b16 %v481
        %v2754 = vunpack.c.l.b16 %v482
        %v2755 = vunpack.c.l.b16 %v483
        %v2756 = vunpack.c.l.b16 %v484
        %v2757 = vunpack.c.l.b16 %v485
        %v2758 = vunpack.c.l.b16 %v486
        %v2759 = vunpack.c.l.b16 %v487
        %v2760 = vunpack.c.l.b16 %v488
        %v2761 = vunpack.c.l.b16 %v489
        %v2762 = vunpack.c.l.b16 %v490
        %v2763 = vunpack.c.l.b16 %v491
        %v2764 = vunpack.c.l.b16 %v492
        %v2765 = vunpack.c.l.b16 %v493
        %v2766 = vunpack.c.l.b16 %v494
        %v2767 = vunpack.c.l.b16 %v495
        %v2768 = vunpack.c.l.b16 %v496
        %v2769 = vunpack.c.l.b16 %v497
        %v2770 = vunpack.c.l.b16 %v498
        %v2771 = vunpack.c.l.b16 %v499
        %v2772 = vunpack.c.l.b16 %v500
        %v2773 = vunpack.c.l.b16 %v501
        %v2774 = vunpack.c.l.b16 %v502
        %v2775 = vunpack.c.l.b16 %v503
        %v2776 = vunpack.c.l.b16 %v504
        %v2777 = vunpack.c.l.b16 %v505
        %v2778 = vunpack.c.l.b16 %v506
        %v2779 = vunpack.c.l.b16 %v507
        %v2780 = vunpack.c.l.b16 %v508
        %v2781 = vunpack.c.l.b16 %v509
        %v2782 = vunpack.c.l.b16 %v510
        %v2783 = vunpack.c.l.b16 %v511
        %v2784 = vunpack.c.l.b16 %v512
        %v2785 = vunpack.c.l.b16 %v513
        %v2786 = vunpack.c.l.b16 %v514
        %v2787 = vunpack.c.l.b16 %v515
        %v2788 = vunpack.c.l.b16 %v516
        %v2789 = vunpack.c.l.b16 %v517
        %v2790 = vunpack.c.l.b16 %v518
        %v2791 = vunpack.c.l.b16 %v519
        %v2792 = vunpack.c.l.b16 %v520
        %v2793 = vunpack.c.l.b16 %v521
        %v2794 = vunpack.c.l.b16 %v522
        %v2795 = vunpack.c.l.b16 %v523
        %v2796 = vunpack.c.l.b16 %v524
        %v2797 = vunpack.c.l.b16 %v525
        %v2798 = vunpack.c.l.b16 %v526
        %v2799 = vunpack.c.l.b16 %v527
        %v2800 = vunpack.c.l.b16 %v528
        %v2801 = vunpack.c.l.b16 %v529
        %v2802 = vunpack.c.l.b16 %v530
        %v2803 = vunpack.c.l.b16 %v531
        %v2804 = vunpack.c.l.b16 %v532
        %v2805 = vunpack.c.l.b16 %v533
        %v2806 = vunpack.c.l.b16 %v534
        %v2807 = vunpack.c.l.b16 %v535
        %v2808 = vunpack.c.l.b16 %v536
        %v2809 = vunpack.c.l.b16 %v537
        %v2810 = vunpack.c.l.b16 %v538
        %v2811 = vunpack.c.l.b16 %v539
        %v2812 = vunpack.c.l.b16 %v540
        %v2813 = vunpack.c.l.b16 %v541
        %v2814 = vunpack.c.l.b16 %v542
        %v2815 = vunpack.c.l.b16 %v543
        %v2816 = vunpack.c.l.b16 %v544
        %v2817 = vunpack.c.l.b16 %v545
        %v2818 = vunpack.c.l.b16 %v546
        %v2819 = vunpack.c.l.b16 %v547
        %v2820 = vunpack.c.l.b16 %v548
        %v2821 = vunpack.c.l.b16 %v549
        %v2822 = vunpack.c.l.b16 %v550
        %v2823 = vunpack.c.l.b16 %v551
        %v2824 = vunpack.c.l.b16 %v552
        %v2825 = vunpack.c.l.b16 %v553
        %v2826 = vunpack.c.l.b16 %v554
        %v2827 = vunpack.c.l.b16 %v555
        %v2828 = vunpack.c.l.b16 %v556
        %v2829 = vunpack.c.l.b16 %v557
        %v2830 = vunpack.c.l.b16 %v558
        %v2831 = vunpack.c.l.b16 %v559
        %v2832 = vunpack.c.l.b16 %v560
        %v2833 = vunpack.c.l.b16 %v561
        %v2834 = vunpack.c.l.b16 %v562
        %v2835 = vunpack.c.l.b16 %v563
        %v2836 = vunpack.c.l.b16 %v564
        %v2837 = vunpack.c.l.b16 %v565
        %v2838 = vunpack.c.l.b16 %v566
        %v2839 = vunpack.c.l.b16 %v567
        %v2840 = vunpack.c.l.b16 %v568
        %v2841 = vunpack.c.l.b16 %v569
        %v2842 = vunpack.c.l.b16 %v570
        %v2843 = vunpack.c.l.b16 %v571
        %v2844 = vunpack.c.l.b16 %v572
        %v2845 = vunpack.c.l.b16 %v573
        %v2846 = vunpack.c.l.b16 %v574
        %v2847 = vunpack.c.l.b16 %v575
        %v2848 = vunpack.c.l.b16 %v576
        %v2849 = vunpack.c.l.b16 %v577
        %v2850 = vunpack.c.l.b16 %v578
        %v2851 = vunpack.c.l.b16 %v579
        %v2852 = vunpack.c.l.b16 %v580
        %v2853 = vunpack.c.l.b16 %v581
        %v2854 = vunpack.c.l.b16 %v582
        %v2855 = vunpack.c.l.b16 %v583
        %v2856 = vunpack.c.l.b16 %v584
        %v2857 = vunpack.c.l.b16 %v585
        %v2858 = vunpack.c.l.b16 %v586
        %v2859 = vunpack.c.l.b16 %v587
        %v2860 = vunpack.c.l.b16 %v588
        %v2861 = vunpack.c.l.b16 %v589
        %v2862 = vunpack.c.l.b16 %v590
        %v2863 = vunpack.c.l.b16 %v591
        %v2864 = vunpack.c.l.b16 %v592
        %v2865 = vunpack.c.l.b16 %v593
        %v2866 = vunpack.c.l.b16 %v594
        %v2867 = vunpack.c.l.b16 %v595
        %v2868 = vunpack.c.l.b16 %v596
        %v2869 = vunpack.c.l.b16 %v597
        %v2870 = vunpack.c.l.b16 %v598
        %v2871 = vunpack.c.l.b16 %v599
        %v2872 = vunpack.c.l.b16 %v600
        %v2873 = vunpack.c.l.b16 %v601
        %v2874 = vunpack.c.l.b16 %v602
        %v2875 = vunpack.c.l.b16 %v603
        %v2876 = vunpack.c.l.b16 %v604
        %v2877 = vunpack.c.l.b16 %v605
        %v2878 = vunpack.c.l.b16 %v606
        %v2879 = vunpack.c.l.b16 %v607
        %v2880 = vunpack.c.l.b16 %v608
        %v2881 = vunpack.c.l.b16 %v609
        %v2882 = vunpack.c.l.b16 %v610
        %v2883 = vunpack.c.l.b16 %v611
        %v2884 = vunpack.c.l.b16 %v612
        %v2885 = vunpack.c.l.b16 %v613
        %v2886 = vunpack.c.l.b16 %v614
        %v2887 = vunpack.c.l.b16 %v615
        %v2888 = vunpack.c.l.b16 %v616
        %v2889 = vunpack.c.l.b16 %v617
        %v2890 = vunpack.c.l.b16 %v618
        %v2891 = vunpack.c.l.b16 %v619
        %v2892 = vunpack.c.l.b16 %v620
        %v2893 = vunpack.c.l.b16 %v621
        %v2894 = vunpack.c.l.b16 %v622
        %v2895 = vunpack.c.l.b16 %v623
        %v2896 = vunpack.c.l.b16 %v624
        %v2897 = vunpack.c.l.b16 %v625
        %v2898 = vunpack.c.l.b16 %v626
        %v2899 = vunpack.c.l.b16 %v627
        %v2900 = vunpack.c.l.b16 %v628
        %v2901 = vunpack.c.l.b16 %v629
        %v2902 = vunpack.c.l.b16 %v630
        %v2903 = vunpack.c.l.b16 %v631
        %v2904 = vunpack.c.l.b16 %v632
        %v2905 = vunpack.c.l.b16 %v633
        %v2906 = vunpack.c.l.b16 %v634
        %v2907 = vunpack.c.l.b16 %v635
        %v2908 = vunpack.c.l.b16 %v636
        %v2909 = vunpack.c.l.b16 %v637
        %v2910 = vunpack.c.l.b16 %v638
        %v2911 = vunpack.c.l.b16 %v639
        %v2912 = vunpack.c.l.b16 %v640
        %v2913 = vunpack.c.l.b16 %v641
        %v2914 = vunpack.c.l.b16 %v642
        %v2915 = vunpack.c.l.b16 %v643
        %v2916 = vunpack.c.l.b16 %v644
        %v2917 = vunpack.c.l.b16 %v645
        %v2918 = vunpack.c.l.b16 %v646
        %v2919 = vunpack.c.l.b16 %v647
        %v2920 = vunpack.c.l.b16 %v648
        %v2921 = vunpack.c.l.b16 %v649
        %v2922 = vunpack.c.l.b16 %v650
        %v2923 = vunpack.c.l.b16 %v651
        %v2924 = vunpack.c.l.b16 %v652
        %v2925 = vunpack.c.l.b16 %v653
        %v2926 = vunpack.c.l.b16 %v654
        %v2927 = vunpack.c.l.b16 %v655
        %v2928 = vunpack.c.l.b16 %v656
        %v2929 = vunpack.c.l.b16 %v657
        %v2930 = vunpack.c.l.b16 %v658
        %v2931 = vunpack.c.l.b16 %v659
        %v2932 = vunpack.c.l.b16 %v660
        %v2933 = vunpack.c.l.b16 %v661
        %v2934 = vunpack.c.l.b16 %v662
        %v2935 = vunpack.c.l.b16 %v663
        %v2936 = vunpack.c.l.b16 %v664
        %v2937 = vunpack.c.l.b16 %v665
        %v2938 = vunpack.c.l.b16 %v666
        %v2939 = vunpack.c.l.b16 %v667
        %v2940 = vunpack.c.l.b16 %v668
        %v2941 = vunpack.c.l.b16 %v669
        %v2942 = vunpack.c.l.b16 %v670
        %v2943 = vunpack.c.l.b16 %v671
        %v2944 = vunpack.c.l.b16 %v672
        %v2945 = vunpack.c.l.b16 %v673
        %v2946 = vunpack.c.l.b16 %v674
        %v2947 = vunpack.c.l.b16 %v675
        %v2948 = vunpack.c.l.b16 %v676
        %v2949 = vunpack.c.l.b16 %v677
        %v2950 = vunpack.c.l.b16 %v678
        %v2951 = vunpack.c.l.b16 %v679
        %v2952 = vunpack.c.l.b16 %v680
        %v2953 = vunpack.c.l.b16 %v681
        %v2954 = vunpack.c.l.b16 %v682
        %v2955 = vunpack.c.l.b16 %v683
        %v2956 = vunpack.c.l.b16 %v684
        %v2957 = vunpack.c.l.b16 %v685
        %v2958 = vunpack.c.l.b16 %v686
        %v2959 = vunpack.c.l.b16 %v687
        %v2960 = vunpack.c.l.b16 %v688
        %v2961 = vunpack.c.l.b16 %v689
        %v2962 = vunpack.c.l.b16 %v690
        %v2963 = vunpack.c.l.b16 %v691
        %v2964 = vunpack.c.l.b16 %v692
        %v2965 = vunpack.c.l.b16 %v693
        %v2966 = vunpack.c.l.b16 %v694
        %v2967 = vunpack.c.l.b16 %v695
        %v2968 = vunpack.c.l.b16 %v696
        %v2969 = vunpack.c.l.b16 %v697
        %v2970 = vunpack.c.l.b16 %v698
        %v2971 = vunpack.c.l.b16 %v699
        %v2972 = vunpack.c.l.b16 %v700
        %v2973 = vunpack.c.l.b16 %v701
        %v2974 = vunpack.c.l.b16 %v702
        %v2975 = vunpack.c.l.b16 %v703
        %v2976 = vunpack.c.l.b16 %v704
        %v2977 = vunpack.c.l.b16 %v705
        %v2978 = vunpack.c.l.b16 %v706
        %v2979 = vunpack.c.l.b16 %v707
        %v2980 = vunpack.c.l.b16 %v708
        %v2981 = vunpack.c.l.b16 %v709
        %v2982 = vunpack.c.l.b16 %v710
        %v2983 = vunpack.c.l.b16 %v711
        %v2984 = vunpack.c.l.b16 %v712
        %v2985 = vunpack.c.l.b16 %v713
        %v2986 = vunpack.c.l.b16 %v714
        %v2987 = vunpack.c.l.b16 %v715
        %v2988 = vunpack.c.l.b16 %v716
        %v2989 = vunpack.c.l.b16 %v717
        %v2990 = vunpack.c.l.b16 %v718
        %v2991 = vunpack.c.l.b16 %v719
        %v2992 = vunpack.c.l.b16 %v720
        %v2993 = vunpack.c.l.b16 %v721
        %v2994 = vunpack.c.l.b16 %v722
        %v2995 = vunpack.c.l.b16 %v723
        %v2996 = vunpack.c.l.b16 %v724
        %v2997 = vunpack.c.l.b16 %v725
        %v2998 = vunpack.c.l.b16 %v726
        %v2999 = vunpack.c.l.b16 %v727
        %v3000 = vunpack.c.l.b16 %v728
        %v3001 = vunpack.c.l.b16 %v729
        %v3002 = vunpack.c.l.b16 %v730
        %v3003 = vunpack.c.l.b16 %v731
        %v3004 = vunpack.c.l.b16 %v732
        %v3005 = vunpack.c.l.b16 %v733
        %v3006 = vunpack.c.l.b16 %v734
        %v3007 = vunpack.c.l.b16 %v735
        %v3008 = vunpack.c.l.b16 %v736
        %v3009 = vunpack.c.l.b16 %v737
        %v3010 = vunpack.c.l.b16 %v738
        %v3011 = vunpack.c.l.b16 %v739
        %v3012 = vunpack.c.l.b16 %v740
        %v3013 = vunpack.c.l.b16 %v741
        %v3014 = vunpack.c.l.b16 %v742
        %v3015 = vunpack.c.l.b16 %v743
        %v3016 = vunpack.c.l.b16 %v744
        %v3017 = vunpack.c.l.b16 %v745
        %v3018 = vunpack.c.l.b16 %v746
        %v3019 = vunpack.c.l.b16 %v747
        %v3020 = vunpack.c.l.b16 %v748
        %v3021 = vunpack.c.l.b16 %v749
        %v3022 = vunpack.c.l.b16 %v750
        %v3023 = vunpack.c.l.b16 %v751
        %v3024 = vunpack.c.l.b16 %v752
        %v3025 = vunpack.c.l.b16 %v753
        %v3026 = vunpack.c.l.b16 %v754
        %v3027 = vunpack.c.l.b16 %v755
        %v3028 = vunpack.c.l.b16 %v756
        %v3029 = vunpack.c.l.b16 %v757
        %v3030 = vunpack.c.l.b16 %v758
        %v3031 = vunpack.c.l.b16 %v759
        %v3032 = vunpack.c.l.b16 %v760
        %v3033 = vunpack.c.l.b16 %v761
        %v3034 = vunpack.c.l.b16 %v762
        %v3035 = vunpack.c.l.b16 %v763
        %v3036 = vunpack.c.l.b16 %v764
        %v3037 = vunpack.c.l.b16 %v765
        %v3038 = vunpack.c.l.b16 %v766
        %v3039 = vunpack.c.l.b16 %v767
        %v3040 = vunpack.c.l.b16 %v768
        %v3041 = vunpack.c.l.b16 %v769
        %v3042 = vunpack.c.l.b16 %v770
        %v3043 = vunpack.c.l.b16 %v771
        %v3044 = vunpack.c.l.b16 %v772
        %v3045 = vunpack.c.l.b16 %v773
        %v3046 = vunpack.c.l.b16 %v774
        %v3047 = vunpack.c.l.b16 %v775
        %v3048 = vunpack.c.l.b16 %v776
        %v3049 = vunpack.c.l.b16 %v777
        %v3050 = vunpack.c.l.b16 %v778
        %v3051 = vunpack.c.l.b16 %v779
        %v3052 = vunpack.c.l.b16 %v780
        %v3053 = vunpack.c.l.b16 %v781
        %v3054 = vunpack.c.l.b16 %v782
        %v3055 = vunpack.c.l.b16 %v783
        %v3056 = vunpack.c.l.b16 %v784
        %v3057 = vunpack.c.l.b16 %v785
        %v3058 = vunpack.c.l.b16 %v786
        %v3059 = vunpack.c.l.b16 %v787
        %v3060 = vunpack.c.l.b16 %v788
        %v3061 = vunpack.c.l.b16 %v789
        %v3062 = vunpack.c.l.b16 %v790
        %v3063 = vunpack.c.l.b16 %v791
        %v3064 = vunpack.c.l.b16 %v792
        %v3065 = vunpack.c.l.b16 %v793
        %v3066 = vunpack.c.l.b16 %v794
        %v3067 = vunpack.c.l.b16 %v795
        %v3068 = vunpack.c.l.b16 %v796
        %v3069 = vunpack.c.l.b16 %v797
        %v3070 = vunpack.c.l.b16 %v798
        %v3071 = vunpack.c.l.b16 %v799
        %v3072 = vunpack.c.l.b16 %v800
        %v3073 = vunpack.c.l.b16 %v801
        %v3074 = vunpack.c.l.b16 %v802
        %v3075 = vunpack.c.l.b16 %v803
        %v3076 = vunpack.c.l.b16 %v804
        %v3077 = vunpack.c.l.b16 %v805
        %v3078 = vunpack.c.l.b16 %v806
        %v3079 = vunpack.c.l.b16 %v807
        %v3080 = vunpack.c.l.b16 %v808
        %v3081 = vunpack.c.l.b16 %v809
        %v3082 = vunpack.c.l.b16 %v810
        %v3083 = vunpack.c.l.b16 %v811
        %v3084 = vunpack.c.l.b16 %v812
        %v3085 = vunpack.c.l.b16 %v813
        %v3086 = vunpack.c.l.b16 %v814
        %v3087 = vunpack.c.l.b16 %v815
        %v3088 = vunpack.c.l.b16 %v816
        %v3089 = vunpack.c.l.b16 %v817
        %v3090 = vunpack.c.l.b16 %v818
        %v3091 = vunpack.c.l.b16 %v819
        %v3092 = vunpack.c.l.b16 %v820
        %v3093 = vunpack.c.l.b16 %v821
        %v3094 = vunpack.c.l.b16 %v822
        %v3095 = vunpack.c.l.b16 %v823
        %v3096 = vunpack.c.l.b16 %v824
        %v3097 = vunpack.c.l.b16 %v825
        %v3098 = vunpack.c.l.b16 %v826
        %v3099 = vunpack.c.l.b16 %v827
        %v3100 = vunpack.c.l.b16 %v828
        %v3101 = vunpack.c.l.b16 %v829
        %v3102 = vunpack.c.l.b16 %v830
        %v3103 = vunpack.c.l.b16 %v831
        %v3104 = vunpack.c.l.b16 %v832
        %v3105 = vunpack.c.l.b16 %v833
        %v3106 = vunpack.c.l.b16 %v834
        %v3107 = vunpack.c.l.b16 %v835
        %v3108 = vunpack.c.l.b16 %v836
        %v3109 = vunpack.c.l.b16 %v837
        %v3110 = vunpack.c.l.b16 %v838
        %v3111 = vunpack.c.l.b16 %v839
        %v3112 = vunpack.c.l.b16 %v840
        %v3113 = vunpack.c.l.b16 %v841
        %v3114 = vunpack.c.l.b16 %v842
        %v3115 = vunpack.c.l.b16 %v843
        %v3116 = vunpack.c.l.b16 %v844
        %v3117 = vunpack.c.l.b16 %v845
        %v3118 = vunpack.c.l.b16 %v846
        %v3119 = vunpack.c.l.b16 %v847
        %v3120 = vunpack.c.l.b16 %v848
        %v3121 = vunpack.c.l.b16 %v849
        %v3122 = vunpack.c.l.b16 %v850
        %v3123 = vunpack.c.l.b16 %v851
        %v3124 = vunpack.c.l.b16 %v852
        %v3125 = vunpack.c.l.b16 %v853
        %v3126 = vunpack.c.l.b16 %v854
        %v3127 = vunpack.c.l.b16 %v855
        %v3128 = vunpack.c.l.b16 %v856
        %v3129 = vunpack.c.l.b16 %v857
        %v3130 = vunpack.c.l.b16 %v858
        %v3131 = vunpack.c.l.b16 %v859
        %v3132 = vunpack.c.l.b16 %v860
        %v3133 = vunpack.c.l.b16 %v861
        %v3134 = vunpack.c.l.b16 %v862
        %v3135 = vunpack.c.l.b16 %v863
        %v3136 = vunpack.c.l.b16 %v864
        %v3137 = vunpack.c.l.b16 %v865
        %v3138 = vunpack.c.l.b16 %v866
        %v3139 = vunpack.c.l.b16 %v867
        %v3140 = vunpack.c.l.b16 %v868
        %v3141 = vunpack.c.l.b16 %v869
        %v3142 = vunpack.c.l.b16 %v870
        %v3143 = vunpack.c.l.b16 %v871
        %v3144 = vunpack.c.l.b16 %v872
        %v3145 = vunpack.c.l.b16 %v873
        %v3146 = vunpack.c.l.b16 %v874
        %v3147 = vunpack.c.l.b16 %v875
        %v3148 = vunpack.c.l.b16 %v876
        %v3149 = vunpack.c.l.b16 %v877
        %v3150 = vunpack.c.l.b16 %v878
        %v3151 = vunpack.c.l.b16 %v879
        %v3152 = vunpack.c.l.b16 %v880
        %v3153 = vunpack.c.l.b16 %v881
        %v3154 = vunpack.c.l.b16 %v882
        %v3155 = vunpack.c.l.b16 %v883
        %v3156 = vunpack.c.l.b16 %v884
        %v3157 = vunpack.c.l.b16 %v885
        %v3158 = vunpack.c.l.b16 %v886
        %v3159 = vunpack.c.l.b16 %v887
        %v3160 = vunpack.c.l.b16 %v888
        %v3161 = vunpack.c.l.b16 %v889
        %v3162 = vunpack.c.l.b16 %v890
        %v3163 = vunpack.c.l.b16 %v891
        %v3164 = vunpack.c.l.b16 %v892
        %v3165 = vunpack.c.l.b16 %v893
        %v3166 = vunpack.c.l.b16 %v894
        %v3167 = vunpack.c.l.b16 %v895
        %v3168 = vunpack.c.l.b16 %v896
        %v3169 = vunpack.c.l.b16 %v897
        %v3170 = vunpack.c.l.b16 %v898
        %v3171 = vunpack.c.l.b16 %v899
        %v3172 = vunpack.c.l.b16 %v900
        %v3173 = vunpack.c.l.b16 %v901
        %v3174 = vunpack.c.l.b16 %v902
        %v3175 = vunpack.c.l.b16 %v903
        %v3176 = vunpack.c.l.b16 %v904
        %v3177 = vunpack.c.l.b16 %v905
        %v3178 = vunpack.c.l.b16 %v906
        %v3179 = vunpack.c.l.b16 %v907
        %v3180 = vunpack.c.l.b16 %v908
        %v3181 = vunpack.c.l.b16 %v909
        %v3182 = vunpack.c.l.b16 %v910
        %v3183 = vunpack.c.l.b16 %v911
        %v3184 = vunpack.c.l.b16 %v912
        %v3185 = vunpack.c.l.b16 %v913
        %v3186 = vunpack.c.l.b16 %v914
        %v3187 = vunpack.c.l.b16 %v915
        %v3188 = vunpack.c.l.b16 %v916
        %v3189 = vunpack.c.l.b16 %v917
        %v3190 = vunpack.c.l.b16 %v918
        %v3191 = vunpack.c.l.b16 %v919
        %v3192 = vunpack.c.l.b16 %v920
        %v3193 = vunpack.c.l.b16 %v921
        %v3194 = vunpack.c.l.b16 %v922
        %v3195 = vunpack.c.l.b16 %v923
        %v3196 = vunpack.c.l.b16 %v924
        %v3197 = vunpack.c.l.b16 %v925
        %v3198 = vunpack.c.l.b16 %v926
        %v3199 = vunpack.c.l.b16 %v927
        %v3200 = vunpack.c.l.b16 %v928
        %v3201 = vunpack.c.l.b16 %v929
        %v3202 = vunpack.c.l.b16 %v930
        %v3203 = vunpack.c.l.b16 %v931
        %v3204 = vunpack.c.l.b16 %v932
        %v3205 = vunpack.c.l.b16 %v933
        %v3206 = vunpack.c.l.b16 %v934
        %v3207 = vunpack.c.l.b16 %v935
        %v3208 = vunpack.c.l.b16 %v936
        %v3209 = vunpack.c.l.b16 %v937
        %v3210 = vunpack.c.l.b16 %v938
        %v3211 = vunpack.c.l.b16 %v939
        %v3212 = vunpack.c.l.b16 %v940
        %v3213 = vunpack.c.l.b16 %v941
        %v3214 = vunpack.c.l.b16 %v942
        %v3215 = vunpack.c.l.b16 %v943
        %v3216 = vunpack.c.l.b16 %v944
        %v3217 = vunpack.c.l.b16 %v945
        %v3218 = vunpack.c.l.b16 %v946
        %v3219 = vunpack.c.l.b16 %v947
        %v3220 = vunpack.c.l.b16 %v948
        %v3221 = vunpack.c.l.b16 %v949
        %v3222 = vunpack.c.l.b16 %v950
        %v3223 = vunpack.c.l.b16 %v951
        %v3224 = vunpack.c.l.b16 %v952
        %v3225 = vunpack.c.l.b16 %v953
        %v3226 = vunpack.c.l.b16 %v954
        %v3227 = vunpack.c.l.b16 %v955
        %v3228 = vunpack.c.l.b16 %v956
        %v3229 = vunpack.c.l.b16 %v957
        %v3230 = vunpack.c.l.b16 %v958
        %v3231 = vunpack.c.l.b16 %v959
        %v3232 = vunpack.c.l.b16 %v960
        %v3233 = vunpack.c.l.b16 %v961
        %v3234 = vunpack.c.l.b16 %v962
        %v3235 = vunpack.c.l.b16 %v963
        %v3236 = vunpack.c.l.b16 %v964
        %v3237 = vunpack.c.l.b16 %v965
        %v3238 = vunpack.c.l.b16 %v966
        %v3239 = vunpack.c.l.b16 %v967
        %v3240 = vunpack.c.l.b16 %v968
        %v3241 = vunpack.c.l.b16 %v969
        %v3242 = vunpack.c.l.b16 %v970
        %v3243 = vunpack.c.l.b16 %v971
        %v3244 = vunpack.c.l.b16 %v972
        %v3245 = vunpack.c.l.b16 %v973
        %v3246 = vunpack.c.l.b16 %v974
        %v3247 = vunpack.c.l.b16 %v975
        %v3248 = vunpack.c.l.b16 %v976
        %v3249 = vunpack.c.l.b16 %v977
        %v3250 = vunpack.c.l.b16 %v978
        %v3251 = vunpack.c.l.b16 %v979
        %v3252 = vunpack.c.l.b16 %v980
        %v3253 = vunpack.c.l.b16 %v981
        %v3254 = vunpack.c.l.b16 %v982
        %v3255 = vunpack.c.l.b16 %v983
        %v3256 = vunpack.c.l.b16 %v984
        %v3257 = vunpack.c.l.b16 %v985
        %v3258 = vunpack.c.l.b16 %v986
        %v3259 = vunpack.c.l.b16 %v987
        %v3260 = vunpack.c.l.b16 %v988
        %v3261 = vunpack.c.l.b16 %v989
        %v3262 = vunpack.c.l.b16 %v990
        %v3263 = vunpack.c.l.b16 %v991
        %v3264 = vunpack.c.l.b16 %v992
        %v3265 = vunpack.c.l.b16 %v993
        %v3266 = vunpack.c.l.b16 %v994
        %v3267 = vunpack.c.l.b16 %v995
        %v3268 = vunpack.c.l.b16 %v996
        %v3269 = vunpack.c.l.b16 %v997
        %v3270 = vunpack.c.l.b16 %v998
        %v3271 = vunpack.c.l.b16 %v999
        %v3272 = vunpack.c.l.b16 %v1000
        %v3273 = vunpack.c.l.b16 %v1001
        %v3274 = vunpack.c.l.b16 %v1002
        %v3275 = vunpack.c.l.b16 %v1003
        %v3276 = vunpack.c.l.b16 %v1004
        %v3277 = vunpack.c.l.b16 %v1005
        %v3278 = vunpack.c.l.b16 %v1006
        %v3279 = vunpack.c.l.b16 %v1007
        %v3280 = vunpack.c.l.b16 %v1008
        %v3281 = vunpack.c.l.b16 %v1009
        %v3282 = vunpack.c.l.b16 %v1010
        %v3283 = vunpack.c.l.b16 %v1011
        %v3284 = vunpack.c.l.b16 %v1012
        %v3285 = vunpack.c.l.b16 %v1013
        %v3286 = vunpack.c.l.b16 %v1014
        %v3287 = vunpack.c.l.b16 %v1015
        %v3288 = vunpack.c.l.b16 %v1016
        %v3289 = vunpack.c.l.b16 %v1017
        %v3290 = vunpack.c.l.b16 %v1018
        %v3291 = vunpack.c.l.b16 %v1019
        %v3292 = vunpack.c.l.b16 %v1020
        %v3293 = vunpack.c.l.b16 %v1021
        %v3294 = vunpack.c.l.b16 %v1022
        %v3295 = vunpack.c.l.b16 %v1023
        %v3296 = vunpack.c.l.b16 %v1024
        %v3297 = vunpack.c.l.b16 %v1025
        %v3298 = vunpack.c.l.b16 %v1026
        %v3299 = vunpack.c.l.b16 %v1027
        %v3300 = vunpack.c.l.b16 %v1028
        %v3301 = vunpack.c.l.b16 %v1029
        %v3302 = vunpack.c.l.b16 %v1030
        %v3303 = vunpack.c.l.b16 %v1031
        %v3304 = vunpack.c.l.b16 %v1032
        %v3305 = vunpack.c.l.b16 %v1033
        %v3306 = vunpack.c.l.b16 %v1034
        %v3307 = vunpack.c.l.b16 %v1035
        %v3308 = vunpack.c.l.b16 %v1036
        %v3309 = vunpack.c.l.b16 %v1037
        %v3310 = vunpack.c.l.b16 %v1038
        %v3311 = vunpack.c.l.b16 %v1039
        %v3312 = vunpack.c.l.b16 %v1040
        %v3313 = vunpack.c.l.b16 %v1041
        %v3314 = vunpack.c.l.b16 %v1042
        %v3315 = vunpack.c.l.b16 %v1043
        %v3316 = vunpack.c.l.b16 %v1044
        %v3317 = vunpack.c.l.b16 %v1045
        %v3318 = vunpack.c.l.b16 %v1046
        %v3319 = vunpack.c.l.b16 %v1047
        %v3320 = vunpack.c.l.b16 %v1048
        %v3321 = vunpack.c.l.b16 %v1049
        %v3322 = vunpack.c.l.b16 %v1050
        %v3323 = vunpack.c.l.b16 %v1051
        %v3324 = vunpack.c.l.b16 %v1052
        %v3325 = vunpack.c.l.b16 %v1053
        %v3326 = vunpack.c.l.b16 %v1054
        %v3327 = vunpack.c.l.b16 %v1055
        %v3328 = vunpack.c.l.b16 %v1056
        %v3329 = vunpack.c.l.b16 %v1057
        %v3330 = vunpack.c.l.b16 %v1058
        %v3331 = vunpack.c.l.b16 %v1059
        %v3332 = vunpack.c.l.b16 %v1060
        %v3333 = vunpack.c.l.b16 %v1061
        %v3334 = vunpack.c.l.b16 %v1062
        %v3335 = vunpack.c.l.b16 %v1063
        %v3336 = vunpack.c.l.b16 %v1064
        %v3337 = vunpack.c.l.b16 %v1065
        %v3338 = vunpack.c.l.b16 %v1066
        %v3339 = vunpack.c.l.b16 %v1067
        %v3340 = vunpack.c.l.b16 %v1068
        %v3341 = vunpack.c.l.b16 %v1069
        %v3342 = vunpack.c.l.b16 %v1070
        %v3343 = vunpack.c.l.b16 %v1071
        %v3344 = vunpack.c.l.b16 %v1072
        %v3345 = vunpack.c.l.b16 %v1073
        %v3346 = vunpack.c.l.b16 %v1074
        %v3347 = vunpack.c.l.b16 %v1075
        %v3348 = vunpack.c.l.b16 %v1076
        %v3349 = vunpack.c.l.b16 %v1077
        %v3350 = vunpack.c.l.b16 %v1078
        %v3351 = vunpack.c.l.b16 %v1079
        %v3352 = vunpack.c.l.b16 %v1080
        %v3353 = vunpack.c.l.b16 %v1081
        %v3354 = vunpack.c.l.b16 %v1082
        %v3355 = vunpack.c.l.b16 %v1083
        %v3356 = vunpack.c.l.b16 %v1084
        %v3357 = vunpack.c.l.b16 %v1085
        %v3358 = vunpack.c.l.b16 %v1086
        %v3359 = vunpack.c.l.b16 %v1087
        %v3360 = vunpack.c.l.b16 %v1088
        %v3361 = vunpack.c.l.b16 %v1089
        %v3362 = vunpack.c.l.b16 %v1090
        %v3363 = vunpack.c.l.b16 %v1091
        %v3364 = vunpack.c.l.b16 %v1092
        %v3365 = vunpack.c.l.b16 %v1093
        %v3366 = vunpack.c.l.b16 %v1094
        %v3367 = vunpack.c.l.b16 %v1095
        %v3368 = vunpack.c.l.b16 %v1096
        %v3369 = vunpack.c.l.b16 %v1097
        %v3370 = vunpack.c.l.b16 %v1098
        %v3371 = vunpack.c.l.b16 %v1099
        %v3372 = vunpack.c.l.b16 %v1100
        %v3373 = vunpack.c.l.b16 %v1101
        %v3374 = vunpack.c.l.b16 %v1102
        %v3375 = vunpack.c.l.b16 %v1103
        %v3376 = vunpack.c.l.b16 %v1104
        %v3377 = vunpack.c.l.b16 %v1105
        %v3378 = vunpack.c.l.b16 %v1106
        %v3379 = vunpack.c.l.b16 %v1107
        %v3380 = vunpack.c.l.b16 %v1108
        %v3381 = vunpack.c.l.b16 %v1109
        %v3382 = vunpack.c.l.b16 %v1110
        %v3383 = vunpack.c.l.b16 %v1111
        %v3384 = vunpack.c.l.b16 %v1112
        %v3385 = vunpack.c.l.b16 %v1113
        %v3386 = vunpack.c.l.b16 %v1114
        %v3387 = vunpack.c.l.b16 %v1115
        %v3388 = vunpack.c.l.b16 %v1116
        %v3389 = vunpack.c.l.b16 %v1117
        %v3390 = vunpack.c.l.b16 %v1118
        %v3391 = vunpack.c.l.b16 %v1119
        %v3392 = vunpack.c.l.b16 %v1120
        %v3393 = vunpack.c.l.b16 %v1121
        %v3394 = vunpack.c.l.b16 %v1122
        %v3395 = vunpack.c.l.b16 %v1123
        %v3396 = vunpack.c.l.b16 %v1124
        %v3397 = vunpack.c.l.b16 %v1125
        %v3398 = vunpack.c.l.b16 %v1126
        %v3399 = vunpack.c.l.b16 %v1127
        %v3400 = vunpack.c.l.b16 %v1128
        %v3401 = vunpack.c.l.b16 %v1129
        %v3402 = vunpack.c.l.b16 %v1130
        %v3403 = vunpack.c.l.b16 %v1131
        %v3404 = vunpack.c.l.b16 %v1132
        %v3405 = vunpack.c.l.b16 %v1133
        %v3406 = vunpack.c.l.b16 %v1134
        %v3407 = vunpack.c.l.b16 %v1135
        %v3408 = vunpack.c.l.b16 %v1136
        %v3409 = vunpack.c.l.b16 %v1137
        %v3410 = vunpack.c.l.b16 %v1138
        %v3411 = vunpack.c.l.b16 %v1139
        %v3412 = vunpack.c.l.b16 %v1140
        %v3413 = vunpack.c.l.b16 %v1141
        %v3414 = vunpack.c.l.b16 %v1142
        %v3415 = vunpack.c.l.b16 %v1143
        %v3416 = vunpack.c.l.b16 %v1144
        %v3417 = vunpack.c.l.b16 %v1145
        %v3418 = vunpack.c.l.b16 %v1146
        %v3419 = vunpack.c.l.b16 %v1147
        %v3420 = vunpack.c.l.b16 %v1148
        %v3421 = vunpack.c.l.b16 %v1149
        %v3422 = vunpack.c.l.b16 %v1150
        %v3423 = vunpack.c.l.b16 %v1151
        %v3424 = vunpack.c.l.b16 %v1152
        %v3425 = vunpack.c.l.b16 %v1153
        %v3426 = vunpack.c.l.b16 %v1154
        %v3427 = vunpack.c.l.b16 %v1155
        %v3428 = vunpack.c.l.b16 %v1156
        %v3429 = vunpack.c.l.b16 %v1157
        %v3430 = vunpack.c.l.b16 %v1158
        %v3431 = vunpack.c.l.b16 %v1159
        %v3432 = vunpack.c.l.b16 %v1160
        %v3433 = vunpack.c.l.b16 %v1161
        %v3434 = vunpack.c.l.b16 %v1162
        %v3435 = vunpack.c.l.b16 %v1163
        %v3436 = vunpack.c.l.b16 %v1164
        %v3437 = vunpack.c.l.b16 %v1165
        %v3438 = vunpack.c.l.b16 %v1166
        %v3439 = vunpack.c.l.b16 %v1167
        %v3440 = vunpack.c.l.b16 %v1168
        %v3441 = vunpack.c.l.b16 %v1169
        %v3442 = vunpack.c.l.b16 %v1170
        %v3443 = vunpack.c.l.b16 %v1171
        %v3444 = vunpack.c.l.b16 %v1172
        %v3445 = vunpack.c.l.b16 %v1173
        %v3446 = vunpack.c.l.b16 %v1174
        %v3447 = vunpack.c.l.b16 %v1175
        %v3448 = vunpack.c.l.b16 %v1176
        %v3449 = vunpack.c.l.b16 %v1177
        %v3450 = vunpack.c.l.b16 %v1178
        %v3451 = vunpack.c.l.b16 %v1179
        %v3452 = vunpack.c.l.b16 %v1180
        %v3453 = vunpack.c.l.b16 %v1181
        %v3454 = vunpack.c.l.b16 %v1182
        %v3455 = vunpack.c.l.b16 %v1183
        %v3456 = vunpack.c.l.b16 %v1184
        %v3457 = vunpack.c.l.b16 %v1185
        %v3458 = vunpack.c.l.b16 %v1186
        %v3459 = vunpack.c.l.b16 %v1187
        %v3460 = vunpack.c.l.b16 %v1188
        %v3461 = vunpack.c.l.b16 %v1189
        %v3462 = vunpack.c.l.b16 %v1190
        %v3463 = vunpack.c.l.b16 %v1191
        %v3464 = vunpack.c.l.b16 %v1192
        %v3465 = vunpack.c.l.b16 %v1193
        %v3466 = vunpack.c.l.b16 %v1194
        %v3467 = vunpack.c.l.b16 %v1195
        %v3468 = vunpack.c.l.b16 %v1196
        %v3469 = vunpack.c.l.b16 %v1197
        %v3470 = vunpack.c.l.b16 %v1198
        %v3471 = vunpack.c.l.b16 %v1199
        %v3472 = vunpack.c.l.b16 %v1200
        %v3473 = vunpack.c.l.b16 %v1201
        %v3474 = vunpack.c.l.b16 %v1202
        %v3475 = vunpack.c.l.b16 %v1203
        %v3476 = vunpack.c.l.b16 %v1204
        %v3477 = vunpack.c.l.b16 %v1205
        %v3478 = vunpack.c.l.b16 %v1206
        %v3479 = vunpack.c.l.b16 %v1207
        %v3480 = vunpack.c.l.b16 %v1208
        %v3481 = vunpack.c.l.b16 %v1209
        %v3482 = vunpack.c.l.b16 %v1210
        %v3483 = vunpack.c.l.b16 %v1211
        %v3484 = vunpack.c.l.b16 %v1212
        %v3485 = vunpack.c.l.b16 %v1213
        %v3486 = vunpack.c.l.b16 %v1214
        %v3487 = vunpack.c.l.b16 %v1215
        %v3488 = vunpack.c.l.b16 %v1216
        %v3489 = vunpack.c.l.b16 %v1217
        %v3490 = vunpack.c.l.b16 %v1218
        %v3491 = vunpack.c.l.b16 %v1219
        %v3492 = vunpack.c.l.b16 %v1220
        %v3493 = vunpack.c.l.b16 %v1221
        %v3494 = vunpack.c.l.b16 %v1222
        %v3495 = vunpack.c.l.b16 %v1223
        %v3496 = vunpack.c.l.b16 %v1224
        %v3497 = vunpack.c.l.b16 %v1225
        %v3498 = vunpack.c.l.b16 %v1226
        %v3499 = vunpack.c.l.b16 %v1227
        %v3500 = vunpack.c.l.b16 %v1228
        %v3501 = vunpack.c.l.b16 %v1229
        %v3502 = vunpack.c.l.b16 %v1230
        %v3503 = vunpack.c.l.b16 %v1231
        %v3504 = vunpack.c.l.b16 %v1232
        %v3505 = vunpack.c.l.b16 %v1233
        %v3506 = vunpack.c.l.b16 %v1234
        %v3507 = vunpack.c.l.b16 %v1235
        %v3508 = vunpack.c.l.b16 %v1236
        %v3509 = vunpack.c.l.b16 %v1237
        %v3510 = vunpack.c.l.b16 %v1238
        %v3511 = vunpack.c.l.b16 %v1239
        %v3512 = vunpack.c.l.b16 %v1240
        %v3513 = vunpack.c.l.b16 %v1241
        %v3514 = vunpack.c.l.b16 %v1242
        %v3515 = vunpack.c.l.b16 %v1243
        %v3516 = vunpack.c.l.b16 %v1244
        %v3517 = vunpack.c.l.b16 %v1245
        %v3518 = vunpack.c.l.b16 %v1246
        %v3519 = vunpack.c.l.b16 %v1247
        %v3520 = vunpack.c.l.b16 %v1248
        %v3521 = vunpack.c.l.b16 %v1249
        %v3522 = vunpack.c.l.b16 %v1250
        %v3523 = vunpack.c.l.b16 %v1251
        %v3524 = vunpack.c.l.b16 %v1252
        %v3525 = vunpack.c.l.b16 %v1253
        %v3526 = vunpack.c.l.b16 %v1254
        %v3527 = vunpack.c.l.b16 %v1255
        %v3528 = vunpack.c.l.b16 %v1256
        %v3529 = vunpack.c.l.b16 %v1257
        %v3530 = vunpack.c.l.b16 %v1258
        %v3531 = vunpack.c.l.b16 %v1259
        %v3532 = vunpack.c.l.b16 %v1260
        %v3533 = vunpack.c.l.b16 %v1261
        %v3534 = vunpack.c.l.b16 %v1262
        %v3535 = vunpack.c.l.b16 %v1263
        %v3536 = vunpack.c.l.b16 %v1264
        %v3537 = vunpack.c.l.b16 %v1265
        %v3538 = vunpack.c.l.b16 %v1266
        %v3539 = vunpack.c.l.b16 %v1267
        %v3540 = vunpack.c.l.b16 %v1268
        %v3541 = vunpack.c.l.b16 %v1269
        %v3542 = vunpack.c.l.b16 %v1270
        %v3543 = vunpack.c.l.b16 %v1271
        %v3544 = vunpack.c.l.b16 %v1272
        %v3545 = vunpack.c.l.b16 %v1273
        %v3546 = vunpack.c.l.b16 %v1274
        %v3547 = vunpack.c.l.b16 %v1275
        %v3548 = vunpack.c.l.b16 %v1276
        %v3549 = vunpack.c.l.b16 %v1277
        %v3550 = vunpack.c.l.b16 %v1278
        %v3551 = vunpack.c.l.b16 %v1279
        %v3552 = vunpack.c.l.b16 %v1280
        %v3553 = vunpack.c.l.b16 %v1281
        %v3554 = vpack.c.b16 %v2531, %v2530
        %v3555 = vpack.c.b16 %v2533, %v2532
        %v3556 = vpack.c.b16 %v2535, %v2534
        %v3557 = vpack.c.b16 %v2537, %v2536
        %v3558 = vpack.c.b16 %v2539, %v2538
        %v3559 = vpack.c.b16 %v2541, %v2540
        %v3560 = vpack.c.b16 %v2543, %v2542
        %v3561 = vpack.c.b16 %v2545, %v2544
        %v3562 = vpack.c.b16 %v2547, %v2546
        %v3563 = vpack.c.b16 %v2549, %v2548
        %v3564 = vpack.c.b16 %v2551, %v2550
        %v3565 = vpack.c.b16 %v2553, %v2552
        %v3566 = vpack.c.b16 %v2555, %v2554
        %v3567 = vpack.c.b16 %v2557, %v2556
        %v3568 = vpack.c.b16 %v2559, %v2558
        %v3569 = vpack.c.b16 %v2561, %v2560
        %v3570 = vpack.c.b16 %v2563, %v2562
        %v3571 = vpack.c.b16 %v2565, %v2564
        %v3572 = vpack.c.b16 %v2567, %v2566
        %v3573 = vpack.c.b16 %v2569, %v2568
        %v3574 = vpack.c.b16 %v2571, %v2570
        %v3575 = vpack.c.b16 %v2573, %v2572
        %v3576 = vpack.c.b16 %v2575, %v2574
        %v3577 = vpack.c.b16 %v2577, %v2576
        %v3578 = vpack.c.b16 %v2579, %v2578
        %v3579 = vpack.c.b16 %v2581, %v2580
        %v3580 = vpack.c.b16 %v2583, %v2582
        %v3581 = vpack.c.b16 %v2585, %v2584
        %v3582 = vpack.c.b16 %v2587, %v2586
        %v3583 = vpack.c.b16 %v2589, %v2588
        %v3584 = vpack.c.b16 %v2591, %v2590
        %v3585 = vpack.c.b16 %v2593, %v2592
        %v3586 = vpack.c.b16 %v2595, %v2594
        %v3587 = vpack.c.b16 %v2597, %v2596
        %v3588 = vpack.c.b16 %v2599, %v2598
        %v3589 = vpack.c.b16 %v2601, %v2600
        %v3590 = vpack.c.b16 %v2603, %v2602
        %v3591 = vpack.c.b16 %v2605, %v2604
        %v3592 = vpack.c.b16 %v2607, %v2606
        %v3593 = vpack.c.b16 %v2609, %v2608
        %v3594 = vpack.c.b16 %v2611, %v2610
        %v3595 = vpack.c.b16 %v2613, %v2612
        %v3596 = vpack.c.b16 %v2615, %v2614
        %v3597 = vpack.c.b16 %v2617, %v2616
        %v3598 = vpack.c.b16 %v2619, %v2618
        %v3599 = vpack.c.b16 %v2621, %v2620
        %v3600 = vpack.c.b16 %v2623, %v2622
        %v3601 = vpack.c.b16 %v2625, %v2624
        %v3602 = vpack.c.b16 %v2627, %v2626
        %v3603 = vpack.c.b16 %v2629, %v2628
        %v3604 = vpack.c.b16 %v2631, %v2630
        %v3605 = vpack.c.b16 %v2633, %v2632
        %v3606 = vpack.c.b16 %v2635, %v2634
        %v3607 = vpack.c.b16 %v2637, %v2636
        %v3608 = vpack.c.b16 %v2639, %v2638
        %v3609 = vpack.c.b16 %v2641, %v2640
        %v3610 = vpack.c.b16 %v2643, %v2642
        %v3611 = vpack.c.b16 %v2645, %v2644
        %v3612 = vpack.c.b16 %v2647, %v2646
        %v3613 = vpack.c.b16 %v2649, %v2648
        %v3614 = vpack.c.b16 %v2651, %v2650
        %v3615 = vpack.c.b16 %v2653, %v2652
        %v3616 = vpack.c.b16 %v2655, %v2654
        %v3617 = vpack.c.b16 %v2657, %v2656
        %v3618 = vpack.c.b16 %v2659, %v2658
        %v3619 = vpack.c.b16 %v2661, %v2660
        %v3620 = vpack.c.b16 %v2663, %v2662
        %v3621 = vpack.c.b16 %v2665, %v2664
        %v3622 = vpack.c.b16 %v2667, %v2666
        %v3623 = vpack.c.b16 %v2669, %v2668
        %v3624 = vpack.c.b16 %v2671, %v2670
        %v3625 = vpack.c.b16 %v2673, %v2672
        %v3626 = vpack.c.b16 %v2675, %v2674
        %v3627 = vpack.c.b16 %v2677, %v2676
        %v3628 = vpack.c.b16 %v2679, %v2678
        %v3629 = vpack.c.b16 %v2681, %v2680
        %v3630 = vpack.c.b16 %v2683, %v2682
        %v3631 = vpack.c.b16 %v2685, %v2684
        %v3632 = vpack.c.b16 %v2687, %v2686
        %v3633 = vpack.c.b16 %v2689, %v2688
        %v3634 = vpack.c.b16 %v2691, %v2690
        %v3635 = vpack.c.b16 %v2693, %v2692
        %v3636 = vpack.c.b16 %v2695, %v2694
        %v3637 = vpack.c.b16 %v2697, %v2696
        %v3638 = vpack.c.b16 %v2699, %v2698
        %v3639 = vpack.c.b16 %v2701, %v2700
        %v3640 = vpack.c.b16 %v2703, %v2702
        %v3641 = vpack.c.b16 %v2705, %v2704
        %v3642 = vpack.c.b16 %v2707, %v2706
        %v3643 = vpack.c.b16 %v2709, %v2708
        %v3644 = vpack.c.b16 %v2711, %v2710
        %v3645 = vpack.c.b16 %v2713, %v2712
        %v3646 = vpack.c.b16 %v2715, %v2714
        %v3647 = vpack.c.b16 %v2717, %v2716
        %v3648 = vpack.c.b16 %v2719, %v2718
        %v3649 = vpack.c.b16 %v2721, %v2720
        %v3650 = vpack.c.b16 %v2723, %v2722
        %v3651 = vpack.c.b16 %v2725, %v2724
        %v3652 = vpack.c.b16 %v2727, %v2726
        %v3653 = vpack.c.b16 %v2729, %v2728
        %v3654 = vpack.c.b16 %v2731, %v2730
        %v3655 = vpack.c.b16 %v2733, %v2732
        %v3656 = vpack.c.b16 %v2735, %v2734
        %v3657 = vpack.c.b16 %v2737, %v2736
        %v3658 = vpack.c.b16 %v2739, %v2738
        %v3659 = vpack.c.b16 %v2741, %v2740
        %v3660 = vpack.c.b16 %v2743, %v2742
        %v3661 = vpack.c.b16 %v2745, %v2744
        %v3662 = vpack.c.b16 %v2747, %v2746
        %v3663 = vpack.c.b16 %v2749, %v2748
        %v3664 = vpack.c.b16 %v2751, %v2750
        %v3665 = vpack.c.b16 %v2753, %v2752
        %v3666 = vpack.c.b16 %v2755, %v2754
        %v3667 = vpack.c.b16 %v2757, %v2756
        %v3668 = vpack.c.b16 %v2759, %v2758
        %v3669 = vpack.c.b16 %v2761, %v2760
        %v3670 = vpack.c.b16 %v2763, %v2762
        %v3671 = vpack.c.b16 %v2765, %v2764
        %v3672 = vpack.c.b16 %v2767, %v2766
        %v3673 = vpack.c.b16 %v2769, %v2768
        %v3674 = vpack.c.b16 %v2771, %v2770
        %v3675 = vpack.c.b16 %v2773, %v2772
        %v3676 = vpack.c.b16 %v2775, %v2774
        %v3677 = vpack.c.b16 %v2777, %v2776
        %v3678 = vpack.c.b16 %v2779, %v2778
        %v3679 = vpack.c.b16 %v2781, %v2780
        %v3680 = vpack.c.b16 %v2783, %v2782
        %v3681 = vpack.c.b16 %v2785, %v2784
        %v3682 = vpack.c.b16 %v2787, %v2786
        %v3683 = vpack.c.b16 %v2789, %v2788
        %v3684 = vpack.c.b16 %v2791, %v2790
        %v3685 = vpack.c.b16 %v2793, %v2792
        %v3686 = vpack.c.b16 %v2795, %v2794
        %v3687 = vpack.c.b16 %v2797, %v2796
        %v3688 = vpack.c.b16 %v2799, %v2798
        %v3689 = vpack.c.b16 %v2801, %v2800
        %v3690 = vpack.c.b16 %v2803, %v2802
        %v3691 = vpack.c.b16 %v2805, %v2804
        %v3692 = vpack.c.b16 %v2807, %v2806
        %v3693 = vpack.c.b16 %v2809, %v2808
        %v3694 = vpack.c.b16 %v2811, %v2810
        %v3695 = vpack.c.b16 %v2813, %v2812
        %v3696 = vpack.c.b16 %v2815, %v2814
        %v3697 = vpack.c.b16 %v2817, %v2816
        %v3698 = vpack.c.b16 %v2819, %v2818
        %v3699 = vpack.c.b16 %v2821, %v2820
        %v3700 = vpack.c.b16 %v2823, %v2822
        %v3701 = vpack.c.b16 %v2825, %v2824
        %v3702 = vpack.c.b16 %v2827, %v2826
        %v3703 = vpack.c.b16 %v2829, %v2828
        %v3704 = vpack.c.b16 %v2831, %v2830
        %v3705 = vpack.c.b16 %v2833, %v2832
        %v3706 = vpack.c.b16 %v2835, %v2834
        %v3707 = vpack.c.b16 %v2837, %v2836
        %v3708 = vpack.c.b16 %v2839, %v2838
        %v3709 = vpack.c.b16 %v2841, %v2840
        %v3710 = vpack.c.b16 %v2843, %v2842
        %v3711 = vpack.c.b16 %v2845, %v2844
        %v3712 = vpack.c.b16 %v2847, %v2846
        %v3713 = vpack.c.b16 %v2849, %v2848
        %v3714 = vpack.c.b16 %v2851, %v2850
        %v3715 = vpack.c.b16 %v2853, %v2852
        %v3716 = vpack.c.b16 %v2855, %v2854
        %v3717 = vpack.c.b16 %v2857, %v2856
        %v3718 = vpack.c.b16 %v2859, %v2858
        %v3719 = vpack.c.b16 %v2861, %v2860
        %v3720 = vpack.c.b16 %v2863, %v2862
        %v3721 = vpack.c.b16 %v2865, %v2864
        %v3722 = vpack.c.b16 %v2867, %v2866
        %v3723 = vpack.c.b16 %v2869, %v2868
        %v3724 = vpack.c.b16 %v2871, %v2870
        %v3725 = vpack.c.b16 %v2873, %v2872
        %v3726 = vpack.c.b16 %v2875, %v2874
        %v3727 = vpack.c.b16 %v2877, %v2876
        %v3728 = vpack.c.b16 %v2879, %v2878
        %v3729 = vpack.c.b16 %v2881, %v2880
        %v3730 = vpack.c.b16 %v2883, %v2882
        %v3731 = vpack.c.b16 %v2885, %v2884
        %v3732 = vpack.c.b16 %v2887, %v2886
        %v3733 = vpack.c.b16 %v2889, %v2888
        %v3734 = vpack.c.b16 %v2891, %v2890
        %v3735 = vpack.c.b16 %v2893, %v2892
        %v3736 = vpack.c.b16 %v2895, %v2894
        %v3737 = vpack.c.b16 %v2897, %v2896
        %v3738 = vpack.c.b16 %v2899, %v2898
        %v3739 = vpack.c.b16 %v2901, %v2900
        %v3740 = vpack.c.b16 %v2903, %v2902
        %v3741 = vpack.c.b16 %v2905, %v2904
        %v3742 = vpack.c.b16 %v2907, %v2906
        %v3743 = vpack.c.b16 %v2909, %v2908
        %v3744 = vpack.c.b16 %v2911, %v2910
        %v3745 = vpack.c.b16 %v2913, %v2912
        %v3746 = vpack.c.b16 %v2915, %v2914
        %v3747 = vpack.c.b16 %v2917, %v2916
        %v3748 = vpack.c.b16 %v2919, %v2918
        %v3749 = vpack.c.b16 %v2921, %v2920
        %v3750 = vpack.c.b16 %v2923, %v2922
        %v3751 = vpack.c.b16 %v2925, %v2924
        %v3752 = vpack.c.b16 %v2927, %v2926
        %v3753 = vpack.c.b16 %v2929, %v2928
        %v3754 = vpack.c.b16 %v2931, %v2930
        %v3755 = vpack.c.b16 %v2933, %v2932
        %v3756 = vpack.c.b16 %v2935, %v2934
        %v3757 = vpack.c.b16 %v2937, %v2936
        %v3758 = vpack.c.b16 %v2939, %v2938
        %v3759 = vpack.c.b16 %v2941, %v2940
        %v3760 = vpack.c.b16 %v2943, %v2942
        %v3761 = vpack.c.b16 %v2945, %v2944
        %v3762 = vpack.c.b16 %v2947, %v2946
        %v3763 = vpack.c.b16 %v2949, %v2948
        %v3764 = vpack.c.b16 %v2951, %v2950
        %v3765 = vpack.c.b16 %v2953, %v2952
        %v3766 = vpack.c.b16 %v2955, %v2954
        %v3767 = vpack.c.b16 %v2957, %v2956
        %v3768 = vpack.c.b16 %v2959, %v2958
        %v3769 = vpack.c.b16 %v2961, %v2960
        %v3770 = vpack.c.b16 %v2963, %v2962
        %v3771 = vpack.c.b16 %v2965, %v2964
        %v3772 = vpack.c.b16 %v2967, %v2966
        %v3773 = vpack.c.b16 %v2969, %v2968
        %v3774 = vpack.c.b16 %v2971, %v2970
        %v3775 = vpack.c.b16 %v2973, %v2972
        %v3776 = vpack.c.b16 %v2975, %v2974
        %v3777 = vpack.c.b16 %v2977, %v2976
        %v3778 = vpack.c.b16 %v2979, %v2978
        %v3779 = vpack.c.b16 %v2981, %v2980
        %v3780 = vpack.c.b16 %v2983, %v2982
        %v3781 = vpack.c.b16 %v2985, %v2984
        %v3782 = vpack.c.b16 %v2987, %v2986
        %v3783 = vpack.c.b16 %v2989, %v2988
        %v3784 = vpack.c.b16 %v2991, %v2990
        %v3785 = vpack.c.b16 %v2993, %v2992
        %v3786 = vpack.c.b16 %v2995, %v2994
        %v3787 = vpack.c.b16 %v2997, %v2996
        %v3788 = vpack.c.b16 %v2999, %v2998
        %v3789 = vpack.c.b16 %v3001, %v3000
        %v3790 = vpack.c.b16 %v3003, %v3002
        %v3791 = vpack.c.b16 %v3005, %v3004
        %v3792 = vpack.c.b16 %v3007, %v3006
        %v3793 = vpack.c.b16 %v3009, %v3008
        %v3794 = vpack.c.b16 %v3011, %v3010
        %v3795 = vpack.c.b16 %v3013, %v3012
        %v3796 = vpack.c.b16 %v3015, %v3014
        %v3797 = vpack.c.b16 %v3017, %v3016
        %v3798 = vpack.c.b16 %v3019, %v3018
        %v3799 = vpack.c.b16 %v3021, %v3020
        %v3800 = vpack.c.b16 %v3023, %v3022
        %v3801 = vpack.c.b16 %v3025, %v3024
        %v3802 = vpack.c.b16 %v3027, %v3026
        %v3803 = vpack.c.b16 %v3029, %v3028
        %v3804 = vpack.c.b16 %v3031, %v3030
        %v3805 = vpack.c.b16 %v3033, %v3032
        %v3806 = vpack.c.b16 %v3035, %v3034
        %v3807 = vpack.c.b16 %v3037, %v3036
        %v3808 = vpack.c.b16 %v3039, %v3038
        %v3809 = vpack.c.b16 %v3041, %v3040
        %v3810 = vpack.c.b16 %v3043, %v3042
        %v3811 = vpack.c.b16 %v3045, %v3044
        %v3812 = vpack.c.b16 %v3047, %v3046
        %v3813 = vpack.c.b16 %v3049, %v3048
        %v3814 = vpack.c.b16 %v3051, %v3050
        %v3815 = vpack.c.b16 %v3053, %v3052
        %v3816 = vpack.c.b16 %v3055, %v3054
        %v3817 = vpack.c.b16 %v3057, %v3056
        %v3818 = vpack.c.b16 %v3059, %v3058
        %v3819 = vpack.c.b16 %v3061, %v3060
        %v3820 = vpack.c.b16 %v3063, %v3062
        %v3821 = vpack.c.b16 %v3065, %v3064
        %v3822 = vpack.c.b16 %v3067, %v3066
        %v3823 = vpack.c.b16 %v3069, %v3068
        %v3824 = vpack.c.b16 %v3071, %v3070
        %v3825 = vpack.c.b16 %v3073, %v3072
        %v3826 = vpack.c.b16 %v3075, %v3074
        %v3827 = vpack.c.b16 %v3077, %v3076
        %v3828 = vpack.c.b16 %v3079, %v3078
        %v3829 = vpack.c.b16 %v3081, %v3080
        %v3830 = vpack.c.b16 %v3083, %v3082
        %v3831 = vpack.c.b16 %v3085, %v3084
        %v3832 = vpack.c.b16 %v3087, %v3086
        %v3833 = vpack.c.b16 %v3089, %v3088
        %v3834 = vpack.c.b16 %v3091, %v3090
        %v3835 = vpack.c.b16 %v3093, %v3092
        %v3836 = vpack.c.b16 %v3095, %v3094
        %v3837 = vpack.c.b16 %v3097, %v3096
        %v3838 = vpack.c.b16 %v3099, %v3098
        %v3839 = vpack.c.b16 %v3101, %v3100
        %v3840 = vpack.c.b16 %v3103, %v3102
        %v3841 = vpack.c.b16 %v3105, %v3104
        %v3842 = vpack.c.b16 %v3107, %v3106
        %v3843 = vpack.c.b16 %v3109, %v3108
        %v3844 = vpack.c.b16 %v3111, %v3110
        %v3845 = vpack.c.b16 %v3113, %v3112
        %v3846 = vpack.c.b16 %v3115, %v3114
        %v3847 = vpack.c.b16 %v3117, %v3116
        %v3848 = vpack.c.b16 %v3119, %v3118
        %v3849 = vpack.c.b16 %v3121, %v3120
        %v3850 = vpack.c.b16 %v3123, %v3122
        %v3851 = vpack.c.b16 %v3125, %v3124
        %v3852 = vpack.c.b16 %v3127, %v3126
        %v3853 = vpack.c.b16 %v3129, %v3128
        %v3854 = vpack.c.b16 %v3131, %v3130
        %v3855 = vpack.c.b16 %v3133, %v3132
        %v3856 = vpack.c.b16 %v3135, %v3134
        %v3857 = vpack.c.b16 %v3137, %v3136
        %v3858 = vpack.c.b16 %v3139, %v3138
        %v3859 = vpack.c.b16 %v3141, %v3140
        %v3860 = vpack.c.b16 %v3143, %v3142
        %v3861 = vpack.c.b16 %v3145, %v3144
        %v3862 = vpack.c.b16 %v3147, %v3146
        %v3863 = vpack.c.b16 %v3149, %v3148
        %v3864 = vpack.c.b16 %v3151, %v3150
        %v3865 = vpack.c.b16 %v3153, %v3152
        %v3866 = vpack.c.b16 %v3155, %v3154
        %v3867 = vpack.c.b16 %v3157, %v3156
        %v3868 = vpack.c.b16 %v3159, %v3158
        %v3869 = vpack.c.b16 %v3161, %v3160
        %v3870 = vpack.c.b16 %v3163, %v3162
        %v3871 = vpack.c.b16 %v3165, %v3164
        %v3872 = vpack.c.b16 %v3167, %v3166
        %v3873 = vpack.c.b16 %v3169, %v3168
        %v3874 = vpack.c.b16 %v3171, %v3170
        %v3875 = vpack.c.b16 %v3173, %v3172
        %v3876 = vpack.c.b16 %v3175, %v3174
        %v3877 = vpack.c.b16 %v3177, %v3176
        %v3878 = vpack.c.b16 %v3179, %v3178
        %v3879 = vpack.c.b16 %v3181, %v3180
        %v3880 = vpack.c.b16 %v3183, %v3182
        %v3881 = vpack.c.b16 %v3185, %v3184
        %v3882 = vpack.c.b16 %v3187, %v3186
        %v3883 = vpack.c.b16 %v3189, %v3188
        %v3884 = vpack.c.b16 %v3191, %v3190
        %v3885 = vpack.c.b16 %v3193, %v3192
        %v3886 = vpack.c.b16 %v3195, %v3194
        %v3887 = vpack.c.b16 %v3197, %v3196
        %v3888 = vpack.c.b16 %v3199, %v3198
        %v3889 = vpack.c.b16 %v3201, %v3200
        %v3890 = vpack.c.b16 %v3203, %v3202
        %v3891 = vpack.c.b16 %v3205, %v3204
        %v3892 = vpack.c.b16 %v3207, %v3206
        %v3893 = vpack.c.b16 %v3209, %v3208
        %v3894 = vpack.c.b16 %v3211, %v3210
        %v3895 = vpack.c.b16 %v3213, %v3212
        %v3896 = vpack.c.b16 %v3215, %v3214
        %v3897 = vpack.c.b16 %v3217, %v3216
        %v3898 = vpack.c.b16 %v3219, %v3218
        %v3899 = vpack.c.b16 %v3221, %v3220
        %v3900 = vpack.c.b16 %v3223, %v3222
        %v3901 = vpack.c.b16 %v3225, %v3224
        %v3902 = vpack.c.b16 %v3227, %v3226
        %v3903 = vpack.c.b16 %v3229, %v3228
        %v3904 = vpack.c.b16 %v3231, %v3230
        %v3905 = vpack.c.b16 %v3233, %v3232
        %v3906 = vpack.c.b16 %v3235, %v3234
        %v3907 = vpack.c.b16 %v3237, %v3236
        %v3908 = vpack.c.b16 %v3239, %v3238
        %v3909 = vpack.c.b16 %v3241, %v3240
        %v3910 = vpack.c.b16 %v3243, %v3242
        %v3911 = vpack.c.b16 %v3245, %v3244
        %v3912 = vpack.c.b16 %v3247, %v3246
        %v3913 = vpack.c.b16 %v3249, %v3248
        %v3914 = vpack.c.b16 %v3251, %v3250
        %v3915 = vpack.c.b16 %v3253, %v3252
        %v3916 = vpack.c.b16 %v3255, %v3254
        %v3917 = vpack.c.b16 %v3257, %v3256
        %v3918 = vpack.c.b16 %v3259, %v3258
        %v3919 = vpack.c.b16 %v3261, %v3260
        %v3920 = vpack.c.b16 %v3263, %v3262
        %v3921 = vpack.c.b16 %v3265, %v3264
        %v3922 = vpack.c.b16 %v3267, %v3266
        %v3923 = vpack.c.b16 %v3269, %v3268
        %v3924 = vpack.c.b16 %v3271, %v3270
        %v3925 = vpack.c.b16 %v3273, %v3272
        %v3926 = vpack.c.b16 %v3275, %v3274
        %v3927 = vpack.c.b16 %v3277, %v3276
        %v3928 = vpack.c.b16 %v3279, %v3278
        %v3929 = vpack.c.b16 %v3281, %v3280
        %v3930 = vpack.c.b16 %v3283, %v3282
        %v3931 = vpack.c.b16 %v3285, %v3284
        %v3932 = vpack.c.b16 %v3287, %v3286
        %v3933 = vpack.c.b16 %v3289, %v3288
        %v3934 = vpack.c.b16 %v3291, %v3290
        %v3935 = vpack.c.b16 %v3293, %v3292
        %v3936 = vpack.c.b16 %v3295, %v3294
        %v3937 = vpack.c.b16 %v3297, %v3296
        %v3938 = vpack.c.b16 %v3299, %v3298
        %v3939 = vpack.c.b16 %v3301, %v3300
        %v3940 = vpack.c.b16 %v3303, %v3302
        %v3941 = vpack.c.b16 %v3305, %v3304
        %v3942 = vpack.c.b16 %v3307, %v3306
        %v3943 = vpack.c.b16 %v3309, %v3308
        %v3944 = vpack.c.b16 %v3311, %v3310
        %v3945 = vpack.c.b16 %v3313, %v3312
        %v3946 = vpack.c.b16 %v3315, %v3314
        %v3947 = vpack.c.b16 %v3317, %v3316
        %v3948 = vpack.c.b16 %v3319, %v3318
        %v3949 = vpack.c.b16 %v3321, %v3320
        %v3950 = vpack.c.b16 %v3323, %v3322
        %v3951 = vpack.c.b16 %v3325, %v3324
        %v3952 = vpack.c.b16 %v3327, %v3326
        %v3953 = vpack.c.b16 %v3329, %v3328
        %v3954 = vpack.c.b16 %v3331, %v3330
        %v3955 = vpack.c.b16 %v3333, %v3332
        %v3956 = vpack.c.b16 %v3335, %v3334
        %v3957 = vpack.c.b16 %v3337, %v3336
        %v3958 = vpack.c.b16 %v3339, %v3338
        %v3959 = vpack.c.b16 %v3341, %v3340
        %v3960 = vpack.c.b16 %v3343, %v3342
        %v3961 = vpack.c.b16 %v3345, %v3344
        %v3962 = vpack.c.b16 %v3347, %v3346
        %v3963 = vpack.c.b16 %v3349, %v3348
        %v3964 = vpack.c.b16 %v3351, %v3350
        %v3965 = vpack.c.b16 %v3353, %v3352
        %v3966 = vpack.c.b16 %v3355, %v3354
        %v3967 = vpack.c.b16 %v3357, %v3356
        %v3968 = vpack.c.b16 %v3359, %v3358
        %v3969 = vpack.c.b16 %v3361, %v3360
        %v3970 = vpack.c.b16 %v3363, %v3362
        %v3971 = vpack.c.b16 %v3365, %v3364
        %v3972 = vpack.c.b16 %v3367, %v3366
        %v3973 = vpack.c.b16 %v3369, %v3368
        %v3974 = vpack.c.b16 %v3371, %v3370
        %v3975 = vpack.c.b16 %v3373, %v3372
        %v3976 = vpack.c.b16 %v3375, %v3374
        %v3977 = vpack.c.b16 %v3377, %v3376
        %v3978 = vpack.c.b16 %v3379, %v3378
        %v3979 = vpack.c.b16 %v3381, %v3380
        %v3980 = vpack.c.b16 %v3383, %v3382
        %v3981 = vpack.c.b16 %v3385, %v3384
        %v3982 = vpack.c.b16 %v3387, %v3386
        %v3983 = vpack.c.b16 %v3389, %v3388
        %v3984 = vpack.c.b16 %v3391, %v3390
        %v3985 = vpack.c.b16 %v3393, %v3392
        %v3986 = vpack.c.b16 %v3395, %v3394
        %v3987 = vpack.c.b16 %v3397, %v3396
        %v3988 = vpack.c.b16 %v3399, %v3398
        %v3989 = vpack.c.b16 %v3401, %v3400
        %v3990 = vpack.c.b16 %v3403, %v3402
        %v3991 = vpack.c.b16 %v3405, %v3404
        %v3992 = vpack.c.b16 %v3407, %v3406
        %v3993 = vpack.c.b16 %v3409, %v3408
        %v3994 = vpack.c.b16 %v3411, %v3410
        %v3995 = vpack.c.b16 %v3413, %v3412
        %v3996 = vpack.c.b16 %v3415, %v3414
        %v3997 = vpack.c.b16 %v3417, %v3416
        %v3998 = vpack.c.b16 %v3419, %v3418
        %v3999 = vpack.c.b16 %v3421, %v3420
        %v4000 = vpack.c.b16 %v3423, %v3422
        %v4001 = vpack.c.b16 %v3425, %v3424
        %v4002 = vpack.c.b16 %v3427, %v3426
        %v4003 = vpack.c.b16 %v3429, %v3428
        %v4004 = vpack.c.b16 %v3431, %v3430
        %v4005 = vpack.c.b16 %v3433, %v3432
        %v4006 = vpack.c.b16 %v3435, %v3434
        %v4007 = vpack.c.b16 %v3437, %v3436
        %v4008 = vpack.c.b16 %v3439, %v3438
        %v4009 = vpack.c.b16 %v3441, %v3440
        %v4010 = vpack.c.b16 %v3443, %v3442
        %v4011 = vpack.c.b16 %v3445, %v3444
        %v4012 = vpack.c.b16 %v3447, %v3446
        %v4013 = vpack.c.b16 %v3449, %v3448
        %v4014 = vpack.c.b16 %v3451, %v3450
        %v4015 = vpack.c.b16 %v3453, %v3452
        %v4016 = vpack.c.b16 %v3455, %v3454
        %v4017 = vpack.c.b16 %v3457, %v3456
        %v4018 = vpack.c.b16 %v3459, %v3458
        %v4019 = vpack.c.b16 %v3461, %v3460
        %v4020 = vpack.c.b16 %v3463, %v3462
        %v4021 = vpack.c.b16 %v3465, %v3464
        %v4022 = vpack.c.b16 %v3467, %v3466
        %v4023 = vpack.c.b16 %v3469, %v3468
        %v4024 = vpack.c.b16 %v3471, %v3470
        %v4025 = vpack.c.b16 %v3473, %v3472
        %v4026 = vpack.c.b16 %v3475, %v3474
        %v4027 = vpack.c.b16 %v3477, %v3476
        %v4028 = vpack.c.b16 %v3479, %v3478
        %v4029 = vpack.c.b16 %v3481, %v3480
        %v4030 = vpack.c.b16 %v3483, %v3482
        %v4031 = vpack.c.b16 %v3485, %v3484
        %v4032 = vpack.c.b16 %v3487, %v3486
        %v4033 = vpack.c.b16 %v3489, %v3488
        %v4034 = vpack.c.b16 %v3491, %v3490
        %v4035 = vpack.c.b16 %v3493, %v3492
        %v4036 = vpack.c.b16 %v3495, %v3494
        %v4037 = vpack.c.b16 %v3497, %v3496
        %v4038 = vpack.c.b16 %v3499, %v3498
        %v4039 = vpack.c.b16 %v3501, %v3500
        %v4040 = vpack.c.b16 %v3503, %v3502
        %v4041 = vpack.c.b16 %v3505, %v3504
        %v4042 = vpack.c.b16 %v3507, %v3506
        %v4043 = vpack.c.b16 %v3509, %v3508
        %v4044 = vpack.c.b16 %v3511, %v3510
        %v4045 = vpack.c.b16 %v3513, %v3512
        %v4046 = vpack.c.b16 %v3515, %v3514
        %v4047 = vpack.c.b16 %v3517, %v3516
        %v4048 = vpack.c.b16 %v3519, %v3518
        %v4049 = vpack.c.b16 %v3521, %v3520
        %v4050 = vpack.c.b16 %v3523, %v3522
        %v4051 = vpack.c.b16 %v3525, %v3524
        %v4052 = vpack.c.b16 %v3527, %v3526
        %v4053 = vpack.c.b16 %v3529, %v3528
        %v4054 = vpack.c.b16 %v3531, %v3530
        %v4055 = vpack.c.b16 %v3533, %v3532
        %v4056 = vpack.c.b16 %v3535, %v3534
        %v4057 = vpack.c.b16 %v3537, %v3536
        %v4058 = vpack.c.b16 %v3539, %v3538
        %v4059 = vpack.c.b16 %v3541, %v3540
        %v4060 = vpack.c.b16 %v3543, %v3542
        %v4061 = vpack.c.b16 %v3545, %v3544
        %v4062 = vpack.c.b16 %v3547, %v3546
        %v4063 = vpack.c.b16 %v3549, %v3548
        %v4064 = vpack.c.b16 %v3551, %v3550
        %v4065 = vpack.c.b16 %v3553, %v3552
        %4578 = vmatprep.subr.bf16.mxu0 0
        %4579 = vmatpush1.bf16.msra.mxu0 %v3561
        %4580 = vmatprep.subr.bf16.mxu0 0
        %4581 = vmatpush1.bf16.msra.mxu0 %v3560
        %4582 = vmatprep.subr.bf16.mxu0 0
        %4583 = vmatpush1.bf16.msra.mxu0 %v3559
        %4584 = vmatprep.subr.bf16.mxu0 0
        %4585 = vmatpush1.bf16.msra.mxu0 %v3558
        %4586 = vmatprep.subr.bf16.mxu0 0
        %4587 = vmatpush1.bf16.msra.mxu0 %v3557
        %4588 = vmatprep.subr.bf16.mxu0 0
        %4589 = vmatpush1.bf16.msra.mxu0 %v3556
        %4590 = vmatprep.subr.bf16.mxu0 0
        %4591 = vmatpush1.bf16.msra.mxu0 %v3555
        %4592 = vmatprep.subr.bf16.mxu0 0
        %4593 = vmatpush1.bf16.msra.mxu0 %v3554
        %4594 = vmatprep.subr.bf16.mxu0 0
        %4595 = vmatpush2.bf16.msra.mxu0 %v3569
        %4596 = vmatprep.subr.bf16.mxu0 0
        %4597 = vmatpush2.bf16.msra.mxu0 %v3568
        %4598 = vmatprep.subr.bf16.mxu0 0
        %4599 = vmatpush2.bf16.msra.mxu0 %v3567
        %4600 = vmatprep.subr.bf16.mxu0 0
        %4601 = vmatpush2.bf16.msra.mxu0 %v3566
        %4602 = vmatprep.subr.bf16.mxu0 0
        %4603 = vmatpush2.bf16.msra.mxu0 %v3565
        %4604 = vmatprep.subr.bf16.mxu0 0
        %4605 = vmatpush2.bf16.msra.mxu0 %v3564
        %4606 = vmatprep.subr.bf16.mxu0 0
        %4607 = vmatpush2.bf16.msra.mxu0 %v3563
        %4608 = vmatprep.subr.bf16.mxu0 0
        %4609 = vmatpush2.bf16.msra.mxu0 %v3562
        %4610 = vmatprep.mubr.bf16.mxu0 %v1379
        %4611 = vmatmul.mubr.bf16.gmra.mxu0 %v1378
        %v4612 = vpop.f32.mrf.mxu0
        %v4613 = vadd.f32 0.0, %v4612
        %v4614 = vpop.f32.mrf.mxu0
        %v4615 = vpop.f32.mrf.mxu0
        %v4616 = vpop.f32.mrf.mxu0
        %4617 = vdwg.mxu0
        %4618 = vmatprep.subr.bf16.mxu0 0
        %4619 = vmatpush1.bf16.msra.mxu0 %v3577
        %4620 = vmatprep.subr.bf16.mxu0 0
        %4621 = vmatpush1.bf16.msra.mxu0 %v3576
        %4622 = vmatprep.subr.bf16.mxu0 0
        %4623 = vmatpush1.bf16.msra.mxu0 %v3575
        %4624 = vmatprep.subr.bf16.mxu0 0
        %4625 = vmatpush1.bf16.msra.mxu0 %v3574
        %4626 = vmatprep.subr.bf16.mxu0 0
        %4627 = vmatpush1.bf16.msra.mxu0 %v3573
        %4628 = vmatprep.subr.bf16.mxu0 0
        %4629 = vmatpush1.bf16.msra.mxu0 %v3572
        %4630 = vmatprep.subr.bf16.mxu0 0
        %4631 = vmatpush1.bf16.msra.mxu0 %v3571
        %4632 = vmatprep.subr.bf16.mxu0 0
        %4633 = vmatpush1.bf16.msra.mxu0 %v3570
        %4634 = vmatprep.subr.bf16.mxu0 0
        %4635 = vmatpush2.bf16.msra.mxu0 %v3585
        %4636 = vmatprep.subr.bf16.mxu0 0
        %4637 = vmatpush2.bf16.msra.mxu0 %v3584
        %4638 = vmatprep.subr.bf16.mxu0 0
        %4639 = vmatpush2.bf16.msra.mxu0 %v3583
        %4640 = vmatprep.subr.bf16.mxu0 0
        %4641 = vmatpush2.bf16.msra.mxu0 %v3582
        %4642 = vmatprep.subr.bf16.mxu0 0
        %4643 = vmatpush2.bf16.msra.mxu0 %v3581
        %4644 = vmatprep.subr.bf16.mxu0 0
        %4645 = vmatpush2.bf16.msra.mxu0 %v3580
        %4646 = vmatprep.subr.bf16.mxu0 0
        %4647 = vmatpush2.bf16.msra.mxu0 %v3579
        %4648 = vmatprep.subr.bf16.mxu0 0
        %4649 = vmatpush2.bf16.msra.mxu0 %v3578
        %4650 = vmatprep.mubr.bf16.mxu0 %v1381
        %4651 = vmatmul.mubr.bf16.gmra.mxu0 %v1380
        %v4652 = vpop.f32.mrf.mxu0
        %v4653 = vadd.f32 %v4613, %v4652
        %v4654 = vpop.f32.mrf.mxu0
        %v4655 = vpop.f32.mrf.mxu0
        %v4656 = vpop.f32.mrf.mxu0
        %4657 = vdwg.mxu0
        %4658 = vmatprep.subr.bf16.mxu0 0
        %4659 = vmatpush1.bf16.msra.mxu0 %v3593
        %4660 = vmatprep.subr.bf16.mxu0 0
        %4661 = vmatpush1.bf16.msra.mxu0 %v3592
        %4662 = vmatprep.subr.bf16.mxu0 0
        %4663 = vmatpush1.bf16.msra.mxu0 %v3591
        %4664 = vmatprep.subr.bf16.mxu0 0
        %4665 = vmatpush1.bf16.msra.mxu0 %v3590
        %4666 = vmatprep.subr.bf16.mxu0 0
        %4667 = vmatpush1.bf16.msra.mxu0 %v3589
        %4668 = vmatprep.subr.bf16.mxu0 0
        %4669 = vmatpush1.bf16.msra.mxu0 %v3588
        %4670 = vmatprep.subr.bf16.mxu0 0
        %4671 = vmatpush1.bf16.msra.mxu0 %v3587
        %4672 = vmatprep.subr.bf16.mxu0 0
        %4673 = vmatpush1.bf16.msra.mxu0 %v3586
        %4674 = vmatprep.subr.bf16.mxu0 0
        %4675 = vmatpush2.bf16.msra.mxu0 %v3601
        %4676 = vmatprep.subr.bf16.mxu0 0
        %4677 = vmatpush2.bf16.msra.mxu0 %v3600
        %4678 = vmatprep.subr.bf16.mxu0 0
        %4679 = vmatpush2.bf16.msra.mxu0 %v3599
        %4680 = vmatprep.subr.bf16.mxu0 0
        %4681 = vmatpush2.bf16.msra.mxu0 %v3598
        %4682 = vmatprep.subr.bf16.mxu0 0
        %4683 = vmatpush2.bf16.msra.mxu0 %v3597
        %4684 = vmatprep.subr.bf16.mxu0 0
        %4685 = vmatpush2.bf16.msra.mxu0 %v3596
        %4686 = vmatprep.subr.bf16.mxu0 0
        %4687 = vmatpush2.bf16.msra.mxu0 %v3595
        %4688 = vmatprep.subr.bf16.mxu0 0
        %4689 = vmatpush2.bf16.msra.mxu0 %v3594
        %4690 = vmatprep.mubr.bf16.mxu0 %v1383
        %4691 = vmatmul.mubr.bf16.gmra.mxu0 %v1382
        %v4692 = vpop.f32.mrf.mxu0
        %v4693 = vadd.f32 %v4653, %v4692
        %v4694 = vpop.f32.mrf.mxu0
        %v4695 = vpop.f32.mrf.mxu0
        %v4696 = vpop.f32.mrf.mxu0
        %4697 = vdwg.mxu0
        %4698 = vmatprep.subr.bf16.mxu0 0
        %4699 = vmatpush1.bf16.msra.mxu0 %v3609
        %4700 = vmatprep.subr.bf16.mxu0 0
        %4701 = vmatpush1.bf16.msra.mxu0 %v3608
        %4702 = vmatprep.subr.bf16.mxu0 0
        %4703 = vmatpush1.bf16.msra.mxu0 %v3607
        %4704 = vmatprep.subr.bf16.mxu0 0
        %4705 = vmatpush1.bf16.msra.mxu0 %v3606
        %4706 = vmatprep.subr.bf16.mxu0 0
        %4707 = vmatpush1.bf16.msra.mxu0 %v3605
        %4708 = vmatprep.subr.bf16.mxu0 0
        %4709 = vmatpush1.bf16.msra.mxu0 %v3604
        %4710 = vmatprep.subr.bf16.mxu0 0
        %4711 = vmatpush1.bf16.msra.mxu0 %v3603
        %4712 = vmatprep.subr.bf16.mxu0 0
        %4713 = vmatpush1.bf16.msra.mxu0 %v3602
        %4714 = vmatprep.subr.bf16.mxu0 0
        %4715 = vmatpush2.bf16.msra.mxu0 %v3617
        %4716 = vmatprep.subr.bf16.mxu0 0
        %4717 = vmatpush2.bf16.msra.mxu0 %v3616
        %4718 = vmatprep.subr.bf16.mxu0 0
        %4719 = vmatpush2.bf16.msra.mxu0 %v3615
        %4720 = vmatprep.subr.bf16.mxu0 0
        %4721 = vmatpush2.bf16.msra.mxu0 %v3614
        %4722 = vmatprep.subr.bf16.mxu0 0
        %4723 = vmatpush2.bf16.msra.mxu0 %v3613
        %4724 = vmatprep.subr.bf16.mxu0 0
        %4725 = vmatpush2.bf16.msra.mxu0 %v3612
        %4726 = vmatprep.subr.bf16.mxu0 0
        %4727 = vmatpush2.bf16.msra.mxu0 %v3611
        %4728 = vmatprep.subr.bf16.mxu0 0
        %4729 = vmatpush2.bf16.msra.mxu0 %v3610
        %4730 = vmatprep.mubr.bf16.mxu0 %v1385
        %4731 = vmatmul.mubr.bf16.gmra.mxu0 %v1384
        %v4732 = vpop.f32.mrf.mxu0
        %v4733 = vadd.f32 %v4693, %v4732
        %v4734 = vpop.f32.mrf.mxu0
        %v4735 = vpop.f32.mrf.mxu0
        %v4736 = vpop.f32.mrf.mxu0
        %4737 = vdwg.mxu0
        %4738 = vmatprep.subr.bf16.mxu0 0
        %4739 = vmatpush1.bf16.msra.mxu0 %v3625
        %4740 = vmatprep.subr.bf16.mxu0 0
        %4741 = vmatpush1.bf16.msra.mxu0 %v3624
        %4742 = vmatprep.subr.bf16.mxu0 0
        %4743 = vmatpush1.bf16.msra.mxu0 %v3623
        %4744 = vmatprep.subr.bf16.mxu0 0
        %4745 = vmatpush1.bf16.msra.mxu0 %v3622
        %4746 = vmatprep.subr.bf16.mxu0 0
        %4747 = vmatpush1.bf16.msra.mxu0 %v3621
        %4748 = vmatprep.subr.bf16.mxu0 0
        %4749 = vmatpush1.bf16.msra.mxu0 %v3620
        %4750 = vmatprep.subr.bf16.mxu0 0
        %4751 = vmatpush1.bf16.msra.mxu0 %v3619
        %4752 = vmatprep.subr.bf16.mxu0 0
        %4753 = vmatpush1.bf16.msra.mxu0 %v3618
        %4754 = vmatprep.subr.bf16.mxu0 0
        %4755 = vmatpush2.bf16.msra.mxu0 %v3633
        %4756 = vmatprep.subr.bf16.mxu0 0
        %4757 = vmatpush2.bf16.msra.mxu0 %v3632
        %4758 = vmatprep.subr.bf16.mxu0 0
        %4759 = vmatpush2.bf16.msra.mxu0 %v3631
        %4760 = vmatprep.subr.bf16.mxu0 0
        %4761 = vmatpush2.bf16.msra.mxu0 %v3630
        %4762 = vmatprep.subr.bf16.mxu0 0
        %4763 = vmatpush2.bf16.msra.mxu0 %v3629
        %4764 = vmatprep.subr.bf16.mxu0 0
        %4765 = vmatpush2.bf16.msra.mxu0 %v3628
        %4766 = vmatprep.subr.bf16.mxu0 0
        %4767 = vmatpush2.bf16.msra.mxu0 %v3627
        %4768 = vmatprep.subr.bf16.mxu0 0
        %4769 = vmatpush2.bf16.msra.mxu0 %v3626
        %4770 = vmatprep.mubr.bf16.mxu0 %v1387
        %4771 = vmatmul.mubr.bf16.gmra.mxu0 %v1386
        %v4772 = vpop.f32.mrf.mxu0
        %v4773 = vadd.f32 %v4733, %v4772
        %v4774 = vpop.f32.mrf.mxu0
        %v4775 = vpop.f32.mrf.mxu0
        %v4776 = vpop.f32.mrf.mxu0
        %4777 = vdwg.mxu0
        %4778 = vmatprep.subr.bf16.mxu0 0
        %4779 = vmatpush1.bf16.msra.mxu0 %v3641
        %4780 = vmatprep.subr.bf16.mxu0 0
        %4781 = vmatpush1.bf16.msra.mxu0 %v3640
        %4782 = vmatprep.subr.bf16.mxu0 0
        %4783 = vmatpush1.bf16.msra.mxu0 %v3639
        %4784 = vmatprep.subr.bf16.mxu0 0
        %4785 = vmatpush1.bf16.msra.mxu0 %v3638
        %4786 = vmatprep.subr.bf16.mxu0 0
        %4787 = vmatpush1.bf16.msra.mxu0 %v3637
        %4788 = vmatprep.subr.bf16.mxu0 0
        %4789 = vmatpush1.bf16.msra.mxu0 %v3636
        %4790 = vmatprep.subr.bf16.mxu0 0
        %4791 = vmatpush1.bf16.msra.mxu0 %v3635
        %4792 = vmatprep.subr.bf16.mxu0 0
        %4793 = vmatpush1.bf16.msra.mxu0 %v3634
        %4794 = vmatprep.subr.bf16.mxu0 0
        %4795 = vmatpush2.bf16.msra.mxu0 %v3649
        %4796 = vmatprep.subr.bf16.mxu0 0
        %4797 = vmatpush2.bf16.msra.mxu0 %v3648
        %4798 = vmatprep.subr.bf16.mxu0 0
        %4799 = vmatpush2.bf16.msra.mxu0 %v3647
        %4800 = vmatprep.subr.bf16.mxu0 0
        %4801 = vmatpush2.bf16.msra.mxu0 %v3646
        %4802 = vmatprep.subr.bf16.mxu0 0
        %4803 = vmatpush2.bf16.msra.mxu0 %v3645
        %4804 = vmatprep.subr.bf16.mxu0 0
        %4805 = vmatpush2.bf16.msra.mxu0 %v3644
        %4806 = vmatprep.subr.bf16.mxu0 0
        %4807 = vmatpush2.bf16.msra.mxu0 %v3643
        %4808 = vmatprep.subr.bf16.mxu0 0
        %4809 = vmatpush2.bf16.msra.mxu0 %v3642
        %4810 = vmatprep.mubr.bf16.mxu0 %v1389
        %4811 = vmatmul.mubr.bf16.gmra.mxu0 %v1388
        %v4812 = vpop.f32.mrf.mxu0
        %v4813 = vadd.f32 %v4773, %v4812
        %v4814 = vpop.f32.mrf.mxu0
        %v4815 = vpop.f32.mrf.mxu0
        %v4816 = vpop.f32.mrf.mxu0
        %4817 = vdwg.mxu0
        %4818 = vmatprep.subr.bf16.mxu0 0
        %4819 = vmatpush1.bf16.msra.mxu0 %v3657
        %4820 = vmatprep.subr.bf16.mxu0 0
        %4821 = vmatpush1.bf16.msra.mxu0 %v3656
        %4822 = vmatprep.subr.bf16.mxu0 0
        %4823 = vmatpush1.bf16.msra.mxu0 %v3655
        %4824 = vmatprep.subr.bf16.mxu0 0
        %4825 = vmatpush1.bf16.msra.mxu0 %v3654
        %4826 = vmatprep.subr.bf16.mxu0 0
        %4827 = vmatpush1.bf16.msra.mxu0 %v3653
        %4828 = vmatprep.subr.bf16.mxu0 0
        %4829 = vmatpush1.bf16.msra.mxu0 %v3652
        %4830 = vmatprep.subr.bf16.mxu0 0
        %4831 = vmatpush1.bf16.msra.mxu0 %v3651
        %4832 = vmatprep.subr.bf16.mxu0 0
        %4833 = vmatpush1.bf16.msra.mxu0 %v3650
        %4834 = vmatprep.subr.bf16.mxu0 0
        %4835 = vmatpush2.bf16.msra.mxu0 %v3665
        %4836 = vmatprep.subr.bf16.mxu0 0
        %4837 = vmatpush2.bf16.msra.mxu0 %v3664
        %4838 = vmatprep.subr.bf16.mxu0 0
        %4839 = vmatpush2.bf16.msra.mxu0 %v3663
        %4840 = vmatprep.subr.bf16.mxu0 0
        %4841 = vmatpush2.bf16.msra.mxu0 %v3662
        %4842 = vmatprep.subr.bf16.mxu0 0
        %4843 = vmatpush2.bf16.msra.mxu0 %v3661
        %4844 = vmatprep.subr.bf16.mxu0 0
        %4845 = vmatpush2.bf16.msra.mxu0 %v3660
        %4846 = vmatprep.subr.bf16.mxu0 0
        %4847 = vmatpush2.bf16.msra.mxu0 %v3659
        %4848 = vmatprep.subr.bf16.mxu0 0
        %4849 = vmatpush2.bf16.msra.mxu0 %v3658
        %4850 = vmatprep.mubr.bf16.mxu0 %v1391
        %4851 = vmatmul.mubr.bf16.gmra.mxu0 %v1390
        %v4852 = vpop.f32.mrf.mxu0
        %v4853 = vadd.f32 %v4813, %v4852
        %v4854 = vpop.f32.mrf.mxu0
        %v4855 = vpop.f32.mrf.mxu0
        %v4856 = vpop.f32.mrf.mxu0
        %4857 = vdwg.mxu0
        %4858 = vmatprep.subr.bf16.mxu0 0
        %4859 = vmatpush1.bf16.msra.mxu0 %v3673
        %4860 = vmatprep.subr.bf16.mxu0 0
        %4861 = vmatpush1.bf16.msra.mxu0 %v3672
        %4862 = vmatprep.subr.bf16.mxu0 0
        %4863 = vmatpush1.bf16.msra.mxu0 %v3671
        %4864 = vmatprep.subr.bf16.mxu0 0
        %4865 = vmatpush1.bf16.msra.mxu0 %v3670
        %4866 = vmatprep.subr.bf16.mxu0 0
        %4867 = vmatpush1.bf16.msra.mxu0 %v3669
        %4868 = vmatprep.subr.bf16.mxu0 0
        %4869 = vmatpush1.bf16.msra.mxu0 %v3668
        %4870 = vmatprep.subr.bf16.mxu0 0
        %4871 = vmatpush1.bf16.msra.mxu0 %v3667
        %4872 = vmatprep.subr.bf16.mxu0 0
        %4873 = vmatpush1.bf16.msra.mxu0 %v3666
        %4874 = vmatprep.subr.bf16.mxu0 0
        %4875 = vmatpush2.bf16.msra.mxu0 %v3681
        %4876 = vmatprep.subr.bf16.mxu0 0
        %4877 = vmatpush2.bf16.msra.mxu0 %v3680
        %4878 = vmatprep.subr.bf16.mxu0 0
        %4879 = vmatpush2.bf16.msra.mxu0 %v3679
        %4880 = vmatprep.subr.bf16.mxu0 0
        %4881 = vmatpush2.bf16.msra.mxu0 %v3678
        %4882 = vmatprep.subr.bf16.mxu0 0
        %4883 = vmatpush2.bf16.msra.mxu0 %v3677
        %4884 = vmatprep.subr.bf16.mxu0 0
        %4885 = vmatpush2.bf16.msra.mxu0 %v3676
        %4886 = vmatprep.subr.bf16.mxu0 0
        %4887 = vmatpush2.bf16.msra.mxu0 %v3675
        %4888 = vmatprep.subr.bf16.mxu0 0
        %4889 = vmatpush2.bf16.msra.mxu0 %v3674
        %4890 = vmatprep.mubr.bf16.mxu0 %v1393
        %4891 = vmatmul.mubr.bf16.gmra.mxu0 %v1392
        %v4892 = vpop.f32.mrf.mxu0
        %v4893 = vadd.f32 %v4853, %v4892
        %v4894 = vpop.f32.mrf.mxu0
        %v4895 = vpop.f32.mrf.mxu0
        %v4896 = vpop.f32.mrf.mxu0
        %4897 = vdwg.mxu0
        %4898 = vmatprep.subr.bf16.mxu0 0
        %4899 = vmatpush1.bf16.msra.mxu0 %v3689
        %4900 = vmatprep.subr.bf16.mxu0 0
        %4901 = vmatpush1.bf16.msra.mxu0 %v3688
        %4902 = vmatprep.subr.bf16.mxu0 0
        %4903 = vmatpush1.bf16.msra.mxu0 %v3687
        %4904 = vmatprep.subr.bf16.mxu0 0
        %4905 = vmatpush1.bf16.msra.mxu0 %v3686
        %4906 = vmatprep.subr.bf16.mxu0 0
        %4907 = vmatpush1.bf16.msra.mxu0 %v3685
        %4908 = vmatprep.subr.bf16.mxu0 0
        %4909 = vmatpush1.bf16.msra.mxu0 %v3684
        %4910 = vmatprep.subr.bf16.mxu0 0
        %4911 = vmatpush1.bf16.msra.mxu0 %v3683
        %4912 = vmatprep.subr.bf16.mxu0 0
        %4913 = vmatpush1.bf16.msra.mxu0 %v3682
        %4914 = vmatprep.subr.bf16.mxu0 0
        %4915 = vmatpush2.bf16.msra.mxu0 %v3697
        %4916 = vmatprep.subr.bf16.mxu0 0
        %4917 = vmatpush2.bf16.msra.mxu0 %v3696
        %4918 = vmatprep.subr.bf16.mxu0 0
        %4919 = vmatpush2.bf16.msra.mxu0 %v3695
        %4920 = vmatprep.subr.bf16.mxu0 0
        %4921 = vmatpush2.bf16.msra.mxu0 %v3694
        %4922 = vmatprep.subr.bf16.mxu0 0
        %4923 = vmatpush2.bf16.msra.mxu0 %v3693
        %4924 = vmatprep.subr.bf16.mxu0 0
        %4925 = vmatpush2.bf16.msra.mxu0 %v3692
        %4926 = vmatprep.subr.bf16.mxu0 0
        %4927 = vmatpush2.bf16.msra.mxu0 %v3691
        %4928 = vmatprep.subr.bf16.mxu0 0
        %4929 = vmatpush2.bf16.msra.mxu0 %v3690
        %4930 = vmatprep.mubr.bf16.mxu0 %v1395
        %4931 = vmatmul.mubr.bf16.gmra.mxu0 %v1394
        %v4932 = vpop.f32.mrf.mxu0
        %v4933 = vadd.f32 %v4893, %v4932
        %v4934 = vpop.f32.mrf.mxu0
        %v4935 = vpop.f32.mrf.mxu0
        %v4936 = vpop.f32.mrf.mxu0
        %4937 = vdwg.mxu0
        %4938 = vmatprep.subr.bf16.mxu0 0
        %4939 = vmatpush1.bf16.msra.mxu0 %v3705
        %4940 = vmatprep.subr.bf16.mxu0 0
        %4941 = vmatpush1.bf16.msra.mxu0 %v3704
        %4942 = vmatprep.subr.bf16.mxu0 0
        %4943 = vmatpush1.bf16.msra.mxu0 %v3703
        %4944 = vmatprep.subr.bf16.mxu0 0
        %4945 = vmatpush1.bf16.msra.mxu0 %v3702
        %4946 = vmatprep.subr.bf16.mxu0 0
        %4947 = vmatpush1.bf16.msra.mxu0 %v3701
        %4948 = vmatprep.subr.bf16.mxu0 0
        %4949 = vmatpush1.bf16.msra.mxu0 %v3700
        %4950 = vmatprep.subr.bf16.mxu0 0
        %4951 = vmatpush1.bf16.msra.mxu0 %v3699
        %4952 = vmatprep.subr.bf16.mxu0 0
        %4953 = vmatpush1.bf16.msra.mxu0 %v3698
        %4954 = vmatprep.subr.bf16.mxu0 0
        %4955 = vmatpush2.bf16.msra.mxu0 %v3713
        %4956 = vmatprep.subr.bf16.mxu0 0
        %4957 = vmatpush2.bf16.msra.mxu0 %v3712
        %4958 = vmatprep.subr.bf16.mxu0 0
        %4959 = vmatpush2.bf16.msra.mxu0 %v3711
        %4960 = vmatprep.subr.bf16.mxu0 0
        %4961 = vmatpush2.bf16.msra.mxu0 %v3710
        %4962 = vmatprep.subr.bf16.mxu0 0
        %4963 = vmatpush2.bf16.msra.mxu0 %v3709
        %4964 = vmatprep.subr.bf16.mxu0 0
        %4965 = vmatpush2.bf16.msra.mxu0 %v3708
        %4966 = vmatprep.subr.bf16.mxu0 0
        %4967 = vmatpush2.bf16.msra.mxu0 %v3707
        %4968 = vmatprep.subr.bf16.mxu0 0
        %4969 = vmatpush2.bf16.msra.mxu0 %v3706
        %4970 = vmatprep.mubr.bf16.mxu0 %v1397
        %4971 = vmatmul.mubr.bf16.gmra.mxu0 %v1396
        %v4972 = vpop.f32.mrf.mxu0
        %v4973 = vadd.f32 %v4933, %v4972
        %v4974 = vpop.f32.mrf.mxu0
        %v4975 = vpop.f32.mrf.mxu0
        %v4976 = vpop.f32.mrf.mxu0
        %4977 = vdwg.mxu0
        %4978 = vmatprep.subr.bf16.mxu0 0
        %4979 = vmatpush1.bf16.msra.mxu0 %v3721
        %4980 = vmatprep.subr.bf16.mxu0 0
        %4981 = vmatpush1.bf16.msra.mxu0 %v3720
        %4982 = vmatprep.subr.bf16.mxu0 0
        %4983 = vmatpush1.bf16.msra.mxu0 %v3719
        %4984 = vmatprep.subr.bf16.mxu0 0
        %4985 = vmatpush1.bf16.msra.mxu0 %v3718
        %4986 = vmatprep.subr.bf16.mxu0 0
        %4987 = vmatpush1.bf16.msra.mxu0 %v3717
        %4988 = vmatprep.subr.bf16.mxu0 0
        %4989 = vmatpush1.bf16.msra.mxu0 %v3716
        %4990 = vmatprep.subr.bf16.mxu0 0
        %4991 = vmatpush1.bf16.msra.mxu0 %v3715
        %4992 = vmatprep.subr.bf16.mxu0 0
        %4993 = vmatpush1.bf16.msra.mxu0 %v3714
        %4994 = vmatprep.subr.bf16.mxu0 0
        %4995 = vmatpush2.bf16.msra.mxu0 %v3729
        %4996 = vmatprep.subr.bf16.mxu0 0
        %4997 = vmatpush2.bf16.msra.mxu0 %v3728
        %4998 = vmatprep.subr.bf16.mxu0 0
        %4999 = vmatpush2.bf16.msra.mxu0 %v3727
        %5000 = vmatprep.subr.bf16.mxu0 0
        %5001 = vmatpush2.bf16.msra.mxu0 %v3726
        %5002 = vmatprep.subr.bf16.mxu0 0
        %5003 = vmatpush2.bf16.msra.mxu0 %v3725
        %5004 = vmatprep.subr.bf16.mxu0 0
        %5005 = vmatpush2.bf16.msra.mxu0 %v3724
        %5006 = vmatprep.subr.bf16.mxu0 0
        %5007 = vmatpush2.bf16.msra.mxu0 %v3723
        %5008 = vmatprep.subr.bf16.mxu0 0
        %5009 = vmatpush2.bf16.msra.mxu0 %v3722
        %5010 = vmatprep.mubr.bf16.mxu0 %v1399
        %5011 = vmatmul.mubr.bf16.gmra.mxu0 %v1398
        %v5012 = vpop.f32.mrf.mxu0
        %v5013 = vadd.f32 %v4973, %v5012
        %v5014 = vpop.f32.mrf.mxu0
        %v5015 = vpop.f32.mrf.mxu0
        %v5016 = vpop.f32.mrf.mxu0
        %5017 = vdwg.mxu0
        %5018 = vmatprep.subr.bf16.mxu0 0
        %5019 = vmatpush1.bf16.msra.mxu0 %v3737
        %5020 = vmatprep.subr.bf16.mxu0 0
        %5021 = vmatpush1.bf16.msra.mxu0 %v3736
        %5022 = vmatprep.subr.bf16.mxu0 0
        %5023 = vmatpush1.bf16.msra.mxu0 %v3735
        %5024 = vmatprep.subr.bf16.mxu0 0
        %5025 = vmatpush1.bf16.msra.mxu0 %v3734
        %5026 = vmatprep.subr.bf16.mxu0 0
        %5027 = vmatpush1.bf16.msra.mxu0 %v3733
        %5028 = vmatprep.subr.bf16.mxu0 0
        %5029 = vmatpush1.bf16.msra.mxu0 %v3732
        %5030 = vmatprep.subr.bf16.mxu0 0
        %5031 = vmatpush1.bf16.msra.mxu0 %v3731
        %5032 = vmatprep.subr.bf16.mxu0 0
        %5033 = vmatpush1.bf16.msra.mxu0 %v3730
        %5034 = vmatprep.subr.bf16.mxu0 0
        %5035 = vmatpush2.bf16.msra.mxu0 %v3745
        %5036 = vmatprep.subr.bf16.mxu0 0
        %5037 = vmatpush2.bf16.msra.mxu0 %v3744
        %5038 = vmatprep.subr.bf16.mxu0 0
        %5039 = vmatpush2.bf16.msra.mxu0 %v3743
        %5040 = vmatprep.subr.bf16.mxu0 0
        %5041 = vmatpush2.bf16.msra.mxu0 %v3742
        %5042 = vmatprep.subr.bf16.mxu0 0
        %5043 = vmatpush2.bf16.msra.mxu0 %v3741
        %5044 = vmatprep.subr.bf16.mxu0 0
        %5045 = vmatpush2.bf16.msra.mxu0 %v3740
        %5046 = vmatprep.subr.bf16.mxu0 0
        %5047 = vmatpush2.bf16.msra.mxu0 %v3739
        %5048 = vmatprep.subr.bf16.mxu0 0
        %5049 = vmatpush2.bf16.msra.mxu0 %v3738
        %5050 = vmatprep.mubr.bf16.mxu0 %v1401
        %5051 = vmatmul.mubr.bf16.gmra.mxu0 %v1400
        %v5052 = vpop.f32.mrf.mxu0
        %v5053 = vadd.f32 %v5013, %v5052
        %v5054 = vpop.f32.mrf.mxu0
        %v5055 = vpop.f32.mrf.mxu0
        %v5056 = vpop.f32.mrf.mxu0
        %5057 = vdwg.mxu0
        %5058 = vmatprep.subr.bf16.mxu0 0
        %5059 = vmatpush1.bf16.msra.mxu0 %v3753
        %5060 = vmatprep.subr.bf16.mxu0 0
        %5061 = vmatpush1.bf16.msra.mxu0 %v3752
        %5062 = vmatprep.subr.bf16.mxu0 0
        %5063 = vmatpush1.bf16.msra.mxu0 %v3751
        %5064 = vmatprep.subr.bf16.mxu0 0
        %5065 = vmatpush1.bf16.msra.mxu0 %v3750
        %5066 = vmatprep.subr.bf16.mxu0 0
        %5067 = vmatpush1.bf16.msra.mxu0 %v3749
        %5068 = vmatprep.subr.bf16.mxu0 0
        %5069 = vmatpush1.bf16.msra.mxu0 %v3748
        %5070 = vmatprep.subr.bf16.mxu0 0
        %5071 = vmatpush1.bf16.msra.mxu0 %v3747
        %5072 = vmatprep.subr.bf16.mxu0 0
        %5073 = vmatpush1.bf16.msra.mxu0 %v3746
        %5074 = vmatprep.subr.bf16.mxu0 0
        %5075 = vmatpush2.bf16.msra.mxu0 %v3761
        %5076 = vmatprep.subr.bf16.mxu0 0
        %5077 = vmatpush2.bf16.msra.mxu0 %v3760
        %5078 = vmatprep.subr.bf16.mxu0 0
        %5079 = vmatpush2.bf16.msra.mxu0 %v3759
        %5080 = vmatprep.subr.bf16.mxu0 0
        %5081 = vmatpush2.bf16.msra.mxu0 %v3758
        %5082 = vmatprep.subr.bf16.mxu0 0
        %5083 = vmatpush2.bf16.msra.mxu0 %v3757
        %5084 = vmatprep.subr.bf16.mxu0 0
        %5085 = vmatpush2.bf16.msra.mxu0 %v3756
        %5086 = vmatprep.subr.bf16.mxu0 0
        %5087 = vmatpush2.bf16.msra.mxu0 %v3755
        %5088 = vmatprep.subr.bf16.mxu0 0
        %5089 = vmatpush2.bf16.msra.mxu0 %v3754
        %5090 = vmatprep.mubr.bf16.mxu0 %v1403
        %5091 = vmatmul.mubr.bf16.gmra.mxu0 %v1402
        %v5092 = vpop.f32.mrf.mxu0
        %v5093 = vadd.f32 %v5053, %v5092
        %v5094 = vpop.f32.mrf.mxu0
        %v5095 = vpop.f32.mrf.mxu0
        %v5096 = vpop.f32.mrf.mxu0
        %5097 = vdwg.mxu0
        %5098 = vmatprep.subr.bf16.mxu0 0
        %5099 = vmatpush1.bf16.msra.mxu0 %v3769
        %5100 = vmatprep.subr.bf16.mxu0 0
        %5101 = vmatpush1.bf16.msra.mxu0 %v3768
        %5102 = vmatprep.subr.bf16.mxu0 0
        %5103 = vmatpush1.bf16.msra.mxu0 %v3767
        %5104 = vmatprep.subr.bf16.mxu0 0
        %5105 = vmatpush1.bf16.msra.mxu0 %v3766
        %5106 = vmatprep.subr.bf16.mxu0 0
        %5107 = vmatpush1.bf16.msra.mxu0 %v3765
        %5108 = vmatprep.subr.bf16.mxu0 0
        %5109 = vmatpush1.bf16.msra.mxu0 %v3764
        %5110 = vmatprep.subr.bf16.mxu0 0
        %5111 = vmatpush1.bf16.msra.mxu0 %v3763
        %5112 = vmatprep.subr.bf16.mxu0 0
        %5113 = vmatpush1.bf16.msra.mxu0 %v3762
        %5114 = vmatprep.subr.bf16.mxu0 0
        %5115 = vmatpush2.bf16.msra.mxu0 %v3777
        %5116 = vmatprep.subr.bf16.mxu0 0
        %5117 = vmatpush2.bf16.msra.mxu0 %v3776
        %5118 = vmatprep.subr.bf16.mxu0 0
        %5119 = vmatpush2.bf16.msra.mxu0 %v3775
        %5120 = vmatprep.subr.bf16.mxu0 0
        %5121 = vmatpush2.bf16.msra.mxu0 %v3774
        %5122 = vmatprep.subr.bf16.mxu0 0
        %5123 = vmatpush2.bf16.msra.mxu0 %v3773
        %5124 = vmatprep.subr.bf16.mxu0 0
        %5125 = vmatpush2.bf16.msra.mxu0 %v3772
        %5126 = vmatprep.subr.bf16.mxu0 0
        %5127 = vmatpush2.bf16.msra.mxu0 %v3771
        %5128 = vmatprep.subr.bf16.mxu0 0
        %5129 = vmatpush2.bf16.msra.mxu0 %v3770
        %5130 = vmatprep.mubr.bf16.mxu0 %v1405
        %5131 = vmatmul.mubr.bf16.gmra.mxu0 %v1404
        %v5132 = vpop.f32.mrf.mxu0
        %v5133 = vadd.f32 %v5093, %v5132
        %v5134 = vpop.f32.mrf.mxu0
        %v5135 = vpop.f32.mrf.mxu0
        %v5136 = vpop.f32.mrf.mxu0
        %5137 = vdwg.mxu0
        %5138 = vmatprep.subr.bf16.mxu0 0
        %5139 = vmatpush1.bf16.msra.mxu0 %v3785
        %5140 = vmatprep.subr.bf16.mxu0 0
        %5141 = vmatpush1.bf16.msra.mxu0 %v3784
        %5142 = vmatprep.subr.bf16.mxu0 0
        %5143 = vmatpush1.bf16.msra.mxu0 %v3783
        %5144 = vmatprep.subr.bf16.mxu0 0
        %5145 = vmatpush1.bf16.msra.mxu0 %v3782
        %5146 = vmatprep.subr.bf16.mxu0 0
        %5147 = vmatpush1.bf16.msra.mxu0 %v3781
        %5148 = vmatprep.subr.bf16.mxu0 0
        %5149 = vmatpush1.bf16.msra.mxu0 %v3780
        %5150 = vmatprep.subr.bf16.mxu0 0
        %5151 = vmatpush1.bf16.msra.mxu0 %v3779
        %5152 = vmatprep.subr.bf16.mxu0 0
        %5153 = vmatpush1.bf16.msra.mxu0 %v3778
        %5154 = vmatprep.subr.bf16.mxu0 0
        %5155 = vmatpush2.bf16.msra.mxu0 %v3793
        %5156 = vmatprep.subr.bf16.mxu0 0
        %5157 = vmatpush2.bf16.msra.mxu0 %v3792
        %5158 = vmatprep.subr.bf16.mxu0 0
        %5159 = vmatpush2.bf16.msra.mxu0 %v3791
        %5160 = vmatprep.subr.bf16.mxu0 0
        %5161 = vmatpush2.bf16.msra.mxu0 %v3790
        %5162 = vmatprep.subr.bf16.mxu0 0
        %5163 = vmatpush2.bf16.msra.mxu0 %v3789
        %5164 = vmatprep.subr.bf16.mxu0 0
        %5165 = vmatpush2.bf16.msra.mxu0 %v3788
        %5166 = vmatprep.subr.bf16.mxu0 0
        %5167 = vmatpush2.bf16.msra.mxu0 %v3787
        %5168 = vmatprep.subr.bf16.mxu0 0
        %5169 = vmatpush2.bf16.msra.mxu0 %v3786
        %5170 = vmatprep.mubr.bf16.mxu0 %v1407
        %5171 = vmatmul.mubr.bf16.gmra.mxu0 %v1406
        %v5172 = vpop.f32.mrf.mxu0
        %v5173 = vadd.f32 %v5133, %v5172
        %v5174 = vpop.f32.mrf.mxu0
        %v5175 = vpop.f32.mrf.mxu0
        %v5176 = vpop.f32.mrf.mxu0
        %5177 = vdwg.mxu0
        %5178 = vmatprep.subr.bf16.mxu0 0
        %5179 = vmatpush1.bf16.msra.mxu0 %v3801
        %5180 = vmatprep.subr.bf16.mxu0 0
        %5181 = vmatpush1.bf16.msra.mxu0 %v3800
        %5182 = vmatprep.subr.bf16.mxu0 0
        %5183 = vmatpush1.bf16.msra.mxu0 %v3799
        %5184 = vmatprep.subr.bf16.mxu0 0
        %5185 = vmatpush1.bf16.msra.mxu0 %v3798
        %5186 = vmatprep.subr.bf16.mxu0 0
        %5187 = vmatpush1.bf16.msra.mxu0 %v3797
        %5188 = vmatprep.subr.bf16.mxu0 0
        %5189 = vmatpush1.bf16.msra.mxu0 %v3796
        %5190 = vmatprep.subr.bf16.mxu0 0
        %5191 = vmatpush1.bf16.msra.mxu0 %v3795
        %5192 = vmatprep.subr.bf16.mxu0 0
        %5193 = vmatpush1.bf16.msra.mxu0 %v3794
        %5194 = vmatprep.subr.bf16.mxu0 0
        %5195 = vmatpush2.bf16.msra.mxu0 %v3809
        %5196 = vmatprep.subr.bf16.mxu0 0
        %5197 = vmatpush2.bf16.msra.mxu0 %v3808
        %5198 = vmatprep.subr.bf16.mxu0 0
        %5199 = vmatpush2.bf16.msra.mxu0 %v3807
        %5200 = vmatprep.subr.bf16.mxu0 0
        %5201 = vmatpush2.bf16.msra.mxu0 %v3806
        %5202 = vmatprep.subr.bf16.mxu0 0
        %5203 = vmatpush2.bf16.msra.mxu0 %v3805
        %5204 = vmatprep.subr.bf16.mxu0 0
        %5205 = vmatpush2.bf16.msra.mxu0 %v3804
        %5206 = vmatprep.subr.bf16.mxu0 0
        %5207 = vmatpush2.bf16.msra.mxu0 %v3803
        %5208 = vmatprep.subr.bf16.mxu0 0
        %5209 = vmatpush2.bf16.msra.mxu0 %v3802
        %5210 = vmatprep.mubr.bf16.mxu0 %v1409
        %5211 = vmatmul.mubr.bf16.gmra.mxu0 %v1408
        %v5212 = vpop.f32.mrf.mxu0
        %v5213 = vadd.f32 %v5173, %v5212
        %v5214 = vpop.f32.mrf.mxu0
        %v5215 = vpop.f32.mrf.mxu0
        %v5216 = vpop.f32.mrf.mxu0
        %5217 = vdwg.mxu0
        %5218 = vmatprep.subr.bf16.mxu0 0
        %5219 = vmatpush1.bf16.msra.mxu0 %v3817
        %5220 = vmatprep.subr.bf16.mxu0 0
        %5221 = vmatpush1.bf16.msra.mxu0 %v3816
        %5222 = vmatprep.subr.bf16.mxu0 0
        %5223 = vmatpush1.bf16.msra.mxu0 %v3815
        %5224 = vmatprep.subr.bf16.mxu0 0
        %5225 = vmatpush1.bf16.msra.mxu0 %v3814
        %5226 = vmatprep.subr.bf16.mxu0 0
        %5227 = vmatpush1.bf16.msra.mxu0 %v3813
        %5228 = vmatprep.subr.bf16.mxu0 0
        %5229 = vmatpush1.bf16.msra.mxu0 %v3812
        %5230 = vmatprep.subr.bf16.mxu0 0
        %5231 = vmatpush1.bf16.msra.mxu0 %v3811
        %5232 = vmatprep.subr.bf16.mxu0 0
        %5233 = vmatpush1.bf16.msra.mxu0 %v3810
        %5234 = vmatprep.subr.bf16.mxu0 0
        %5235 = vmatpush2.bf16.msra.mxu0 %v3825
        %5236 = vmatprep.subr.bf16.mxu0 0
        %5237 = vmatpush2.bf16.msra.mxu0 %v3824
        %5238 = vmatprep.subr.bf16.mxu0 0
        %5239 = vmatpush2.bf16.msra.mxu0 %v3823
        %5240 = vmatprep.subr.bf16.mxu0 0
        %5241 = vmatpush2.bf16.msra.mxu0 %v3822
        %5242 = vmatprep.subr.bf16.mxu0 0
        %5243 = vmatpush2.bf16.msra.mxu0 %v3821
        %5244 = vmatprep.subr.bf16.mxu0 0
        %5245 = vmatpush2.bf16.msra.mxu0 %v3820
        %5246 = vmatprep.subr.bf16.mxu0 0
        %5247 = vmatpush2.bf16.msra.mxu0 %v3819
        %5248 = vmatprep.subr.bf16.mxu0 0
        %5249 = vmatpush2.bf16.msra.mxu0 %v3818
        %5250 = vmatprep.mubr.bf16.mxu0 %v1411
        %5251 = vmatmul.mubr.bf16.gmra.mxu0 %v1410
        %v5252 = vpop.f32.mrf.mxu0
        %v5253 = vadd.f32 %v5213, %v5252
        %v5254 = vpop.f32.mrf.mxu0
        %v5255 = vpop.f32.mrf.mxu0
        %v5256 = vpop.f32.mrf.mxu0
        %5257 = vdwg.mxu0
        %5258 = vmatprep.subr.bf16.mxu0 0
        %5259 = vmatpush1.bf16.msra.mxu0 %v3833
        %5260 = vmatprep.subr.bf16.mxu0 0
        %5261 = vmatpush1.bf16.msra.mxu0 %v3832
        %5262 = vmatprep.subr.bf16.mxu0 0
        %5263 = vmatpush1.bf16.msra.mxu0 %v3831
        %5264 = vmatprep.subr.bf16.mxu0 0
        %5265 = vmatpush1.bf16.msra.mxu0 %v3830
        %5266 = vmatprep.subr.bf16.mxu0 0
        %5267 = vmatpush1.bf16.msra.mxu0 %v3829
        %5268 = vmatprep.subr.bf16.mxu0 0
        %5269 = vmatpush1.bf16.msra.mxu0 %v3828
        %5270 = vmatprep.subr.bf16.mxu0 0
        %5271 = vmatpush1.bf16.msra.mxu0 %v3827
        %5272 = vmatprep.subr.bf16.mxu0 0
        %5273 = vmatpush1.bf16.msra.mxu0 %v3826
        %5274 = vmatprep.subr.bf16.mxu0 0
        %5275 = vmatpush2.bf16.msra.mxu0 %v3841
        %5276 = vmatprep.subr.bf16.mxu0 0
        %5277 = vmatpush2.bf16.msra.mxu0 %v3840
        %5278 = vmatprep.subr.bf16.mxu0 0
        %5279 = vmatpush2.bf16.msra.mxu0 %v3839
        %5280 = vmatprep.subr.bf16.mxu0 0
        %5281 = vmatpush2.bf16.msra.mxu0 %v3838
        %5282 = vmatprep.subr.bf16.mxu0 0
        %5283 = vmatpush2.bf16.msra.mxu0 %v3837
        %5284 = vmatprep.subr.bf16.mxu0 0
        %5285 = vmatpush2.bf16.msra.mxu0 %v3836
        %5286 = vmatprep.subr.bf16.mxu0 0
        %5287 = vmatpush2.bf16.msra.mxu0 %v3835
        %5288 = vmatprep.subr.bf16.mxu0 0
        %5289 = vmatpush2.bf16.msra.mxu0 %v3834
        %5290 = vmatprep.mubr.bf16.mxu0 %v1413
        %5291 = vmatmul.mubr.bf16.gmra.mxu0 %v1412
        %v5292 = vpop.f32.mrf.mxu0
        %v5293 = vadd.f32 %v5253, %v5292
        %v5294 = vpop.f32.mrf.mxu0
        %v5295 = vpop.f32.mrf.mxu0
        %v5296 = vpop.f32.mrf.mxu0
        %5297 = vdwg.mxu0
        %5298 = vmatprep.subr.bf16.mxu0 0
        %5299 = vmatpush1.bf16.msra.mxu0 %v3849
        %5300 = vmatprep.subr.bf16.mxu0 0
        %5301 = vmatpush1.bf16.msra.mxu0 %v3848
        %5302 = vmatprep.subr.bf16.mxu0 0
        %5303 = vmatpush1.bf16.msra.mxu0 %v3847
        %5304 = vmatprep.subr.bf16.mxu0 0
        %5305 = vmatpush1.bf16.msra.mxu0 %v3846
        %5306 = vmatprep.subr.bf16.mxu0 0
        %5307 = vmatpush1.bf16.msra.mxu0 %v3845
        %5308 = vmatprep.subr.bf16.mxu0 0
        %5309 = vmatpush1.bf16.msra.mxu0 %v3844
        %5310 = vmatprep.subr.bf16.mxu0 0
        %5311 = vmatpush1.bf16.msra.mxu0 %v3843
        %5312 = vmatprep.subr.bf16.mxu0 0
        %5313 = vmatpush1.bf16.msra.mxu0 %v3842
        %5314 = vmatprep.subr.bf16.mxu0 0
        %5315 = vmatpush2.bf16.msra.mxu0 %v3857
        %5316 = vmatprep.subr.bf16.mxu0 0
        %5317 = vmatpush2.bf16.msra.mxu0 %v3856
        %5318 = vmatprep.subr.bf16.mxu0 0
        %5319 = vmatpush2.bf16.msra.mxu0 %v3855
        %5320 = vmatprep.subr.bf16.mxu0 0
        %5321 = vmatpush2.bf16.msra.mxu0 %v3854
        %5322 = vmatprep.subr.bf16.mxu0 0
        %5323 = vmatpush2.bf16.msra.mxu0 %v3853
        %5324 = vmatprep.subr.bf16.mxu0 0
        %5325 = vmatpush2.bf16.msra.mxu0 %v3852
        %5326 = vmatprep.subr.bf16.mxu0 0
        %5327 = vmatpush2.bf16.msra.mxu0 %v3851
        %5328 = vmatprep.subr.bf16.mxu0 0
        %5329 = vmatpush2.bf16.msra.mxu0 %v3850
        %5330 = vmatprep.mubr.bf16.mxu0 %v1415
        %5331 = vmatmul.mubr.bf16.gmra.mxu0 %v1414
        %v5332 = vpop.f32.mrf.mxu0
        %v5333 = vadd.f32 %v5293, %v5332
        %v5334 = vpop.f32.mrf.mxu0
        %v5335 = vpop.f32.mrf.mxu0
        %v5336 = vpop.f32.mrf.mxu0
        %5337 = vdwg.mxu0
        %5338 = vmatprep.subr.bf16.mxu0 0
        %5339 = vmatpush1.bf16.msra.mxu0 %v3865
        %5340 = vmatprep.subr.bf16.mxu0 0
        %5341 = vmatpush1.bf16.msra.mxu0 %v3864
        %5342 = vmatprep.subr.bf16.mxu0 0
        %5343 = vmatpush1.bf16.msra.mxu0 %v3863
        %5344 = vmatprep.subr.bf16.mxu0 0
        %5345 = vmatpush1.bf16.msra.mxu0 %v3862
        %5346 = vmatprep.subr.bf16.mxu0 0
        %5347 = vmatpush1.bf16.msra.mxu0 %v3861
        %5348 = vmatprep.subr.bf16.mxu0 0
        %5349 = vmatpush1.bf16.msra.mxu0 %v3860
        %5350 = vmatprep.subr.bf16.mxu0 0
        %5351 = vmatpush1.bf16.msra.mxu0 %v3859
        %5352 = vmatprep.subr.bf16.mxu0 0
        %5353 = vmatpush1.bf16.msra.mxu0 %v3858
        %5354 = vmatprep.subr.bf16.mxu0 0
        %5355 = vmatpush2.bf16.msra.mxu0 %v3873
        %5356 = vmatprep.subr.bf16.mxu0 0
        %5357 = vmatpush2.bf16.msra.mxu0 %v3872
        %5358 = vmatprep.subr.bf16.mxu0 0
        %5359 = vmatpush2.bf16.msra.mxu0 %v3871
        %5360 = vmatprep.subr.bf16.mxu0 0
        %5361 = vmatpush2.bf16.msra.mxu0 %v3870
        %5362 = vmatprep.subr.bf16.mxu0 0
        %5363 = vmatpush2.bf16.msra.mxu0 %v3869
        %5364 = vmatprep.subr.bf16.mxu0 0
        %5365 = vmatpush2.bf16.msra.mxu0 %v3868
        %5366 = vmatprep.subr.bf16.mxu0 0
        %5367 = vmatpush2.bf16.msra.mxu0 %v3867
        %5368 = vmatprep.subr.bf16.mxu0 0
        %5369 = vmatpush2.bf16.msra.mxu0 %v3866
        %5370 = vmatprep.mubr.bf16.mxu0 %v1417
        %5371 = vmatmul.mubr.bf16.gmra.mxu0 %v1416
        %v5372 = vpop.f32.mrf.mxu0
        %v5373 = vadd.f32 %v5333, %v5372
        %v5374 = vpop.f32.mrf.mxu0
        %v5375 = vpop.f32.mrf.mxu0
        %v5376 = vpop.f32.mrf.mxu0
        %5377 = vdwg.mxu0
        %5378 = vmatprep.subr.bf16.mxu0 0
        %5379 = vmatpush1.bf16.msra.mxu0 %v3881
        %5380 = vmatprep.subr.bf16.mxu0 0
        %5381 = vmatpush1.bf16.msra.mxu0 %v3880
        %5382 = vmatprep.subr.bf16.mxu0 0
        %5383 = vmatpush1.bf16.msra.mxu0 %v3879
        %5384 = vmatprep.subr.bf16.mxu0 0
        %5385 = vmatpush1.bf16.msra.mxu0 %v3878
        %5386 = vmatprep.subr.bf16.mxu0 0
        %5387 = vmatpush1.bf16.msra.mxu0 %v3877
        %5388 = vmatprep.subr.bf16.mxu0 0
        %5389 = vmatpush1.bf16.msra.mxu0 %v3876
        %5390 = vmatprep.subr.bf16.mxu0 0
        %5391 = vmatpush1.bf16.msra.mxu0 %v3875
        %5392 = vmatprep.subr.bf16.mxu0 0
        %5393 = vmatpush1.bf16.msra.mxu0 %v3874
        %5394 = vmatprep.subr.bf16.mxu0 0
        %5395 = vmatpush2.bf16.msra.mxu0 %v3889
        %5396 = vmatprep.subr.bf16.mxu0 0
        %5397 = vmatpush2.bf16.msra.mxu0 %v3888
        %5398 = vmatprep.subr.bf16.mxu0 0
        %5399 = vmatpush2.bf16.msra.mxu0 %v3887
        %5400 = vmatprep.subr.bf16.mxu0 0
        %5401 = vmatpush2.bf16.msra.mxu0 %v3886
        %5402 = vmatprep.subr.bf16.mxu0 0
        %5403 = vmatpush2.bf16.msra.mxu0 %v3885
        %5404 = vmatprep.subr.bf16.mxu0 0
        %5405 = vmatpush2.bf16.msra.mxu0 %v3884
        %5406 = vmatprep.subr.bf16.mxu0 0
        %5407 = vmatpush2.bf16.msra.mxu0 %v3883
        %5408 = vmatprep.subr.bf16.mxu0 0
        %5409 = vmatpush2.bf16.msra.mxu0 %v3882
        %5410 = vmatprep.mubr.bf16.mxu0 %v1419
        %5411 = vmatmul.mubr.bf16.gmra.mxu0 %v1418
        %v5412 = vpop.f32.mrf.mxu0
        %v5413 = vadd.f32 %v5373, %v5412
        %v5414 = vpop.f32.mrf.mxu0
        %v5415 = vpop.f32.mrf.mxu0
        %v5416 = vpop.f32.mrf.mxu0
        %5417 = vdwg.mxu0
        %5418 = vmatprep.subr.bf16.mxu0 0
        %5419 = vmatpush1.bf16.msra.mxu0 %v3897
        %5420 = vmatprep.subr.bf16.mxu0 0
        %5421 = vmatpush1.bf16.msra.mxu0 %v3896
        %5422 = vmatprep.subr.bf16.mxu0 0
        %5423 = vmatpush1.bf16.msra.mxu0 %v3895
        %5424 = vmatprep.subr.bf16.mxu0 0
        %5425 = vmatpush1.bf16.msra.mxu0 %v3894
        %5426 = vmatprep.subr.bf16.mxu0 0
        %5427 = vmatpush1.bf16.msra.mxu0 %v3893
        %5428 = vmatprep.subr.bf16.mxu0 0
        %5429 = vmatpush1.bf16.msra.mxu0 %v3892
        %5430 = vmatprep.subr.bf16.mxu0 0
        %5431 = vmatpush1.bf16.msra.mxu0 %v3891
        %5432 = vmatprep.subr.bf16.mxu0 0
        %5433 = vmatpush1.bf16.msra.mxu0 %v3890
        %5434 = vmatprep.subr.bf16.mxu0 0
        %5435 = vmatpush2.bf16.msra.mxu0 %v3905
        %5436 = vmatprep.subr.bf16.mxu0 0
        %5437 = vmatpush2.bf16.msra.mxu0 %v3904
        %5438 = vmatprep.subr.bf16.mxu0 0
        %5439 = vmatpush2.bf16.msra.mxu0 %v3903
        %5440 = vmatprep.subr.bf16.mxu0 0
        %5441 = vmatpush2.bf16.msra.mxu0 %v3902
        %5442 = vmatprep.subr.bf16.mxu0 0
        %5443 = vmatpush2.bf16.msra.mxu0 %v3901
        %5444 = vmatprep.subr.bf16.mxu0 0
        %5445 = vmatpush2.bf16.msra.mxu0 %v3900
        %5446 = vmatprep.subr.bf16.mxu0 0
        %5447 = vmatpush2.bf16.msra.mxu0 %v3899
        %5448 = vmatprep.subr.bf16.mxu0 0
        %5449 = vmatpush2.bf16.msra.mxu0 %v3898
        %5450 = vmatprep.mubr.bf16.mxu0 %v1421
        %5451 = vmatmul.mubr.bf16.gmra.mxu0 %v1420
        %v5452 = vpop.f32.mrf.mxu0
        %v5453 = vadd.f32 %v5413, %v5452
        %v5454 = vpop.f32.mrf.mxu0
        %v5455 = vpop.f32.mrf.mxu0
        %v5456 = vpop.f32.mrf.mxu0
        %5457 = vdwg.mxu0
        %5458 = vmatprep.subr.bf16.mxu0 0
        %5459 = vmatpush1.bf16.msra.mxu0 %v3913
        %5460 = vmatprep.subr.bf16.mxu0 0
        %5461 = vmatpush1.bf16.msra.mxu0 %v3912
        %5462 = vmatprep.subr.bf16.mxu0 0
        %5463 = vmatpush1.bf16.msra.mxu0 %v3911
        %5464 = vmatprep.subr.bf16.mxu0 0
        %5465 = vmatpush1.bf16.msra.mxu0 %v3910
        %5466 = vmatprep.subr.bf16.mxu0 0
        %5467 = vmatpush1.bf16.msra.mxu0 %v3909
        %5468 = vmatprep.subr.bf16.mxu0 0
        %5469 = vmatpush1.bf16.msra.mxu0 %v3908
        %5470 = vmatprep.subr.bf16.mxu0 0
        %5471 = vmatpush1.bf16.msra.mxu0 %v3907
        %5472 = vmatprep.subr.bf16.mxu0 0
        %5473 = vmatpush1.bf16.msra.mxu0 %v3906
        %5474 = vmatprep.subr.bf16.mxu0 0
        %5475 = vmatpush2.bf16.msra.mxu0 %v3921
        %5476 = vmatprep.subr.bf16.mxu0 0
        %5477 = vmatpush2.bf16.msra.mxu0 %v3920
        %5478 = vmatprep.subr.bf16.mxu0 0
        %5479 = vmatpush2.bf16.msra.mxu0 %v3919
        %5480 = vmatprep.subr.bf16.mxu0 0
        %5481 = vmatpush2.bf16.msra.mxu0 %v3918
        %5482 = vmatprep.subr.bf16.mxu0 0
        %5483 = vmatpush2.bf16.msra.mxu0 %v3917
        %5484 = vmatprep.subr.bf16.mxu0 0
        %5485 = vmatpush2.bf16.msra.mxu0 %v3916
        %5486 = vmatprep.subr.bf16.mxu0 0
        %5487 = vmatpush2.bf16.msra.mxu0 %v3915
        %5488 = vmatprep.subr.bf16.mxu0 0
        %5489 = vmatpush2.bf16.msra.mxu0 %v3914
        %5490 = vmatprep.mubr.bf16.mxu0 %v1423
        %5491 = vmatmul.mubr.bf16.gmra.mxu0 %v1422
        %v5492 = vpop.f32.mrf.mxu0
        %v5493 = vadd.f32 %v5453, %v5492
        %v5494 = vpop.f32.mrf.mxu0
        %v5495 = vpop.f32.mrf.mxu0
        %v5496 = vpop.f32.mrf.mxu0
        %5497 = vdwg.mxu0
        %5498 = vmatprep.subr.bf16.mxu0 0
        %5499 = vmatpush1.bf16.msra.mxu0 %v3929
        %5500 = vmatprep.subr.bf16.mxu0 0
        %5501 = vmatpush1.bf16.msra.mxu0 %v3928
        %5502 = vmatprep.subr.bf16.mxu0 0
        %5503 = vmatpush1.bf16.msra.mxu0 %v3927
        %5504 = vmatprep.subr.bf16.mxu0 0
        %5505 = vmatpush1.bf16.msra.mxu0 %v3926
        %5506 = vmatprep.subr.bf16.mxu0 0
        %5507 = vmatpush1.bf16.msra.mxu0 %v3925
        %5508 = vmatprep.subr.bf16.mxu0 0
        %5509 = vmatpush1.bf16.msra.mxu0 %v3924
        %5510 = vmatprep.subr.bf16.mxu0 0
        %5511 = vmatpush1.bf16.msra.mxu0 %v3923
        %5512 = vmatprep.subr.bf16.mxu0 0
        %5513 = vmatpush1.bf16.msra.mxu0 %v3922
        %5514 = vmatprep.subr.bf16.mxu0 0
        %5515 = vmatpush2.bf16.msra.mxu0 %v3937
        %5516 = vmatprep.subr.bf16.mxu0 0
        %5517 = vmatpush2.bf16.msra.mxu0 %v3936
        %5518 = vmatprep.subr.bf16.mxu0 0
        %5519 = vmatpush2.bf16.msra.mxu0 %v3935
        %5520 = vmatprep.subr.bf16.mxu0 0
        %5521 = vmatpush2.bf16.msra.mxu0 %v3934
        %5522 = vmatprep.subr.bf16.mxu0 0
        %5523 = vmatpush2.bf16.msra.mxu0 %v3933
        %5524 = vmatprep.subr.bf16.mxu0 0
        %5525 = vmatpush2.bf16.msra.mxu0 %v3932
        %5526 = vmatprep.subr.bf16.mxu0 0
        %5527 = vmatpush2.bf16.msra.mxu0 %v3931
        %5528 = vmatprep.subr.bf16.mxu0 0
        %5529 = vmatpush2.bf16.msra.mxu0 %v3930
        %5530 = vmatprep.mubr.bf16.mxu0 %v1425
        %5531 = vmatmul.mubr.bf16.gmra.mxu0 %v1424
        %v5532 = vpop.f32.mrf.mxu0
        %v5533 = vadd.f32 %v5493, %v5532
        %v5534 = vpop.f32.mrf.mxu0
        %v5535 = vpop.f32.mrf.mxu0
        %v5536 = vpop.f32.mrf.mxu0
        %5537 = vdwg.mxu0
        %5538 = vmatprep.subr.bf16.mxu0 0
        %5539 = vmatpush1.bf16.msra.mxu0 %v3945
        %5540 = vmatprep.subr.bf16.mxu0 0
        %5541 = vmatpush1.bf16.msra.mxu0 %v3944
        %5542 = vmatprep.subr.bf16.mxu0 0
        %5543 = vmatpush1.bf16.msra.mxu0 %v3943
        %5544 = vmatprep.subr.bf16.mxu0 0
        %5545 = vmatpush1.bf16.msra.mxu0 %v3942
        %5546 = vmatprep.subr.bf16.mxu0 0
        %5547 = vmatpush1.bf16.msra.mxu0 %v3941
        %5548 = vmatprep.subr.bf16.mxu0 0
        %5549 = vmatpush1.bf16.msra.mxu0 %v3940
        %5550 = vmatprep.subr.bf16.mxu0 0
        %5551 = vmatpush1.bf16.msra.mxu0 %v3939
        %5552 = vmatprep.subr.bf16.mxu0 0
        %5553 = vmatpush1.bf16.msra.mxu0 %v3938
        %5554 = vmatprep.subr.bf16.mxu0 0
        %5555 = vmatpush2.bf16.msra.mxu0 %v3953
        %5556 = vmatprep.subr.bf16.mxu0 0
        %5557 = vmatpush2.bf16.msra.mxu0 %v3952
        %5558 = vmatprep.subr.bf16.mxu0 0
        %5559 = vmatpush2.bf16.msra.mxu0 %v3951
        %5560 = vmatprep.subr.bf16.mxu0 0
        %5561 = vmatpush2.bf16.msra.mxu0 %v3950
        %5562 = vmatprep.subr.bf16.mxu0 0
        %5563 = vmatpush2.bf16.msra.mxu0 %v3949
        %5564 = vmatprep.subr.bf16.mxu0 0
        %5565 = vmatpush2.bf16.msra.mxu0 %v3948
        %5566 = vmatprep.subr.bf16.mxu0 0
        %5567 = vmatpush2.bf16.msra.mxu0 %v3947
        %5568 = vmatprep.subr.bf16.mxu0 0
        %5569 = vmatpush2.bf16.msra.mxu0 %v3946
        %5570 = vmatprep.mubr.bf16.mxu0 %v1427
        %5571 = vmatmul.mubr.bf16.gmra.mxu0 %v1426
        %v5572 = vpop.f32.mrf.mxu0
        %v5573 = vadd.f32 %v5533, %v5572
        %v5574 = vpop.f32.mrf.mxu0
        %v5575 = vpop.f32.mrf.mxu0
        %v5576 = vpop.f32.mrf.mxu0
        %5577 = vdwg.mxu0
        %5578 = vmatprep.subr.bf16.mxu0 0
        %5579 = vmatpush1.bf16.msra.mxu0 %v3961
        %5580 = vmatprep.subr.bf16.mxu0 0
        %5581 = vmatpush1.bf16.msra.mxu0 %v3960
        %5582 = vmatprep.subr.bf16.mxu0 0
        %5583 = vmatpush1.bf16.msra.mxu0 %v3959
        %5584 = vmatprep.subr.bf16.mxu0 0
        %5585 = vmatpush1.bf16.msra.mxu0 %v3958
        %5586 = vmatprep.subr.bf16.mxu0 0
        %5587 = vmatpush1.bf16.msra.mxu0 %v3957
        %5588 = vmatprep.subr.bf16.mxu0 0
        %5589 = vmatpush1.bf16.msra.mxu0 %v3956
        %5590 = vmatprep.subr.bf16.mxu0 0
        %5591 = vmatpush1.bf16.msra.mxu0 %v3955
        %5592 = vmatprep.subr.bf16.mxu0 0
        %5593 = vmatpush1.bf16.msra.mxu0 %v3954
        %5594 = vmatprep.subr.bf16.mxu0 0
        %5595 = vmatpush2.bf16.msra.mxu0 %v3969
        %5596 = vmatprep.subr.bf16.mxu0 0
        %5597 = vmatpush2.bf16.msra.mxu0 %v3968
        %5598 = vmatprep.subr.bf16.mxu0 0
        %5599 = vmatpush2.bf16.msra.mxu0 %v3967
        %5600 = vmatprep.subr.bf16.mxu0 0
        %5601 = vmatpush2.bf16.msra.mxu0 %v3966
        %5602 = vmatprep.subr.bf16.mxu0 0
        %5603 = vmatpush2.bf16.msra.mxu0 %v3965
        %5604 = vmatprep.subr.bf16.mxu0 0
        %5605 = vmatpush2.bf16.msra.mxu0 %v3964
        %5606 = vmatprep.subr.bf16.mxu0 0
        %5607 = vmatpush2.bf16.msra.mxu0 %v3963
        %5608 = vmatprep.subr.bf16.mxu0 0
        %5609 = vmatpush2.bf16.msra.mxu0 %v3962
        %5610 = vmatprep.mubr.bf16.mxu0 %v1429
        %5611 = vmatmul.mubr.bf16.gmra.mxu0 %v1428
        %v5612 = vpop.f32.mrf.mxu0
        %v5613 = vadd.f32 %v5573, %v5612
        %v5614 = vpop.f32.mrf.mxu0
        %v5615 = vpop.f32.mrf.mxu0
        %v5616 = vpop.f32.mrf.mxu0
        %5617 = vdwg.mxu0
        %5618 = vmatprep.subr.bf16.mxu0 0
        %5619 = vmatpush1.bf16.msra.mxu0 %v3977
        %5620 = vmatprep.subr.bf16.mxu0 0
        %5621 = vmatpush1.bf16.msra.mxu0 %v3976
        %5622 = vmatprep.subr.bf16.mxu0 0
        %5623 = vmatpush1.bf16.msra.mxu0 %v3975
        %5624 = vmatprep.subr.bf16.mxu0 0
        %5625 = vmatpush1.bf16.msra.mxu0 %v3974
        %5626 = vmatprep.subr.bf16.mxu0 0
        %5627 = vmatpush1.bf16.msra.mxu0 %v3973
        %5628 = vmatprep.subr.bf16.mxu0 0
        %5629 = vmatpush1.bf16.msra.mxu0 %v3972
        %5630 = vmatprep.subr.bf16.mxu0 0
        %5631 = vmatpush1.bf16.msra.mxu0 %v3971
        %5632 = vmatprep.subr.bf16.mxu0 0
        %5633 = vmatpush1.bf16.msra.mxu0 %v3970
        %5634 = vmatprep.subr.bf16.mxu0 0
        %5635 = vmatpush2.bf16.msra.mxu0 %v3985
        %5636 = vmatprep.subr.bf16.mxu0 0
        %5637 = vmatpush2.bf16.msra.mxu0 %v3984
        %5638 = vmatprep.subr.bf16.mxu0 0
        %5639 = vmatpush2.bf16.msra.mxu0 %v3983
        %5640 = vmatprep.subr.bf16.mxu0 0
        %5641 = vmatpush2.bf16.msra.mxu0 %v3982
        %5642 = vmatprep.subr.bf16.mxu0 0
        %5643 = vmatpush2.bf16.msra.mxu0 %v3981
        %5644 = vmatprep.subr.bf16.mxu0 0
        %5645 = vmatpush2.bf16.msra.mxu0 %v3980
        %5646 = vmatprep.subr.bf16.mxu0 0
        %5647 = vmatpush2.bf16.msra.mxu0 %v3979
        %5648 = vmatprep.subr.bf16.mxu0 0
        %5649 = vmatpush2.bf16.msra.mxu0 %v3978
        %5650 = vmatprep.mubr.bf16.mxu0 %v1431
        %5651 = vmatmul.mubr.bf16.gmra.mxu0 %v1430
        %v5652 = vpop.f32.mrf.mxu0
        %v5653 = vadd.f32 %v5613, %v5652
        %v5654 = vpop.f32.mrf.mxu0
        %v5655 = vpop.f32.mrf.mxu0
        %v5656 = vpop.f32.mrf.mxu0
        %5657 = vdwg.mxu0
        %5658 = vmatprep.subr.bf16.mxu0 0
        %5659 = vmatpush1.bf16.msra.mxu0 %v3993
        %5660 = vmatprep.subr.bf16.mxu0 0
        %5661 = vmatpush1.bf16.msra.mxu0 %v3992
        %5662 = vmatprep.subr.bf16.mxu0 0
        %5663 = vmatpush1.bf16.msra.mxu0 %v3991
        %5664 = vmatprep.subr.bf16.mxu0 0
        %5665 = vmatpush1.bf16.msra.mxu0 %v3990
        %5666 = vmatprep.subr.bf16.mxu0 0
        %5667 = vmatpush1.bf16.msra.mxu0 %v3989
        %5668 = vmatprep.subr.bf16.mxu0 0
        %5669 = vmatpush1.bf16.msra.mxu0 %v3988
        %5670 = vmatprep.subr.bf16.mxu0 0
        %5671 = vmatpush1.bf16.msra.mxu0 %v3987
        %5672 = vmatprep.subr.bf16.mxu0 0
        %5673 = vmatpush1.bf16.msra.mxu0 %v3986
        %5674 = vmatprep.subr.bf16.mxu0 0
        %5675 = vmatpush2.bf16.msra.mxu0 %v4001
        %5676 = vmatprep.subr.bf16.mxu0 0
        %5677 = vmatpush2.bf16.msra.mxu0 %v4000
        %5678 = vmatprep.subr.bf16.mxu0 0
        %5679 = vmatpush2.bf16.msra.mxu0 %v3999
        %5680 = vmatprep.subr.bf16.mxu0 0
        %5681 = vmatpush2.bf16.msra.mxu0 %v3998
        %5682 = vmatprep.subr.bf16.mxu0 0
        %5683 = vmatpush2.bf16.msra.mxu0 %v3997
        %5684 = vmatprep.subr.bf16.mxu0 0
        %5685 = vmatpush2.bf16.msra.mxu0 %v3996
        %5686 = vmatprep.subr.bf16.mxu0 0
        %5687 = vmatpush2.bf16.msra.mxu0 %v3995
        %5688 = vmatprep.subr.bf16.mxu0 0
        %5689 = vmatpush2.bf16.msra.mxu0 %v3994
        %5690 = vmatprep.mubr.bf16.mxu0 %v1433
        %5691 = vmatmul.mubr.bf16.gmra.mxu0 %v1432
        %v5692 = vpop.f32.mrf.mxu0
        %v5693 = vadd.f32 %v5653, %v5692
        %v5694 = vpop.f32.mrf.mxu0
        %v5695 = vpop.f32.mrf.mxu0
        %v5696 = vpop.f32.mrf.mxu0
        %5697 = vdwg.mxu0
        %5698 = vmatprep.subr.bf16.mxu0 0
        %5699 = vmatpush1.bf16.msra.mxu0 %v4009
        %5700 = vmatprep.subr.bf16.mxu0 0
        %5701 = vmatpush1.bf16.msra.mxu0 %v4008
        %5702 = vmatprep.subr.bf16.mxu0 0
        %5703 = vmatpush1.bf16.msra.mxu0 %v4007
        %5704 = vmatprep.subr.bf16.mxu0 0
        %5705 = vmatpush1.bf16.msra.mxu0 %v4006
        %5706 = vmatprep.subr.bf16.mxu0 0
        %5707 = vmatpush1.bf16.msra.mxu0 %v4005
        %5708 = vmatprep.subr.bf16.mxu0 0
        %5709 = vmatpush1.bf16.msra.mxu0 %v4004
        %5710 = vmatprep.subr.bf16.mxu0 0
        %5711 = vmatpush1.bf16.msra.mxu0 %v4003
        %5712 = vmatprep.subr.bf16.mxu0 0
        %5713 = vmatpush1.bf16.msra.mxu0 %v4002
        %5714 = vmatprep.subr.bf16.mxu0 0
        %5715 = vmatpush2.bf16.msra.mxu0 %v4017
        %5716 = vmatprep.subr.bf16.mxu0 0
        %5717 = vmatpush2.bf16.msra.mxu0 %v4016
        %5718 = vmatprep.subr.bf16.mxu0 0
        %5719 = vmatpush2.bf16.msra.mxu0 %v4015
        %5720 = vmatprep.subr.bf16.mxu0 0
        %5721 = vmatpush2.bf16.msra.mxu0 %v4014
        %5722 = vmatprep.subr.bf16.mxu0 0
        %5723 = vmatpush2.bf16.msra.mxu0 %v4013
        %5724 = vmatprep.subr.bf16.mxu0 0
        %5725 = vmatpush2.bf16.msra.mxu0 %v4012
        %5726 = vmatprep.subr.bf16.mxu0 0
        %5727 = vmatpush2.bf16.msra.mxu0 %v4011
        %5728 = vmatprep.subr.bf16.mxu0 0
        %5729 = vmatpush2.bf16.msra.mxu0 %v4010
        %5730 = vmatprep.mubr.bf16.mxu0 %v1435
        %5731 = vmatmul.mubr.bf16.gmra.mxu0 %v1434
        %v5732 = vpop.f32.mrf.mxu0
        %v5733 = vadd.f32 %v5693, %v5732
        %v5734 = vpop.f32.mrf.mxu0
        %v5735 = vpop.f32.mrf.mxu0
        %v5736 = vpop.f32.mrf.mxu0
        %5737 = vdwg.mxu0
        %5738 = vmatprep.subr.bf16.mxu0 0
        %5739 = vmatpush1.bf16.msra.mxu0 %v4025
        %5740 = vmatprep.subr.bf16.mxu0 0
        %5741 = vmatpush1.bf16.msra.mxu0 %v4024
        %5742 = vmatprep.subr.bf16.mxu0 0
        %5743 = vmatpush1.bf16.msra.mxu0 %v4023
        %5744 = vmatprep.subr.bf16.mxu0 0
        %5745 = vmatpush1.bf16.msra.mxu0 %v4022
        %5746 = vmatprep.subr.bf16.mxu0 0
        %5747 = vmatpush1.bf16.msra.mxu0 %v4021
        %5748 = vmatprep.subr.bf16.mxu0 0
        %5749 = vmatpush1.bf16.msra.mxu0 %v4020
        %5750 = vmatprep.subr.bf16.mxu0 0
        %5751 = vmatpush1.bf16.msra.mxu0 %v4019
        %5752 = vmatprep.subr.bf16.mxu0 0
        %5753 = vmatpush1.bf16.msra.mxu0 %v4018
        %5754 = vmatprep.subr.bf16.mxu0 0
        %5755 = vmatpush2.bf16.msra.mxu0 %v4033
        %5756 = vmatprep.subr.bf16.mxu0 0
        %5757 = vmatpush2.bf16.msra.mxu0 %v4032
        %5758 = vmatprep.subr.bf16.mxu0 0
        %5759 = vmatpush2.bf16.msra.mxu0 %v4031
        %5760 = vmatprep.subr.bf16.mxu0 0
        %5761 = vmatpush2.bf16.msra.mxu0 %v4030
        %5762 = vmatprep.subr.bf16.mxu0 0
        %5763 = vmatpush2.bf16.msra.mxu0 %v4029
        %5764 = vmatprep.subr.bf16.mxu0 0
        %5765 = vmatpush2.bf16.msra.mxu0 %v4028
        %5766 = vmatprep.subr.bf16.mxu0 0
        %5767 = vmatpush2.bf16.msra.mxu0 %v4027
        %5768 = vmatprep.subr.bf16.mxu0 0
        %5769 = vmatpush2.bf16.msra.mxu0 %v4026
        %5770 = vmatprep.mubr.bf16.mxu0 %v1437
        %5771 = vmatmul.mubr.bf16.gmra.mxu0 %v1436
        %v5772 = vpop.f32.mrf.mxu0
        %v5773 = vadd.f32 %v5733, %v5772
        %v5774 = vpop.f32.mrf.mxu0
        %v5775 = vpop.f32.mrf.mxu0
        %v5776 = vpop.f32.mrf.mxu0
        %5777 = vdwg.mxu0
        %5778 = vmatprep.subr.bf16.mxu0 0
        %5779 = vmatpush1.bf16.msra.mxu0 %v4041
        %5780 = vmatprep.subr.bf16.mxu0 0
        %5781 = vmatpush1.bf16.msra.mxu0 %v4040
        %5782 = vmatprep.subr.bf16.mxu0 0
        %5783 = vmatpush1.bf16.msra.mxu0 %v4039
        %5784 = vmatprep.subr.bf16.mxu0 0
        %5785 = vmatpush1.bf16.msra.mxu0 %v4038
        %5786 = vmatprep.subr.bf16.mxu0 0
        %5787 = vmatpush1.bf16.msra.mxu0 %v4037
        %5788 = vmatprep.subr.bf16.mxu0 0
        %5789 = vmatpush1.bf16.msra.mxu0 %v4036
        %5790 = vmatprep.subr.bf16.mxu0 0
        %5791 = vmatpush1.bf16.msra.mxu0 %v4035
        %5792 = vmatprep.subr.bf16.mxu0 0
        %5793 = vmatpush1.bf16.msra.mxu0 %v4034
        %5794 = vmatprep.subr.bf16.mxu0 0
        %5795 = vmatpush2.bf16.msra.mxu0 %v4049
        %5796 = vmatprep.subr.bf16.mxu0 0
        %5797 = vmatpush2.bf16.msra.mxu0 %v4048
        %5798 = vmatprep.subr.bf16.mxu0 0
        %5799 = vmatpush2.bf16.msra.mxu0 %v4047
        %5800 = vmatprep.subr.bf16.mxu0 0
        %5801 = vmatpush2.bf16.msra.mxu0 %v4046
        %5802 = vmatprep.subr.bf16.mxu0 0
        %5803 = vmatpush2.bf16.msra.mxu0 %v4045
        %5804 = vmatprep.subr.bf16.mxu0 0
        %5805 = vmatpush2.bf16.msra.mxu0 %v4044
        %5806 = vmatprep.subr.bf16.mxu0 0
        %5807 = vmatpush2.bf16.msra.mxu0 %v4043
        %5808 = vmatprep.subr.bf16.mxu0 0
        %5809 = vmatpush2.bf16.msra.mxu0 %v4042
        %5810 = vmatprep.mubr.bf16.mxu0 %v1439
        %5811 = vmatmul.mubr.bf16.gmra.mxu0 %v1438
        %v5812 = vpop.f32.mrf.mxu0
        %v5813 = vadd.f32 %v5773, %v5812
        %v5814 = vpop.f32.mrf.mxu0
        %v5815 = vpop.f32.mrf.mxu0
        %v5816 = vpop.f32.mrf.mxu0
        %5817 = vdwg.mxu0
        %5818 = vmatprep.subr.bf16.mxu0 0
        %5819 = vmatpush1.bf16.msra.mxu0 %v4057
        %5820 = vmatprep.subr.bf16.mxu0 0
        %5821 = vmatpush1.bf16.msra.mxu0 %v4056
        %5822 = vmatprep.subr.bf16.mxu0 0
        %5823 = vmatpush1.bf16.msra.mxu0 %v4055
        %5824 = vmatprep.subr.bf16.mxu0 0
        %5825 = vmatpush1.bf16.msra.mxu0 %v4054
        %5826 = vmatprep.subr.bf16.mxu0 0
        %5827 = vmatpush1.bf16.msra.mxu0 %v4053
        %5828 = vmatprep.subr.bf16.mxu0 0
        %5829 = vmatpush1.bf16.msra.mxu0 %v4052
        %5830 = vmatprep.subr.bf16.mxu0 0
        %5831 = vmatpush1.bf16.msra.mxu0 %v4051
        %5832 = vmatprep.subr.bf16.mxu0 0
        %5833 = vmatpush1.bf16.msra.mxu0 %v4050
        %5834 = vmatprep.subr.bf16.mxu0 0
        %5835 = vmatpush2.bf16.msra.mxu0 %v4065
        %5836 = vmatprep.subr.bf16.mxu0 0
        %5837 = vmatpush2.bf16.msra.mxu0 %v4064
        %5838 = vmatprep.subr.bf16.mxu0 0
        %5839 = vmatpush2.bf16.msra.mxu0 %v4063
        %5840 = vmatprep.subr.bf16.mxu0 0
        %5841 = vmatpush2.bf16.msra.mxu0 %v4062
        %5842 = vmatprep.subr.bf16.mxu0 0
        %5843 = vmatpush2.bf16.msra.mxu0 %v4061
        %5844 = vmatprep.subr.bf16.mxu0 0
        %5845 = vmatpush2.bf16.msra.mxu0 %v4060
        %5846 = vmatprep.subr.bf16.mxu0 0
        %5847 = vmatpush2.bf16.msra.mxu0 %v4059
        %5848 = vmatprep.subr.bf16.mxu0 0
        %5849 = vmatpush2.bf16.msra.mxu0 %v4058
        %5850 = vmatprep.mubr.bf16.mxu0 %v1441
        %5851 = vmatmul.mubr.bf16.gmra.mxu0 %v1440
        %v5852 = vpop.f32.mrf.mxu0
        %v5853 = vadd.f32 %v5813, %v5852
        %v5854 = vpop.f32.mrf.mxu0
        %v5855 = vpop.f32.mrf.mxu0
        %v5856 = vpop.f32.mrf.mxu0
        %5857 = vdwg.mxu0
        %v5858 = vadd.f32 %v225, %v5853
        %5859 = vst [vmem:[%s218] sm:$0xff] %v5858
        %p5860 = scmp.lt.s32.totalorder %s20, 1
        %s5861 = scalar_select %p5860, %s20, 1
        %s5862 = smul.addr %s5861, 8
        %s5863 = scalar_lea.vmem %s2, %s5862
        // Predicated region
        $region37: #{logistic_regression_forward.2} parent=27 // pred_check
          %p5864 = pneg %p106
        $region38: #{logistic_regression_forward.2} parent=27 // pred_check_branch
          %5866 = sbr.rel (%p5864) target = $region40
        $region39: #{logistic_regression_forward.2} parent=27 // pred_region
          _
        $region40: #{logistic_regression_forward.2} parent=27 // pred_fallthru
          _
      $region28: #{logistic_regression_forward.2} parent=5 // pred_fallthru
        _
      %p5867 = scmp.le.s32.totalorder 2, %s11
      // Predicated region
      $region41: #{logistic_regression_forward.2} parent=5 // pred_check
        %p5868 = pneg %p5867
      $region42: #{logistic_regression_forward.2} parent=5 // pred_check_branch
        %5870 = sbr.rel (%p5868) target = $region44
      $region43: #{logistic_regression_forward.2} parent=5 // pred_region
        %s5871 = ssub.s32 %s11, 2
        // Predicated region
        $region45: #{logistic_regression_forward.2} parent=43 // pred_check
          %p5872 = pneg %p112
        $region46: #{logistic_regression_forward.2} parent=43 // pred_check_branch
          %5874 = sbr.rel (%p5872) target = $region48
        $region47: #{logistic_regression_forward.2} parent=43 // pred_region
          %p5875 = scmp.lt.s32.totalorder %s22, 1
          %s5876 = scalar_select %p5875, %s22, 1
          %s5877 = smul.addr %s5876, 8
          %s5878 = scalar_lea.vmem %s2, %s5877
        $region48: #{logistic_regression_forward.2} parent=43 // pred_fallthru
          _
      $region44: #{logistic_regression_forward.2} parent=5 // pred_fallthru
        _
    $region6: #{logistic_regression_forward.2} parent=1 // loop_footer
      %s15 = sadd.s32 1, %s11
    $region7: #{logistic_regression_forward.2} parent=1 // loop_footer_branch
      %10 = sbr.rel target = $region3
    $region8: #{logistic_regression_forward.2} parent=1 // loop_exit
      _
    %5879 = vsyncpa [#allocation3], 1
    %s5880 = scalar_lea.sflag [#allocation3], 1
    %5881 = vsyncpa %s5880, 1

</llo_original>
